<compile_context>
chip_gen: v5e
topology: v5e:2x2
jax: 0.10.0
libtpu: 0.0.40
codegen_flags: <defaults>
</compile_context>

<pallas_src>
import functools
import math

import jax
import jax.numpy as jnp
from jax.experimental import pallas as pl
from jax.experimental.pallas import tpu as pltpu

_SCALE_CLAMP = math.log(1000.0 / 16)


def _default_vmem_limit():
    """Generation-aware VMEM budget: leave headroom for double buffers."""
    try:
        cap = pltpu.get_tpu_info().vmem_capacity_bytes
        return int(min(cap * 3 // 4, 100 * 1024 * 1024))
    except Exception:
        return 48 * 1024 * 1024   # safe on v7x (64 MiB physical)


_VMEM_LIMIT = _default_vmem_limit()


def _round_up(v, m):
    return (v + m - 1) // m * m


def _choose_tm(M, block_m):
    """Row tile: multiple of 8, and split so the parallel grid has >=2 steps."""
    tm = min(block_m, _round_up(M, 8))
    if tm >= M and M > 8:
        tm = _round_up(-(-M // 2), 8)
    return tm


def _r2(v):
    return jnp.asarray(v, jnp.float32).reshape(1, -1)


def _ln(x, g, b, eps=1e-5):
    """LayerNorm over the last axis; math kept in f32."""
    mu = jnp.mean(x, axis=-1, keepdims=True)
    xc = x - mu
    var = jnp.mean(xc * xc, axis=-1, keepdims=True)
    return xc * jax.lax.rsqrt(var + eps) * g + b


# ------------------------------ linear kernel --------------------------------

def _linear_kernel(x_ref, w_ref, b_ref, o_ref, *, act):
    y = jnp.dot(x_ref[...], w_ref[...], preferred_element_type=jnp.float32)
    y = y + b_ref[...]
    if act == "relu":
        y = jnp.maximum(y, 0.0)
    o_ref[...] = y.astype(o_ref.dtype)


def pallas_linear(x, w, b=None, act="none", block_m=256, block_n=1024,
                  out_dtype=jnp.float32):
    """y = act(x @ w + b); x: (M, K), w: (K, N). bf16 MXU, f32 accumulate.

    M and N are both tiled (grid=(Mp//tm, Np//tn)); K padded to a bf16 sublane
    multiple.
    """
    M, K = x.shape
    N = w.shape[1]
    if b is None:
        b = jnp.zeros((N,), jnp.float32)
    xw = x.astype(jnp.bfloat16)
    ww = w.astype(jnp.bfloat16)
    Kp = _round_up(K, 16)                      # bf16 packs 2 rows per sublane
    if Kp != K:
        xw = jnp.pad(xw, ((0, 0), (0, Kp - K)))
        ww = jnp.pad(ww, ((0, Kp - K), (0, 0)))
    tm = _choose_tm(M, block_m)
    Mp = _round_up(M, tm)
    if Mp != M:
        xw = jnp.pad(xw, ((0, Mp - M), (0, 0)))
    if N > block_n:
        tn = block_n                           # multiple of 128 -> lane-dense
        Np = _round_up(N, tn)
    else:
        tn = N
        Np = N
    b2 = _r2(b)
    if Np != N:
        ww = jnp.pad(ww, ((0, 0), (0, Np - N)))
        b2 = jnp.pad(b2, ((0, 0), (0, Np - N)))
    out = pl.pallas_call(
        functools.partial(_linear_kernel, act=act),
        out_shape=jax.ShapeDtypeStruct((Mp, Np), out_dtype),
        grid=(Mp // tm, Np // tn),
        in_specs=[
            pl.BlockSpec((tm, Kp), lambda i, j: (i, 0)),
            pl.BlockSpec((Kp, tn), lambda i, j: (0, j)),
            pl.BlockSpec((1, tn), lambda i, j: (0, j)),
        ],
        out_specs=pl.BlockSpec((tm, tn), lambda i, j: (i, j)),
        compiler_params=pltpu.CompilerParams(
            dimension_semantics=("parallel", "parallel"),
            vmem_limit_bytes=_VMEM_LIMIT),
    )(xw, ww, b2)
    if Mp != M or Np != N:
        out = out[:M, :N]
    return out


# ------------------------- generic row-tiled fused call -----------------------

def _rowwise_pallas(kernel, row_inputs, const_inputs, out_widths,
                    block_m=256, out_dtype=jnp.float32):
    """Run `kernel(row_refs..., const_refs..., out_refs...)` tiled over rows."""
    M = row_inputs[0].shape[0]
    tm = _choose_tm(M, block_m)
    Mp = _round_up(M, tm)
    if Mp != M:
        row_inputs = [jnp.pad(a, ((0, Mp - M), (0, 0))) for a in row_inputs]
    in_specs = [pl.BlockSpec((tm, a.shape[1]), lambda i: (i, 0))
                for a in row_inputs]
    in_specs += [pl.BlockSpec(a.shape, lambda i, nd=a.ndim: (0,) * nd)
                 for a in const_inputs]
    out_shape = tuple(jax.ShapeDtypeStruct((Mp, n), out_dtype) for n in out_widths)
    out_specs = tuple(pl.BlockSpec((tm, n), lambda i: (i, 0)) for n in out_widths)
    outs = pl.pallas_call(
        kernel,
        out_shape=out_shape,
        grid=(Mp // tm,),
        in_specs=in_specs,
        out_specs=out_specs,
        compiler_params=pltpu.CompilerParams(
            dimension_semantics=("parallel",), vmem_limit_bytes=_VMEM_LIMIT),
    )(*row_inputs, *const_inputs)
    if not isinstance(outs, (tuple, list)):
        outs = (outs,)
    return [o[:M] for o in outs]


# --------------------------- fused per-head kernels ---------------------------

def _attn_out_kernel(attn_ref, pro_ref, wo_ref, c_ref, o_ref):
    """o = LN1(pro + attn @ Wo + bo).  c_ref = [out_b; norm1_g; norm1_b] (3,C)."""
    y = jnp.dot(attn_ref[...], wo_ref[...], preferred_element_type=jnp.float32)
    y = y + c_ref[0:1, :]
    o_ref[...] = _ln(pro_ref[...] + y, c_ref[1:2, :], c_ref[2:3, :]).astype(o_ref.dtype)


def _dynconv_core_kernel(roi_ref, p1_ref, p2_ref, lnd_ref, lnc_ref, o_ref):
    """Per-proposal dynamic conv: bmm1 -> LN -> ReLU -> bmm2 -> LN -> ReLU.

    Batched contraction over the proposal chunk (no Python unroll).
    lnd_ref = [ln1_g; ln1_b] (2,D), lnc_ref = [ln2_g; ln2_b] (2,C).
    """
    D = lnd_ref.shape[-1]
    C = lnc_ref.shape[-1]
    g1 = lnd_ref[0:1, :].reshape(1, 1, D)
    b1 = lnd_ref[1:2, :].reshape(1, 1, D)
    g2 = lnc_ref[0:1, :].reshape(1, 1, C)
    b2 = lnc_ref[1:2, :].reshape(1, 1, C)
    roi = roi_ref[...]                                                   # (G,SS,C) bf16
    f = jnp.einsum("gsc,gcd->gsd", roi, p1_ref[...],
                   preferred_element_type=jnp.float32)                   # (G,SS,D)
    f = jnp.maximum(_ln(f, g1, b1), 0.0)
    f = jnp.einsum("gsd,gdc->gsc", f.astype(jnp.bfloat16), p2_ref[...],
                   preferred_element_type=jnp.float32)                   # (G,SS,C)
    f = jnp.maximum(_ln(f, g2, b2), 0.0)
    o_ref[...] = f.astype(o_ref.dtype)


def _dynconv_tail_kernel(flat_ref, pro_ref, wout_ref, c_ref, o_ref):
    """o = LN2(pro + ReLU(LN3i(flat @ Wout + bout))).
    c_ref = [out_b; ln3_g; ln3_b; norm2_g; norm2_b] (5,C)."""
    y = jnp.dot(flat_ref[...], wout_ref[...], preferred_element_type=jnp.float32)
    y = y + c_ref[0:1, :]
    y = jnp.maximum(_ln(y, c_ref[1:2, :], c_ref[2:3, :]), 0.0)
    o_ref[...] = _ln(pro_ref[...] + y, c_ref[3:4, :], c_ref[4:5, :]).astype(o_ref.dtype)


def _ffn_kernel(obj_ref, w1_ref, b1_ref, w2_ref, c_ref, o_ref):
    """o = LN3(x + ReLU(x@W1+b1)@W2+b2).  c_ref = [b2; norm3_g; norm3_b] (3,C)."""
    x = obj_ref[...]
    h = jnp.dot(x.astype(jnp.bfloat16), w1_ref[...],
                preferred_element_type=jnp.float32) + b1_ref[...]
    h = jnp.maximum(h, 0.0)
    y = jnp.dot(h.astype(jnp.bfloat16), w2_ref[...],
                preferred_element_type=jnp.float32) + c_ref[0:1, :]
    o_ref[...] = _ln(x + y, c_ref[1:2, :], c_ref[2:3, :]).astype(o_ref.dtype)


def _tower_kernel(obj_ref, tw_ref, tln_ref, hw_ref, hb_ref, o_ref, *, C):
    """Merged cls/reg towers + merged prediction heads, one lane-dense output.

    tw_ref = concat(cls_w, reg_w) (C, 2C); tln_ref = [cls_g;cls_b;reg_g;reg_b];
    hw_ref = block-diag(cls_head_w, reg_head_w) (2C, HP); hb_ref (1, HP).
    """
    x = obj_ref[...].astype(jnp.bfloat16)
    t = jnp.dot(x, tw_ref[...], preferred_element_type=jnp.float32)      # (tm, 2C)
    cf = jnp.maximum(_ln(t[:, :C], tln_ref[0:1, :], tln_ref[1:2, :]), 0.0)
    rf = jnp.maximum(_ln(t[:, C:], tln_ref[2:3, :], tln_ref[3:4, :]), 0.0)
    feat = jnp.concatenate([cf, rf], axis=-1).astype(jnp.bfloat16)       # (tm, 2C)
    y = jnp.dot(feat, hw_ref[...], preferred_element_type=jnp.float32) + hb_ref[...]
    o_ref[...] = y.astype(o_ref.dtype)


def pallas_dynconv_core(roi, p1, p2, g1, b1, g2, b2, group=8):
    """roi: (BP, SS, C); p1: (BP, C, D); p2: (BP, D, C). Returns bf16 (BP,SS,C)."""
    BP, SS, C = roi.shape
    D = p1.shape[2]
    SSp = _round_up(SS, 8)
    if SSp != SS:
        roi = jnp.pad(roi, ((0, 0), (0, SSp - SS), (0, 0)))
    G = min(group, BP)
    if G >= BP and BP > 1:                 # keep >=2 grid steps (v7x megacore)
        G = max(1, BP // 2)
    BPp = _round_up(BP, G)
    if BPp != BP:
        roi = jnp.pad(roi, ((0, BPp - BP), (0, 0), (0, 0)))
        p1 = jnp.pad(p1, ((0, BPp - BP), (0, 0), (0, 0)))
        p2 = jnp.pad(p2, ((0, BPp - BP), (0, 0), (0, 0)))
    lnd = jnp.stack([jnp.asarray(g1, jnp.float32), jnp.asarray(b1, jnp.float32)])
    lnc = jnp.stack([jnp.asarray(g2, jnp.float32), jnp.asarray(b2, jnp.float32)])
    out = pl.pallas_call(
        _dynconv_core_kernel,
        out_shape=jax.ShapeDtypeStruct((BPp, SSp, C), jnp.bfloat16),
        grid=(BPp // G,),
        in_specs=[
            pl.BlockSpec((G, SSp, C), lambda n: (n, 0, 0)),
            pl.BlockSpec((G, C, D), lambda n: (n, 0, 0)),
            pl.BlockSpec((G, D, C), lambda n: (n, 0, 0)),
            pl.BlockSpec((2, D), lambda n: (0, 0)),
            pl.BlockSpec((2, C), lambda n: (0, 0)),
        ],
        out_specs=pl.BlockSpec((G, SSp, C), lambda n: (n, 0, 0)),
        compiler_params=pltpu.CompilerParams(
            dimension_semantics=("parallel",), vmem_limit_bytes=_VMEM_LIMIT),
    )(roi.astype(jnp.bfloat16), p1.astype(jnp.bfloat16), p2.astype(jnp.bfloat16),
      lnd, lnc)
    return out[:BP, :SS]


# --------------------------- model building blocks ----------------------------

def fold_normalization(w, b, mean, std):
    """Absorb (x - mean) / std into conv1 weights/bias."""
    w_f = w / std.reshape(1, -1, 1, 1)
    b_f = b - jnp.sum(w_f * mean.reshape(1, -1, 1, 1), axis=(1, 2, 3))
    return w_f, b_f


def conv3x3_s2(x, w, b, pad_value=None, block_m=512):
    """3x3 stride-2 conv + ReLU via bf16 im2col + Pallas matmul. x: NHWC."""
    B, H, W, Cin = x.shape
    Cout = w.shape[0]
    k, stride, pad = 3, 2, 1
    if pad_value is None:
        xp = jnp.pad(x, ((0, 0), (pad, pad), (pad, pad), (0, 0)))
    else:  # per-channel border value (== zero-padding in normalized space)
        pv = pad_value.reshape(1, 1, 1, Cin).astype(jnp.float32)
        xp = jnp.pad(x.astype(jnp.float32) - pv,
                     ((0, 0), (pad, pad), (pad, pad), (0, 0))) + pv
    xp = xp.astype(jnp.bfloat16)                 # build patches in bf16
    Ho = (H + 2 * pad - k) // stride + 1
    Wo = (W + 2 * pad - k) // stride + 1
    cols = []
    for i in range(k):
        for j in range(k):
            cols.append(xp[:, i:i + stride * Ho:stride, j:j + stride * Wo:stride, :])
    patches = jnp.concatenate(cols, axis=-1).reshape(B * Ho * Wo, k * k * Cin)
    w2 = jnp.transpose(w, (2, 3, 1, 0)).reshape(k * k * Cin, Cout)
    y = pallas_linear(patches, w2, b, act="relu", block_m=block_m,
                      out_dtype=jnp.bfloat16)
    return y.reshape(B, Ho, Wo, Cout)


def box_cxcywh_to_xyxy(b):
    cx, cy, w, h = b[..., 0], b[..., 1], b[..., 2], b[..., 3]
    return jnp.stack([cx - 0.5 * w, cy - 0.5 * h, cx + 0.5 * w, cy + 0.5 * h], axis=-1)


# TODO(synk): ROIAlign (data-dependent bilinear gather, sampling_ratio=2 in
# detectron2) has no clean Pallas equivalent on TPU — kept in plain JAX with
# a single sample per bin; NHWC layout so each tap is channel-contiguous.
def roi_align(feat, boxes, stride, out_size):
    B, Hf, Wf, C = feat.shape
    scale = 1.0 / stride
    x1, y1, x2, y2 = boxes[..., 0], boxes[..., 1], boxes[..., 2], boxes[..., 3]
    bin_w = (x2 - x1) / out_size
    bin_h = (y2 - y1) / out_size
    jj = jnp.arange(out_size, dtype=jnp.float32) + 0.5
    sx = jnp.clip((x1[..., None] + jj * bin_w[..., None]) * scale - 0.5, 0.0, Wf - 1.0)
    sy = jnp.clip((y1[..., None] + jj * bin_h[..., None]) * scale - 0.5, 0.0, Hf - 1.0)
    x0 = jnp.floor(sx)
    y0 = jnp.floor(sy)
    x1i = jnp.clip(x0 + 1, 0, Wf - 1).astype(jnp.int32)
    y1i = jnp.clip(y0 + 1, 0, Hf - 1).astype(jnp.int32)
    wx = sx - x0
    wy = sy - y0
    x0i = x0.astype(jnp.int32)
    y0i = y0.astype(jnp.int32)

    def per_image(f, y0_, y1_, x0_, x1_, wy_, wx_):
        f00 = f[y0_[:, :, None], x0_[:, None, :]]        # (P, S, S, C)
        f01 = f[y0_[:, :, None], x1_[:, None, :]]
        f10 = f[y1_[:, :, None], x0_[:, None, :]]
        f11 = f[y1_[:, :, None], x1_[:, None, :]]
        wyb = wy_[:, :, None, None]
        wxb = wx_[:, None, :, None]
        return (f00 * (1 - wyb) * (1 - wxb) + f01 * (1 - wyb) * wxb
                + f10 * wyb * (1 - wxb) + f11 * wyb * wxb)

    pooled = jax.vmap(per_image)(feat, y0i, y1i, x0i, x1i, wy, wx)   # (B,P,S,S,C)
    BP = pooled.shape[0] * pooled.shape[1]
    return pooled.reshape(BP, out_size * out_size, C)


def multi_head_attention_core(x, p, nhead):
    """QKV projection (Pallas) + tiny softmax core (plain JAX). x: (B, P, C)."""
    B, P, C = x.shape
    dh = C // nhead
    qkv = pallas_linear(x.reshape(B * P, C), p["in_w"], p["in_b"])
    qkv = qkv.reshape(B, P, 3, nhead, dh)
    q = qkv[:, :, 0].transpose(0, 2, 1, 3)
    k = qkv[:, :, 1].transpose(0, 2, 1, 3)
    v = qkv[:, :, 2].transpose(0, 2, 1, 3)
    # attention core is tiny (B, nhead, P, P): kept in plain JAX (glue sized)
    scores = jnp.einsum("bhqd,bhkd->bhqk", q, k) / jnp.sqrt(float(dh))
    attn = jax.nn.softmax(scores, axis=-1)
    o = jnp.einsum("bhqk,bhkd->bhqd", attn, v)
    return o.transpose(0, 2, 1, 3).reshape(B * P, C)


def apply_deltas(deltas, boxes):
    widths = boxes[:, 2] - boxes[:, 0]
    heights = boxes[:, 3] - boxes[:, 1]
    ctr_x = boxes[:, 0] + 0.5 * widths
    ctr_y = boxes[:, 1] + 0.5 * heights
    wx, wy, ww, wh = 2.0, 2.0, 1.0, 1.0
    dx = deltas[:, 0] / wx
    dy = deltas[:, 1] / wy
    dw = jnp.minimum(deltas[:, 2] / ww, _SCALE_CLAMP)
    dh = jnp.minimum(deltas[:, 3] / wh, _SCALE_CLAMP)
    pred_ctr_x = dx * widths + ctr_x
    pred_ctr_y = dy * heights + ctr_y
    pred_w = jnp.exp(dw) * widths
    pred_h = jnp.exp(dh) * heights
    return jnp.stack([pred_ctr_x - 0.5 * pred_w, pred_ctr_y - 0.5 * pred_h,
                      pred_ctr_x + 0.5 * pred_w, pred_ctr_y + 0.5 * pred_h], axis=-1)


def rcnn_head(features, boxes, pro_features, p, cfg):
    """One DynamicHead / RCNNHead iteration (fused Pallas kernels per stage)."""
    B, P, C = pro_features.shape
    S = cfg["pooler_resolution"]
    D = cfg["dim_dynamic"]
    K = cfg["num_classes"]
    BP = B * P
    bf16 = jnp.bfloat16

    roi = roi_align(features, boxes, cfg["feature_stride"], S).astype(bf16)

    # --- self attention among proposals, fused out-proj + residual + norm1 ---
    attn = multi_head_attention_core(pro_features, p["attn"], cfg["nhead"])
    attn_c = jnp.stack([p["attn"]["out_b"], p["norm1_g"], p["norm1_b"]])   # (3,C)
    (pro,) = _rowwise_pallas(
        _attn_out_kernel,
        row_inputs=[attn.astype(bf16), pro_features.reshape(BP, C)],
        const_inputs=[p["attn"]["out_w"].astype(bf16), attn_c],
        out_widths=(C,))

    # --- instance interaction (dynamic conv), single fused core kernel -------
    pi = p["inst"]
    dyn = pallas_linear(pro, pi["dyn_w"], pi["dyn_b"], out_dtype=bf16)     # (BP, 2CD)
    param1 = dyn[:, :C * D].reshape(BP, C, D)
    param2 = dyn[:, C * D:].reshape(BP, D, C)
    feats = pallas_dynconv_core(roi, param1, param2,
                                pi["ln1_g"], pi["ln1_b"], pi["ln2_g"], pi["ln2_b"])
    flat = feats.reshape(BP, S * S * C)                                    # bf16
    tail_c = jnp.stack([pi["out_b"], pi["ln3_g"], pi["ln3_b"],
                        p["norm2_g"], p["norm2_b"]])                       # (5,C)
    (obj,) = _rowwise_pallas(
        _dynconv_tail_kernel,
        row_inputs=[flat, pro],
        const_inputs=[pi["out_w"].astype(bf16), tail_c],
        out_widths=(C,))

    # --- FFN + norm3, one fused kernel ---------------------------------------
    ffn_c = jnp.stack([p["lin2_b"], p["norm3_g"], p["norm3_b"]])           # (3,C)
    (obj,) = _rowwise_pallas(
        _ffn_kernel,
        row_inputs=[obj],
        const_inputs=[p["lin1_w"].astype(bf16), _r2(p["lin1_b"]),
                      p["lin2_w"].astype(bf16), ffn_c],
        out_widths=(C,))

    # --- merged cls/reg towers + merged heads, one lane-dense output slab ----
    HP = _round_up(K + 4, 128)
    tower_w = jnp.concatenate([p["cls_w"], p["reg_w"]], axis=1)            # (C, 2C)
    tower_ln = jnp.stack([p["cls_ln_g"], p["cls_ln_b"],
                          p["reg_ln_g"], p["reg_ln_b"]])                   # (4, C)
    head_w = jnp.zeros((2 * C, HP), jnp.float32)
    head_w = head_w.at[:C, :K].set(p["cls_head_w"])
    head_w = head_w.at[C:, K:K + 4].set(p["reg_head_w"])
    head_b = jnp.zeros((HP,), jnp.float32)
    head_b = head_b.at[:K].set(p["cls_head_b"]).at[K:K + 4].set(p["reg_head_b"])
    (preds,) = _rowwise_pallas(
        functools.partial(_tower_kernel, C=C),
        row_inputs=[obj],
        const_inputs=[tower_w.astype(bf16), tower_ln,
                      head_w.astype(bf16), _r2(head_b)],
        out_widths=(HP,))
    logits = preds[:, :K]
    deltas = preds[:, K:K + 4]

    pred_boxes = apply_deltas(deltas, boxes.reshape(BP, 4))
    return (logits.reshape(B, P, K), pred_boxes.reshape(B, P, 4),
            obj.reshape(B, P, C))


def dynamic_head(features, init_boxes, init_features, params, cfg):
    B = features.shape[0]
    P, C = init_features.shape
    boxes = init_boxes
    pro_features = jnp.broadcast_to(init_features[None], (B, P, C))
    outputs_class, outputs_coord = [], []
    for h in range(cfg["num_heads"]):
        logits, boxes, pro_features = rcnn_head(features, boxes, pro_features,
                                                params["heads"][h], cfg)
        outputs_class.append(logits)
        outputs_coord.append(boxes)
    return jnp.stack(outputs_class), jnp.stack(outputs_coord)


def sparse_rcnn_forward(images, params, cfg):
    """Inference forward path of SparseRCNN (use_focal=True)."""
    B, _, H, W = images.shape
    x = jnp.transpose(images, (0, 2, 3, 1)).astype(jnp.float32)      # NHWC
    images_whwh = jnp.tile(jnp.array([[W, H, W, H]], jnp.float32), (B, 1))

    # synthetic backbone: two 3x3 stride-2 convs -> single FPN-like level, stride 4
    # image normalization folded into conv1 (border padded with pixel_mean).
    w1, b1 = fold_normalization(params["conv1_w"], params["conv1_b"],
                                params["pixel_mean"], params["pixel_std"])
    f = conv3x3_s2(x, w1, b1, pad_value=params["pixel_mean"])
    f = conv3x3_s2(f, params["conv2_w"], params["conv2_b"])          # (B,H/4,W/4,C) bf16

    # learned proposal boxes (cxcywh, normalized) -> xyxy in image coords
    pb = box_cxcywh_to_xyxy(params["init_boxes"])
    proposal_boxes = pb[None] * images_whwh[:, None, :]

    outputs_class, outputs_coord = dynamic_head(f, proposal_boxes,
                                                params["init_features"], params, cfg)
    box_cls = outputs_class[-1]                                      # (B, P, K)
    box_pred = outputs_coord[-1]                                     # (B, P, 4)

    # inference (focal path): sigmoid + per-image top-k over P*K
    K = cfg["num_classes"]
    P = cfg["num_proposals"]
    scores_all = jax.nn.sigmoid(box_cls)
    flat = scores_all.reshape(B, P * K)
    scores, idx = jax.lax.top_k(flat, P)   # torch uses sorted=False; same value set
    labels = idx % K
    prop_idx = idx // K
    boxes = jnp.take_along_axis(box_pred, prop_idx[..., None], axis=1)
    return scores, labels, boxes


# ------------------------------ parameter init --------------------------------

def init_params(key, cfg):
    C = cfg["hidden_dim"]
    K = cfg["num_classes"]
    P = cfg["num_proposals"]
    D = cfg["dim_dynamic"]
    S = cfg["pooler_resolution"]
    F = cfg["dim_feedforward"]
    keys = iter(jax.random.split(key, 512))

    def w(shape, scale=0.05):
        return (scale * jax.random.normal(next(keys), shape)).astype(jnp.float32)

    zeros = lambda s: jnp.zeros(s, jnp.float32)
    ones = lambda s: jnp.ones(s, jnp.float32)

    params = dict(
        pixel_mean=jnp.array([123.675, 116.28, 103.53], jnp.float32),
        pixel_std=jnp.array([58.395, 57.12, 57.375], jnp.float32),
        conv1_w=w((C, 3, 3, 3)), conv1_b=zeros((C,)),
        conv2_w=w((C, C, 3, 3)), conv2_b=zeros((C,)),
        # nn.init.constant_: [:, :2] = 0.5 (center), [:, 2:] = 1.0 (size)
        init_boxes=jnp.concatenate([jnp.full((P, 2), 0.5), jnp.full((P, 2), 1.0)],
                                   axis=1).astype(jnp.float32),
        init_features=w((P, C)),
    )
    bias_prior = -math.log((1.0 - 0.01) / 0.01)   # focal-loss prior bias
    heads = []
    for _ in range(cfg["num_heads"]):
        heads.append(dict(
            attn=dict(in_w=w((C, 3 * C)), in_b=zeros((3 * C,)),
                      out_w=w((C, C)), out_b=zeros((C,))),
            norm1_g=ones((C,)), norm1_b=zeros((C,)),
            inst=dict(dyn_w=w((C, 2 * C * D)), dyn_b=zeros((2 * C * D,)),
                      ln1_g=ones((D,)), ln1_b=zeros((D,)),
                      ln2_g=ones((C,)), ln2_b=zeros((C,)),
                      out_w=w((S * S * C, C)), out_b=zeros((C,)),
                      ln3_g=ones((C,)), ln3_b=zeros((C,))),
            norm2_g=ones((C,)), norm2_b=zeros((C,)),
            lin1_w=w((C, F)), lin1_b=zeros((F,)),
            lin2_w=w((F, C)), lin2_b=zeros((C,)),
            norm3_g=ones((C,)), norm3_b=zeros((C,)),
            cls_w=w((C, C)), cls_ln_g=ones((C,)), cls_ln_b=zeros((C,)),
            reg_w=w((C, C)), reg_ln_g=ones((C,)), reg_ln_b=zeros((C,)),
            cls_head_w=w((C, K)), cls_head_b=jnp.full((K,), bias_prior, jnp.float32),
            reg_head_w=w((C, 4)), reg_head_b=zeros((4,)),
        ))
    params["heads"] = heads
    return params


# ---------------------------------- main ---------------------------------------

if __name__ == "__main__":
    cfg = dict(hidden_dim=32, num_classes=4, num_proposals=8, num_heads=2,
               nhead=4, dim_dynamic=8, dim_feedforward=64,
               pooler_resolution=4, feature_stride=4)
    key = jax.random.PRNGKey(0)
    pkey, ikey = jax.random.split(key)
    params = init_params(pkey, cfg)
    images = jax.random.uniform(ikey, (2, 3, 32, 32), jnp.float32, 0.0, 255.0)

    fwd = jax.jit(lambda im, pr: sparse_rcnn_forward(im, pr, cfg))
    scores, labels, boxes = fwd(images, params)
    jax.block_until_ready((scores, labels, boxes))

    assert scores.shape == (2, cfg["num_proposals"])
    assert labels.shape == (2, cfg["num_proposals"])
    assert boxes.shape == (2, cfg["num_proposals"], 4)
    assert bool(jnp.all(jnp.isfinite(scores))) and bool(jnp.all(jnp.isfinite(boxes)))
    print("KERNEL_OK")
</pallas_src>

<mosaic_0001>
module attributes {stable_mosaic.version = 11 : i64} {
  func.func @_linear_kernel(%arg0: i32, %arg1: i32, %arg2: memref<256x32xbf16, #tpu.memory_space<vmem>>, %arg3: memref<32x32xbf16, #tpu.memory_space<vmem>>, %arg4: memref<1x32xf32, #tpu.memory_space<vmem>>, %arg5: memref<256x32xbf16, #tpu.memory_space<vmem>>) attributes {dimension_semantics = [#tpu.dimension_semantics<parallel>, #tpu.dimension_semantics<parallel>], iteration_bounds = array<i64: 2, 1>, scalar_prefetch = 0 : i64, scratch_operands = 0 : i64, tpu.core_type = #tpu.core_type<tc>, window_params = [{transform_indices = @transform_0, window_bounds = array<i64: 256, 32>}, {transform_indices = @transform_1, window_bounds = array<i64: 32, 32>}, {transform_indices = @transform_2, window_bounds = array<i64: 1, 32>}, {transform_indices = @transform_3, window_bounds = array<i64: 256, 32>}]} {
    %c0 = arith.constant 0 : index
    %c0_0 = arith.constant 0 : index
    %0 = vector.load %arg2[%c0, %c0_0] : memref<256x32xbf16, #tpu.memory_space<vmem>>, vector<256x32xbf16>
    %c0_1 = arith.constant 0 : index
    %c0_2 = arith.constant 0 : index
    %1 = vector.load %arg3[%c0_1, %c0_2] : memref<32x32xbf16, #tpu.memory_space<vmem>>, vector<32x32xbf16>
    %cst = arith.constant dense<0.000000e+00> : vector<256x32xf32>
    %2 = tpu.matmul %0, %1, %cst {dimension_numbers = #tpu.dot_dimension_numbers<[1], [0], [0], [1], [0, 0, 1, 1], [], []>} : vector<256x32xbf16>, vector<32x32xbf16>, vector<256x32xf32> -> vector<256x32xf32>
    %c0_3 = arith.constant 0 : index
    %c0_4 = arith.constant 0 : index
    %3 = vector.load %arg4[%c0_3, %c0_4] : memref<1x32xf32, #tpu.memory_space<vmem>>, vector<1x32xf32>
    %4 = vector.broadcast %3 : vector<1x32xf32> to vector<256x32xf32>
    %5 = arith.addf %2, %4 : vector<256x32xf32>
    %cst_5 = arith.constant 0.000000e+00 : f32
    %6 = vector.broadcast %cst_5 : f32 to vector<256x32xf32>
    %7 = arith.maximumf %5, %6 : vector<256x32xf32>
    %8 = arith.truncf %7 : vector<256x32xf32> to vector<256x32xbf16>
    %c0_6 = arith.constant 0 : index
    %c0_7 = arith.constant 0 : index
    %9 = vector.load %arg5[%c0_6, %c0_7] : memref<256x32xbf16, #tpu.memory_space<vmem>>, vector<256x32xbf16>
    tpu.vector_store %arg5[%c0_6, %c0_7], %8 {strides = array<i32>} : memref<256x32xbf16, #tpu.memory_space<vmem>>, vector<256x32xbf16>,
    return
  }
  func.func @transform_0(%arg0: i32, %arg1: i32) -> (i32, i32) {
    %c0_i32 = arith.constant 0 : i32
    %c0_i32_0 = arith.constant 0 : i32
    return %arg0, %c0_i32 : i32, i32
  }
  func.func @transform_1(%arg0: i32, %arg1: i32) -> (i32, i32) {
    %c0_i32 = arith.constant 0 : i32
    %c0_i32_0 = arith.constant 0 : i32
    return %c0_i32, %arg1 : i32, i32
  }
  func.func @transform_2(%arg0: i32, %arg1: i32) -> (i32, i32) {
    %c0_i32 = arith.constant 0 : i32
    %c0_i32_0 = arith.constant 0 : i32
    return %c0_i32, %arg1 : i32, i32
  }
  func.func @transform_3(%arg0: i32, %arg1: i32) -> (i32, i32) {
    %c0_i32 = arith.constant 0 : i32
    return %arg0, %arg1 : i32, i32
  }
}

module attributes {stable_mosaic.version = 11 : i64} {
  func.func @_linear_kernel(%arg0: i32, %arg1: i32, %arg2: memref<64x288xbf16, #tpu.memory_space<vmem>>, %arg3: memref<288x32xbf16, #tpu.memory_space<vmem>>, %arg4: memref<1x32xf32, #tpu.memory_space<vmem>>, %arg5: memref<64x32xbf16, #tpu.memory_space<vmem>>) attributes {dimension_semantics = [#tpu.dimension_semantics<parallel>, #tpu.dimension_semantics<parallel>], iteration_bounds = array<i64: 2, 1>, scalar_prefetch = 0 : i64, scratch_operands = 0 : i64, tpu.core_type = #tpu.core_type<tc>, window_params = [{transform_indices = @transform_0, window_bounds = array<i64: 64, 288>}, {transform_indices = @transform_1, window_bounds = array<i64: 288, 32>}, {transform_indices = @transform_2, window_bounds = array<i64: 1, 32>}, {transform_indices = @transform_3, window_bounds = array<i64: 64, 32>}]} {
    %c0 = arith.constant 0 : index
    %c0_0 = arith.constant 0 : index
    %0 = vector.load %arg2[%c0, %c0_0] : memref<64x288xbf16, #tpu.memory_space<vmem>>, vector<64x288xbf16>
    %c0_1 = arith.constant 0 : index
    %c0_2 = arith.constant 0 : index
    %1 = vector.load %arg3[%c0_1, %c0_2] : memref<288x32xbf16, #tpu.memory_space<vmem>>, vector<288x32xbf16>
    %cst = arith.constant dense<0.000000e+00> : vector<64x32xf32>
    %2 = tpu.matmul %0, %1, %cst {dimension_numbers = #tpu.dot_dimension_numbers<[1], [0], [0], [1], [0, 0, 1, 1], [], []>} : vector<64x288xbf16>, vector<288x32xbf16>, vector<64x32xf32> -> vector<64x32xf32>
    %c0_3 = arith.constant 0 : index
    %c0_4 = arith.constant 0 : index
    %3 = vector.load %arg4[%c0_3, %c0_4] : memref<1x32xf32, #tpu.memory_space<vmem>>, vector<1x32xf32>
    %4 = vector.broadcast %3 : vector<1x32xf32> to vector<64x32xf32>
    %5 = arith.addf %2, %4 : vector<64x32xf32>
    %cst_5 = arith.constant 0.000000e+00 : f32
    %6 = vector.broadcast %cst_5 : f32 to vector<64x32xf32>
    %7 = arith.maximumf %5, %6 : vector<64x32xf32>
    %8 = arith.truncf %7 : vector<64x32xf32> to vector<64x32xbf16>
    %c0_6 = arith.constant 0 : index
    %c0_7 = arith.constant 0 : index
    %9 = vector.load %arg5[%c0_6, %c0_7] : memref<64x32xbf16, #tpu.memory_space<vmem>>, vector<64x32xbf16>
    tpu.vector_store %arg5[%c0_6, %c0_7], %8 {strides = array<i32>} : memref<64x32xbf16, #tpu.memory_space<vmem>>, vector<64x32xbf16>,
    return
  }
  func.func @transform_0(%arg0: i32, %arg1: i32) -> (i32, i32) {
    %c0_i32 = arith.constant 0 : i32
    %c0_i32_0 = arith.constant 0 : i32
    return %arg0, %c0_i32 : i32, i32
  }
  func.func @transform_1(%arg0: i32, %arg1: i32) -> (i32, i32) {
    %c0_i32 = arith.constant 0 : i32
    %c0_i32_0 = arith.constant 0 : i32
    return %c0_i32, %arg1 : i32, i32
  }
  func.func @transform_2(%arg0: i32, %arg1: i32) -> (i32, i32) {
    %c0_i32 = arith.constant 0 : i32
    %c0_i32_0 = arith.constant 0 : i32
    return %c0_i32, %arg1 : i32, i32
  }
  func.func @transform_3(%arg0: i32, %arg1: i32) -> (i32, i32) {
    %c0_i32 = arith.constant 0 : i32
    return %arg0, %arg1 : i32, i32
  }
}

module attributes {stable_mosaic.version = 11 : i64} {
  func.func @_linear_kernel(%arg0: i32, %arg1: i32, %arg2: memref<8x32xbf16, #tpu.memory_space<vmem>>, %arg3: memref<32x96xbf16, #tpu.memory_space<vmem>>, %arg4: memref<1x96xf32, #tpu.memory_space<vmem>>, %arg5: memref<8x96xf32, #tpu.memory_space<vmem>>) attributes {dimension_semantics = [#tpu.dimension_semantics<parallel>, #tpu.dimension_semantics<parallel>], iteration_bounds = array<i64: 2, 1>, scalar_prefetch = 0 : i64, scratch_operands = 0 : i64, tpu.core_type = #tpu.core_type<tc>, window_params = [{transform_indices = @transform_0, window_bounds = array<i64: 8, 32>}, {transform_indices = @transform_1, window_bounds = array<i64: 32, 96>}, {transform_indices = @transform_2, window_bounds = array<i64: 1, 96>}, {transform_indices = @transform_3, window_bounds = array<i64: 8, 96>}]} {
    %c0 = arith.constant 0 : index
    %c0_0 = arith.constant 0 : index
    %0 = vector.load %arg2[%c0, %c0_0] : memref<8x32xbf16, #tpu.memory_space<vmem>>, vector<8x32xbf16>
    %c0_1 = arith.constant 0 : index
    %c0_2 = arith.constant 0 : index
    %1 = vector.load %arg3[%c0_1, %c0_2] : memref<32x96xbf16, #tpu.memory_space<vmem>>, vector<32x96xbf16>
    %cst = arith.constant dense<0.000000e+00> : vector<8x96xf32>
    %2 = tpu.matmul %0, %1, %cst {dimension_numbers = #tpu.dot_dimension_numbers<[1], [0], [0], [1], [0, 0, 1, 1], [], []>} : vector<8x32xbf16>, vector<32x96xbf16>, vector<8x96xf32> -> vector<8x96xf32>
    %c0_3 = arith.constant 0 : index
    %c0_4 = arith.constant 0 : index
    %3 = vector.load %arg4[%c0_3, %c0_4] : memref<1x96xf32, #tpu.memory_space<vmem>>, vector<1x96xf32>
    %4 = vector.broadcast %3 : vector<1x96xf32> to vector<8x96xf32>
    %5 = arith.addf %2, %4 : vector<8x96xf32>
    %c0_5 = arith.constant 0 : index
    %c0_6 = arith.constant 0 : index
    %6 = vector.load %arg5[%c0_5, %c0_6] : memref<8x96xf32, #tpu.memory_space<vmem>>, vector<8x96xf32>
    tpu.vector_store %arg5[%c0_5, %c0_6], %5 {strides = array<i32>} : memref<8x96xf32, #tpu.memory_space<vmem>>, vector<8x96xf32>,
    return
  }
  func.func @transform_0(%arg0: i32, %arg1: i32) -> (i32, i32) {
    %c0_i32 = arith.constant 0 : i32
    %c0_i32_0 = arith.constant 0 : i32
    return %arg0, %c0_i32 : i32, i32
  }
  func.func @transform_1(%arg0: i32, %arg1: i32) -> (i32, i32) {
    %c0_i32 = arith.constant 0 : i32
    %c0_i32_0 = arith.constant 0 : i32
    return %c0_i32, %arg1 : i32, i32
  }
  func.func @transform_2(%arg0: i32, %arg1: i32) -> (i32, i32) {
    %c0_i32 = arith.constant 0 : i32
    %c0_i32_0 = arith.constant 0 : i32
    return %c0_i32, %arg1 : i32, i32
  }
  func.func @transform_3(%arg0: i32, %arg1: i32) -> (i32, i32) {
    %c0_i32 = arith.constant 0 : i32
    return %arg0, %arg1 : i32, i32
  }
}

module attributes {stable_mosaic.version = 11 : i64} {
  func.func @_linear_kernel(%arg0: i32, %arg1: i32, %arg2: memref<8x32xbf16, #tpu.memory_space<vmem>>, %arg3: memref<32x512xbf16, #tpu.memory_space<vmem>>, %arg4: memref<1x512xf32, #tpu.memory_space<vmem>>, %arg5: memref<8x512xbf16, #tpu.memory_space<vmem>>) attributes {dimension_semantics = [#tpu.dimension_semantics<parallel>, #tpu.dimension_semantics<parallel>], iteration_bounds = array<i64: 2, 1>, scalar_prefetch = 0 : i64, scratch_operands = 0 : i64, tpu.core_type = #tpu.core_type<tc>, window_params = [{transform_indices = @transform_0, window_bounds = array<i64: 8, 32>}, {transform_indices = @transform_1, window_bounds = array<i64: 32, 512>}, {transform_indices = @transform_2, window_bounds = array<i64: 1, 512>}, {transform_indices = @transform_3, window_bounds = array<i64: 8, 512>}]} {
    %c0 = arith.constant 0 : index
    %c0_0 = arith.constant 0 : index
    %0 = vector.load %arg2[%c0, %c0_0] : memref<8x32xbf16, #tpu.memory_space<vmem>>, vector<8x32xbf16>
    %c0_1 = arith.constant 0 : index
    %c0_2 = arith.constant 0 : index
    %1 = vector.load %arg3[%c0_1, %c0_2] : memref<32x512xbf16, #tpu.memory_space<vmem>>, vector<32x512xbf16>
    %cst = arith.constant dense<0.000000e+00> : vector<8x512xf32>
    %2 = tpu.matmul %0, %1, %cst {dimension_numbers = #tpu.dot_dimension_numbers<[1], [0], [0], [1], [0, 0, 1, 1], [], []>} : vector<8x32xbf16>, vector<32x512xbf16>, vector<8x512xf32> -> vector<8x512xf32>
    %c0_3 = arith.constant 0 : index
    %c0_4 = arith.constant 0 : index
    %3 = vector.load %arg4[%c0_3, %c0_4] : memref<1x512xf32, #tpu.memory_space<vmem>>, vector<1x512xf32>
    %4 = vector.broadcast %3 : vector<1x512xf32> to vector<8x512xf32>
    %5 = arith.addf %2, %4 : vector<8x512xf32>
    %6 = arith.truncf %5 : vector<8x512xf32> to vector<8x512xbf16>
    %c0_5 = arith.constant 0 : index
    %c0_6 = arith.constant 0 : index
    %7 = vector.load %arg5[%c0_5, %c0_6] : memref<8x512xbf16, #tpu.memory_space<vmem>>, vector<8x512xbf16>
    tpu.vector_store %arg5[%c0_5, %c0_6], %6 {strides = array<i32>} : memref<8x512xbf16, #tpu.memory_space<vmem>>, vector<8x512xbf16>,
    return
  }
  func.func @transform_0(%arg0: i32, %arg1: i32) -> (i32, i32) {
    %c0_i32 = arith.constant 0 : i32
    %c0_i32_0 = arith.constant 0 : i32
    return %arg0, %c0_i32 : i32, i32
  }
  func.func @transform_1(%arg0: i32, %arg1: i32) -> (i32, i32) {
    %c0_i32 = arith.constant 0 : i32
    %c0_i32_0 = arith.constant 0 : i32
    return %c0_i32, %arg1 : i32, i32
  }
  func.func @transform_2(%arg0: i32, %arg1: i32) -> (i32, i32) {
    %c0_i32 = arith.constant 0 : i32
    %c0_i32_0 = arith.constant 0 : i32
    return %c0_i32, %arg1 : i32, i32
  }
  func.func @transform_3(%arg0: i32, %arg1: i32) -> (i32, i32) {
    %c0_i32 = arith.constant 0 : i32
    return %arg0, %arg1 : i32, i32
  }
}

module attributes {stable_mosaic.version = 11 : i64} {
  func.func @_attn_out_kernel(%arg0: i32, %arg1: memref<8x32xbf16, #tpu.memory_space<vmem>>, %arg2: memref<8x32xf32, #tpu.memory_space<vmem>>, %arg3: memref<32x32xbf16, #tpu.memory_space<vmem>>, %arg4: memref<3x32xf32, #tpu.memory_space<vmem>>, %arg5: memref<8x32xf32, #tpu.memory_space<vmem>>) attributes {dimension_semantics = [#tpu.dimension_semantics<parallel>], iteration_bounds = array<i64: 2>, scalar_prefetch = 0 : i64, scratch_operands = 0 : i64, tpu.core_type = #tpu.core_type<tc>, window_params = [{transform_indices = @transform_0, window_bounds = array<i64: 8, 32>}, {transform_indices = @transform_1, window_bounds = array<i64: 8, 32>}, {pipeline_mode = #tpu.pipeline_mode<synchronous>, transform_indices = @transform_2, window_bounds = array<i64: 32, 32>}, {pipeline_mode = #tpu.pipeline_mode<synchronous>, transform_indices = @transform_3, window_bounds = array<i64: 3, 32>}, {transform_indices = @transform_4, window_bounds = array<i64: 8, 32>}]} {
    %c0 = arith.constant 0 : index
    %c0_0 = arith.constant 0 : index
    %0 = vector.load %arg1[%c0, %c0_0] : memref<8x32xbf16, #tpu.memory_space<vmem>>, vector<8x32xbf16>
    %c0_1 = arith.constant 0 : index
    %c0_2 = arith.constant 0 : index
    %1 = vector.load %arg3[%c0_1, %c0_2] : memref<32x32xbf16, #tpu.memory_space<vmem>>, vector<32x32xbf16>
    %cst = arith.constant dense<0.000000e+00> : vector<8x32xf32>
    %2 = tpu.matmul %0, %1, %cst {dimension_numbers = #tpu.dot_dimension_numbers<[1], [0], [0], [1], [0, 0, 1, 1], [], []>} : vector<8x32xbf16>, vector<32x32xbf16>, vector<8x32xf32> -> vector<8x32xf32>
    %c0_3 = arith.constant 0 : index
    %c0_4 = arith.constant 0 : index
    %3 = vector.load %arg4[%c0_3, %c0_4] : memref<3x32xf32, #tpu.memory_space<vmem>>, vector<1x32xf32>
    %4 = vector.broadcast %3 : vector<1x32xf32> to vector<8x32xf32>
    %5 = arith.addf %2, %4 : vector<8x32xf32>
    %c0_5 = arith.constant 0 : index
    %c0_6 = arith.constant 0 : index
    %6 = vector.load %arg2[%c0_5, %c0_6] : memref<8x32xf32, #tpu.memory_space<vmem>>, vector<8x32xf32>
    %7 = arith.addf %6, %5 : vector<8x32xf32>
    %c1 = arith.constant 1 : index
    %c0_7 = arith.constant 0 : index
    %8 = vector.load %arg4[%c1, %c0_7] : memref<3x32xf32, #tpu.memory_space<vmem>>, vector<1x32xf32>
    %c2 = arith.constant 2 : index
    %c0_8 = arith.constant 0 : index
    %9 = vector.load %arg4[%c2, %c0_8] : memref<3x32xf32, #tpu.memory_space<vmem>>, vector<1x32xf32>
    %cst_9 = arith.constant dense<0.000000e+00> : vector<8xf32>
    %10 = vector.multi_reduction <add>, %7, %cst_9 [1] : vector<8x32xf32> to vector<8xf32>
    %11 = vector.shape_cast %10 : vector<8xf32> to vector<8x1xf32>
    %cst_10 = arith.constant 3.200000e+01 : f32
    %12 = vector.broadcast %cst_10 : f32 to vector<8x1xf32>
    %13 = arith.divf %11, %12 : vector<8x1xf32>
    %14 = vector.broadcast %13 : vector<8x1xf32> to vector<8x32xf32>
    %15 = arith.subf %7, %14 : vector<8x32xf32>
    %16 = arith.mulf %15, %15 : vector<8x32xf32>
    %cst_11 = arith.constant dense<0.000000e+00> : vector<8xf32>
    %17 = vector.multi_reduction <add>, %16, %cst_11 [1] : vector<8x32xf32> to vector<8xf32>
    %18 = vector.shape_cast %17 : vector<8xf32> to vector<8x1xf32>
    %cst_12 = arith.constant 3.200000e+01 : f32
    %19 = vector.broadcast %cst_12 : f32 to vector<8x1xf32>
    %20 = arith.divf %18, %19 : vector<8x1xf32>
    %cst_13 = arith.constant 9.99999974E-6 : f32
    %21 = vector.broadcast %cst_13 : f32 to vector<8x1xf32>
    %22 = arith.addf %20, %21 : vector<8x1xf32>
    %23 = math.rsqrt %22 : vector<8x1xf32>
    %24 = vector.broadcast %23 : vector<8x1xf32> to vector<8x32xf32>
    %25 = arith.mulf %15, %24 : vector<8x32xf32>
    %26 = vector.broadcast %8 : vector<1x32xf32> to vector<8x32xf32>
    %27 = arith.mulf %25, %26 : vector<8x32xf32>
    %28 = vector.broadcast %9 : vector<1x32xf32> to vector<8x32xf32>
    %29 = arith.addf %27, %28 : vector<8x32xf32>
    %c0_14 = arith.constant 0 : index
    %c0_15 = arith.constant 0 : index
    %30 = vector.load %arg5[%c0_14, %c0_15] : memref<8x32xf32, #tpu.memory_space<vmem>>, vector<8x32xf32>
    tpu.vector_store %arg5[%c0_14, %c0_15], %29 {strides = array<i32>} : memref<8x32xf32, #tpu.memory_space<vmem>>, vector<8x32xf32>,
    return
  }
  func.func @transform_0(%arg0: i32) -> (i32, i32) {
    %c0_i32 = arith.constant 0 : i32
    %c0_i32_0 = arith.constant 0 : i32
    return %arg0, %c0_i32 : i32, i32
  }
  func.func @transform_1(%arg0: i32) -> (i32, i32) {
    %c0_i32 = arith.constant 0 : i32
    %c0_i32_0 = arith.constant 0 : i32
    return %arg0, %c0_i32 : i32, i32
  }
  func.func @transform_2(%arg0: i32) -> (i32, i32) {
    %c0_i32 = arith.constant 0 : i32
    %c0_i32_0 = arith.constant 0 : i32
    %c0_i32_1 = arith.constant 0 : i32
    return %c0_i32, %c0_i32_0 : i32, i32
  }
  func.func @transform_3(%arg0: i32) -> (i32, i32) {
    %c0_i32 = arith.constant 0 : i32
    %c0_i32_0 = arith.constant 0 : i32
    %c0_i32_1 = arith.constant 0 : i32
    return %c0_i32, %c0_i32_0 : i32, i32
  }
  func.func @transform_4(%arg0: i32) -> (i32, i32) {
    %c0_i32 = arith.constant 0 : i32
    %c0_i32_0 = arith.constant 0 : i32
    return %arg0, %c0_i32 : i32, i32
  }
}

module attributes {stable_mosaic.version = 11 : i64} {
  func.func @_dynconv_core_kernel(%arg0: i32, %arg1: memref<8x16x32xbf16, #tpu.memory_space<vmem>>, %arg2: memref<8x32x8xbf16, #tpu.memory_space<vmem>>, %arg3: memref<8x8x32xbf16, #tpu.memory_space<vmem>>, %arg4: memref<2x8xf32, #tpu.memory_space<vmem>>, %arg5: memref<2x32xf32, #tpu.memory_space<vmem>>, %arg6: memref<8x16x32xbf16, #tpu.memory_space<vmem>>) attributes {dimension_semantics = [#tpu.dimension_semantics<parallel>], iteration_bounds = array<i64: 2>, scalar_prefetch = 0 : i64, scratch_operands = 0 : i64, tpu.core_type = #tpu.core_type<tc>, window_params = [{transform_indices = @transform_0, window_bounds = array<i64: 8, 16, 32>}, {transform_indices = @transform_1, window_bounds = array<i64: 8, 32, 8>}, {transform_indices = @transform_2, window_bounds = array<i64: 8, 8, 32>}, {pipeline_mode = #tpu.pipeline_mode<synchronous>, transform_indices = @transform_3, window_bounds = array<i64: 2, 8>}, {pipeline_mode = #tpu.pipeline_mode<synchronous>, transform_indices = @transform_4, window_bounds = array<i64: 2, 32>}, {transform_indices = @transform_5, window_bounds = array<i64: 8, 16, 32>}]} {
    %c0 = arith.constant 0 : index
    %c0_0 = arith.constant 0 : index
    %0 = vector.load %arg4[%c0, %c0_0] : memref<2x8xf32, #tpu.memory_space<vmem>>, vector<1x8xf32>
    %1 = vector.shape_cast %0 : vector<1x8xf32> to vector<1x1x8xf32>
    %c1 = arith.constant 1 : index
    %c0_1 = arith.constant 0 : index
    %2 = vector.load %arg4[%c1, %c0_1] : memref<2x8xf32, #tpu.memory_space<vmem>>, vector<1x8xf32>
    %3 = vector.shape_cast %2 : vector<1x8xf32> to vector<1x1x8xf32>
    %c0_2 = arith.constant 0 : index
    %c0_3 = arith.constant 0 : index
    %4 = vector.load %arg5[%c0_2, %c0_3] : memref<2x32xf32, #tpu.memory_space<vmem>>, vector<1x32xf32>
    %5 = vector.shape_cast %4 : vector<1x32xf32> to vector<1x1x32xf32>
    %c1_4 = arith.constant 1 : index
    %c0_5 = arith.constant 0 : index
    %6 = vector.load %arg5[%c1_4, %c0_5] : memref<2x32xf32, #tpu.memory_space<vmem>>, vector<1x32xf32>
    %7 = vector.shape_cast %6 : vector<1x32xf32> to vector<1x1x32xf32>
    %c0_6 = arith.constant 0 : index
    %c0_7 = arith.constant 0 : index
    %c0_8 = arith.constant 0 : index
    %8 = vector.load %arg1[%c0_6, %c0_7, %c0_8] : memref<8x16x32xbf16, #tpu.memory_space<vmem>>, vector<8x16x32xbf16>
    %c0_9 = arith.constant 0 : index
    %c0_10 = arith.constant 0 : index
    %c0_11 = arith.constant 0 : index
    %9 = vector.load %arg2[%c0_9, %c0_10, %c0_11] : memref<8x32x8xbf16, #tpu.memory_space<vmem>>, vector<8x32x8xbf16>
    "tpu.trace_start"() <{level = 10 : i32, message = "gsc,gcd->gsd"}> : () -> ()
    %cst = arith.constant dense<0.000000e+00> : vector<8x16x8xf32>
    %10 = tpu.matmul %8, %9, %cst {dimension_numbers = #tpu.dot_dimension_numbers<[2], [1], [1], [2], [0, 0, 0, 1, 1, 2], [0], [0]>} : vector<8x16x32xbf16>, vector<8x32x8xbf16>, vector<8x16x8xf32> -> vector<8x16x8xf32>
    "tpu.trace_stop"() : () -> ()
    %cst_12 = arith.constant dense<0.000000e+00> : vector<8x16xf32>
    %11 = vector.multi_reduction <add>, %10, %cst_12 [2] : vector<8x16x8xf32> to vector<8x16xf32>
    %12 = vector.shape_cast %11 : vector<8x16xf32> to vector<8x16x1xf32>
    %cst_13 = arith.constant 8.000000e+00 : f32
    %13 = vector.broadcast %cst_13 : f32 to vector<8x16x1xf32>
    %14 = arith.divf %12, %13 : vector<8x16x1xf32>
    %15 = vector.broadcast %14 : vector<8x16x1xf32> to vector<8x16x8xf32>
    %16 = arith.subf %10, %15 : vector<8x16x8xf32>
    %17 = arith.mulf %16, %16 : vector<8x16x8xf32>
    %cst_14 = arith.constant dense<0.000000e+00> : vector<8x16xf32>
    %18 = vector.multi_reduction <add>, %17, %cst_14 [2] : vector<8x16x8xf32> to vector<8x16xf32>
    %19 = vector.shape_cast %18 : vector<8x16xf32> to vector<8x16x1xf32>
    %cst_15 = arith.constant 8.000000e+00 : f32
    %20 = vector.broadcast %cst_15 : f32 to vector<8x16x1xf32>
    %21 = arith.divf %19, %20 : vector<8x16x1xf32>
    %cst_16 = arith.constant 9.99999974E-6 : f32
    %22 = vector.broadcast %cst_16 : f32 to vector<8x16x1xf32>
    %23 = arith.addf %21, %22 : vector<8x16x1xf32>
    %24 = math.rsqrt %23 : vector<8x16x1xf32>
    %25 = vector.broadcast %24 : vector<8x16x1xf32> to vector<8x16x8xf32>
    %26 = arith.mulf %16, %25 : vector<8x16x8xf32>
    %27 = vector.broadcast %1 : vector<1x1x8xf32> to vector<8x16x8xf32>
    %28 = arith.mulf %26, %27 : vector<8x16x8xf32>
    %29 = vector.broadcast %3 : vector<1x1x8xf32> to vector<8x16x8xf32>
    %30 = arith.addf %28, %29 : vector<8x16x8xf32>
    %cst_17 = arith.constant 0.000000e+00 : f32
    %31 = vector.broadcast %cst_17 : f32 to vector<8x16x8xf32>
    %32 = arith.maximumf %30, %31 : vector<8x16x8xf32>
    %33 = arith.truncf %32 : vector<8x16x8xf32> to vector<8x16x8xbf16>
    %c0_18 = arith.constant 0 : index
    %c0_19 = arith.constant 0 : index
    %c0_20 = arith.constant 0 : index
    %34 = vector.load %arg3[%c0_18, %c0_19, %c0_20] : memref<8x8x32xbf16, #tpu.memory_space<vmem>>, vector<8x8x32xbf16>
    "tpu.trace_start"() <{level = 10 : i32, message = "gsd,gdc->gsc"}> : () -> ()
    %cst_21 = arith.constant dense<0.000000e+00> : vector<8x16x32xf32>
    %35 = tpu.matmul %33, %34, %cst_21 {dimension_numbers = #tpu.dot_dimension_numbers<[2], [1], [1], [2], [0, 0, 0, 1, 1, 2], [0], [0]>} : vector<8x16x8xbf16>, vector<8x8x32xbf16>, vector<8x16x32xf32> -> vector<8x16x32xf32>
    "tpu.trace_stop"() : () -> ()
    %cst_22 = arith.constant dense<0.000000e+00> : vector<8x16xf32>
    %36 = vector.multi_reduction <add>, %35, %cst_22 [2] : vector<8x16x32xf32> to vector<8x16xf32>
    %37 = vector.shape_cast %36 : vector<8x16xf32> to vector<8x16x1xf32>
    %cst_23 = arith.constant 3.200000e+01 : f32
    %38 = vector.broadcast %cst_23 : f32 to vector<8x16x1xf32>
    %39 = arith.divf %37, %38 : vector<8x16x1xf32>
    %40 = vector.broadcast %39 : vector<8x16x1xf32> to vector<8x16x32xf32>
    %41 = arith.subf %35, %40 : vector<8x16x32xf32>
    %42 = arith.mulf %41, %41 : vector<8x16x32xf32>
    %cst_24 = arith.constant dense<0.000000e+00> : vector<8x16xf32>
    %43 = vector.multi_reduction <add>, %42, %cst_24 [2] : vector<8x16x32xf32> to vector<8x16xf32>
    %44 = vector.shape_cast %43 : vector<8x16xf32> to vector<8x16x1xf32>
    %cst_25 = arith.constant 3.200000e+01 : f32
    %45 = vector.broadcast %cst_25 : f32 to vector<8x16x1xf32>
    %46 = arith.divf %44, %45 : vector<8x16x1xf32>
    %cst_26 = arith.constant 9.99999974E-6 : f32
    %47 = vector.broadcast %cst_26 : f32 to vector<8x16x1xf32>
    %48 = arith.addf %46, %47 : vector<8x16x1xf32>
    %49 = math.rsqrt %48 : vector<8x16x1xf32>
    %50 = vector.broadcast %49 : vector<8x16x1xf32> to vector<8x16x32xf32>
    %51 = arith.mulf %41, %50 : vector<8x16x32xf32>
    %52 = vector.broadcast %5 : vector<1x1x32xf32> to vector<8x16x32xf32>
    %53 = arith.mulf %51, %52 : vector<8x16x32xf32>
    %54 = vector.broadcast %7 : vector<1x1x32xf32> to vector<8x16x32xf32>
    %55 = arith.addf %53, %54 : vector<8x16x32xf32>
    %cst_27 = arith.constant 0.000000e+00 : f32
    %56 = vector.broadcast %cst_27 : f32 to vector<8x16x32xf32>
    %57 = arith.maximumf %55, %56 : vector<8x16x32xf32>
    %58 = arith.truncf %57 : vector<8x16x32xf32> to vector<8x16x32xbf16>
    %c0_28 = arith.constant 0 : index
    %c0_29 = arith.constant 0 : index
    %c0_30 = arith.constant 0 : index
    %59 = vector.load %arg6[%c0_28, %c0_29, %c0_30] : memref<8x16x32xbf16, #tpu.memory_space<vmem>>, vector<8x16x32xbf16>
    tpu.vector_store %arg6[%c0_28, %c0_29, %c0_30], %58 {strides = array<i32>} : memref<8x16x32xbf16, #tpu.memory_space<vmem>>, vector<8x16x32xbf16>,
    return
  }
  func.func @transform_0(%arg0: i32) -> (i32, i32, i32) {
    %c0_i32 = arith.constant 0 : i32
    %c0_i32_0 = arith.constant 0 : i32
    %c0_i32_1 = arith.constant 0 : i32
    return %arg0, %c0_i32, %c0_i32_0 : i32, i32, i32
  }
  func.func @transform_1(%arg0: i32) -> (i32, i32, i32) {
    %c0_i32 = arith.constant 0 : i32
    %c0_i32_0 = arith.constant 0 : i32
    %c0_i32_1 = arith.constant 0 : i32
    return %arg0, %c0_i32, %c0_i32_0 : i32, i32, i32
  }
  func.func @transform_2(%arg0: i32) -> (i32, i32, i32) {
    %c0_i32 = arith.constant 0 : i32
    %c0_i32_0 = arith.constant 0 : i32
    %c0_i32_1 = arith.constant 0 : i32
    return %arg0, %c0_i32, %c0_i32_0 : i32, i32, i32
  }
  func.func @transform_3(%arg0: i32) -> (i32, i32) {
    %c0_i32 = arith.constant 0 : i32
    %c0_i32_0 = arith.constant 0 : i32
    %c0_i32_1 = arith.constant 0 : i32
    return %c0_i32, %c0_i32_0 : i32, i32
  }
  func.func @transform_4(%arg0: i32) -> (i32, i32) {
    %c0_i32 = arith.constant 0 : i32
    %c0_i32_0 = arith.constant 0 : i32
    %c0_i32_1 = arith.constant 0 : i32
    return %c0_i32, %c0_i32_0 : i32, i32
  }
  func.func @transform_5(%arg0: i32) -> (i32, i32, i32) {
    %c0_i32 = arith.constant 0 : i32
    %c0_i32_0 = arith.constant 0 : i32
    %c0_i32_1 = arith.constant 0 : i32
    return %arg0, %c0_i32, %c0_i32_0 : i32, i32, i32
  }
}

module attributes {stable_mosaic.version = 11 : i64} {
  func.func @_dynconv_tail_kernel(%arg0: i32, %arg1: memref<8x512xbf16, #tpu.memory_space<vmem>>, %arg2: memref<8x32xf32, #tpu.memory_space<vmem>>, %arg3: memref<512x32xbf16, #tpu.memory_space<vmem>>, %arg4: memref<5x32xf32, #tpu.memory_space<vmem>>, %arg5: memref<8x32xf32, #tpu.memory_space<vmem>>) attributes {dimension_semantics = [#tpu.dimension_semantics<parallel>], iteration_bounds = array<i64: 2>, scalar_prefetch = 0 : i64, scratch_operands = 0 : i64, tpu.core_type = #tpu.core_type<tc>, window_params = [{transform_indices = @transform_0, window_bounds = array<i64: 8, 512>}, {transform_indices = @transform_1, window_bounds = array<i64: 8, 32>}, {pipeline_mode = #tpu.pipeline_mode<synchronous>, transform_indices = @transform_2, window_bounds = array<i64: 512, 32>}, {pipeline_mode = #tpu.pipeline_mode<synchronous>, transform_indices = @transform_3, window_bounds = array<i64: 5, 32>}, {transform_indices = @transform_4, window_bounds = array<i64: 8, 32>}]} {
    %c0 = arith.constant 0 : index
    %c0_0 = arith.constant 0 : index
    %0 = vector.load %arg1[%c0, %c0_0] : memref<8x512xbf16, #tpu.memory_space<vmem>>, vector<8x512xbf16>
    %c0_1 = arith.constant 0 : index
    %c0_2 = arith.constant 0 : index
    %1 = vector.load %arg3[%c0_1, %c0_2] : memref<512x32xbf16, #tpu.memory_space<vmem>>, vector<512x32xbf16>
    %cst = arith.constant dense<0.000000e+00> : vector<8x32xf32>
    %2 = tpu.matmul %0, %1, %cst {dimension_numbers = #tpu.dot_dimension_numbers<[1], [0], [0], [1], [0, 0, 1, 1], [], []>} : vector<8x512xbf16>, vector<512x32xbf16>, vector<8x32xf32> -> vector<8x32xf32>
    %c0_3 = arith.constant 0 : index
    %c0_4 = arith.constant 0 : index
    %3 = vector.load %arg4[%c0_3, %c0_4] : memref<5x32xf32, #tpu.memory_space<vmem>>, vector<1x32xf32>
    %4 = vector.broadcast %3 : vector<1x32xf32> to vector<8x32xf32>
    %5 = arith.addf %2, %4 : vector<8x32xf32>
    %c1 = arith.constant 1 : index
    %c0_5 = arith.constant 0 : index
    %6 = vector.load %arg4[%c1, %c0_5] : memref<5x32xf32, #tpu.memory_space<vmem>>, vector<1x32xf32>
    %c2 = arith.constant 2 : index
    %c0_6 = arith.constant 0 : index
    %7 = vector.load %arg4[%c2, %c0_6] : memref<5x32xf32, #tpu.memory_space<vmem>>, vector<1x32xf32>
    %cst_7 = arith.constant dense<0.000000e+00> : vector<8xf32>
    %8 = vector.multi_reduction <add>, %5, %cst_7 [1] : vector<8x32xf32> to vector<8xf32>
    %9 = vector.shape_cast %8 : vector<8xf32> to vector<8x1xf32>
    %cst_8 = arith.constant 3.200000e+01 : f32
    %10 = vector.broadcast %cst_8 : f32 to vector<8x1xf32>
    %11 = arith.divf %9, %10 : vector<8x1xf32>
    %12 = vector.broadcast %11 : vector<8x1xf32> to vector<8x32xf32>
    %13 = arith.subf %5, %12 : vector<8x32xf32>
    %14 = arith.mulf %13, %13 : vector<8x32xf32>
    %cst_9 = arith.constant dense<0.000000e+00> : vector<8xf32>
    %15 = vector.multi_reduction <add>, %14, %cst_9 [1] : vector<8x32xf32> to vector<8xf32>
    %16 = vector.shape_cast %15 : vector<8xf32> to vector<8x1xf32>
    %cst_10 = arith.constant 3.200000e+01 : f32
    %17 = vector.broadcast %cst_10 : f32 to vector<8x1xf32>
    %18 = arith.divf %16, %17 : vector<8x1xf32>
    %cst_11 = arith.constant 9.99999974E-6 : f32
    %19 = vector.broadcast %cst_11 : f32 to vector<8x1xf32>
    %20 = arith.addf %18, %19 : vector<8x1xf32>
    %21 = math.rsqrt %20 : vector<8x1xf32>
    %22 = vector.broadcast %21 : vector<8x1xf32> to vector<8x32xf32>
    %23 = arith.mulf %13, %22 : vector<8x32xf32>
    %24 = vector.broadcast %6 : vector<1x32xf32> to vector<8x32xf32>
    %25 = arith.mulf %23, %24 : vector<8x32xf32>
    %26 = vector.broadcast %7 : vector<1x32xf32> to vector<8x32xf32>
    %27 = arith.addf %25, %26 : vector<8x32xf32>
    %cst_12 = arith.constant 0.000000e+00 : f32
    %28 = vector.broadcast %cst_12 : f32 to vector<8x32xf32>
    %29 = arith.maximumf %27, %28 : vector<8x32xf32>
    %c0_13 = arith.constant 0 : index
    %c0_14 = arith.constant 0 : index
    %30 = vector.load %arg2[%c0_13, %c0_14] : memref<8x32xf32, #tpu.memory_space<vmem>>, vector<8x32xf32>
    %31 = arith.addf %30, %29 : vector<8x32xf32>
    %c3 = arith.constant 3 : index
    %c0_15 = arith.constant 0 : index
    %32 = vector.load %arg4[%c3, %c0_15] : memref<5x32xf32, #tpu.memory_space<vmem>>, vector<1x32xf32>
    %c4 = arith.constant 4 : index
    %c0_16 = arith.constant 0 : index
    %33 = vector.load %arg4[%c4, %c0_16] : memref<5x32xf32, #tpu.memory_space<vmem>>, vector<1x32xf32>
    %cst_17 = arith.constant dense<0.000000e+00> : vector<8xf32>
    %34 = vector.multi_reduction <add>, %31, %cst_17 [1] : vector<8x32xf32> to vector<8xf32>
    %35 = vector.shape_cast %34 : vector<8xf32> to vector<8x1xf32>
    %cst_18 = arith.constant 3.200000e+01 : f32
    %36 = vector.broadcast %cst_18 : f32 to vector<8x1xf32>
    %37 = arith.divf %35, %36 : vector<8x1xf32>
    %38 = vector.broadcast %37 : vector<8x1xf32> to vector<8x32xf32>
    %39 = arith.subf %31, %38 : vector<8x32xf32>
    %40 = arith.mulf %39, %39 : vector<8x32xf32>
    %cst_19 = arith.constant dense<0.000000e+00> : vector<8xf32>
    %41 = vector.multi_reduction <add>, %40, %cst_19 [1] : vector<8x32xf32> to vector<8xf32>
    %42 = vector.shape_cast %41 : vector<8xf32> to vector<8x1xf32>
    %cst_20 = arith.constant 3.200000e+01 : f32
    %43 = vector.broadcast %cst_20 : f32 to vector<8x1xf32>
    %44 = arith.divf %42, %43 : vector<8x1xf32>
    %cst_21 = arith.constant 9.99999974E-6 : f32
    %45 = vector.broadcast %cst_21 : f32 to vector<8x1xf32>
    %46 = arith.addf %44, %45 : vector<8x1xf32>
    %47 = math.rsqrt %46 : vector<8x1xf32>
    %48 = vector.broadcast %47 : vector<8x1xf32> to vector<8x32xf32>
    %49 = arith.mulf %39, %48 : vector<8x32xf32>
    %50 = vector.broadcast %32 : vector<1x32xf32> to vector<8x32xf32>
    %51 = arith.mulf %49, %50 : vector<8x32xf32>
    %52 = vector.broadcast %33 : vector<1x32xf32> to vector<8x32xf32>
    %53 = arith.addf %51, %52 : vector<8x32xf32>
    %c0_22 = arith.constant 0 : index
    %c0_23 = arith.constant 0 : index
    %54 = vector.load %arg5[%c0_22, %c0_23] : memref<8x32xf32, #tpu.memory_space<vmem>>, vector<8x32xf32>
    tpu.vector_store %arg5[%c0_22, %c0_23], %53 {strides = array<i32>} : memref<8x32xf32, #tpu.memory_space<vmem>>, vector<8x32xf32>,
    return
  }
  func.func @transform_0(%arg0: i32) -> (i32, i32) {
    %c0_i32 = arith.constant 0 : i32
    %c0_i32_0 = arith.constant 0 : i32
    return %arg0, %c0_i32 : i32, i32
  }
  func.func @transform_1(%arg0: i32) -> (i32, i32) {
    %c0_i32 = arith.constant 0 : i32
    %c0_i32_0 = arith.constant 0 : i32
    return %arg0, %c0_i32 : i32, i32
  }
  func.func @transform_2(%arg0: i32) -> (i32, i32) {
    %c0_i32 = arith.constant 0 : i32
    %c0_i32_0 = arith.constant 0 : i32
    %c0_i32_1 = arith.constant 0 : i32
    return %c0_i32, %c0_i32_0 : i32, i32
  }
  func.func @transform_3(%arg0: i32) -> (i32, i32) {
    %c0_i32 = arith.constant 0 : i32
    %c0_i32_0 = arith.constant 0 : i32
    %c0_i32_1 = arith.constant 0 : i32
    return %c0_i32, %c0_i32_0 : i32, i32
  }
  func.func @transform_4(%arg0: i32) -> (i32, i32) {
    %c0_i32 = arith.constant 0 : i32
    %c0_i32_0 = arith.constant 0 : i32
    return %arg0, %c0_i32 : i32, i32
  }
}

module attributes {stable_mosaic.version = 11 : i64} {
  func.func @_ffn_kernel(%arg0: i32, %arg1: memref<8x32xf32, #tpu.memory_space<vmem>>, %arg2: memref<32x64xbf16, #tpu.memory_space<vmem>>, %arg3: memref<1x64xf32, #tpu.memory_space<vmem>>, %arg4: memref<64x32xbf16, #tpu.memory_space<vmem>>, %arg5: memref<3x32xf32, #tpu.memory_space<vmem>>, %arg6: memref<8x32xf32, #tpu.memory_space<vmem>>) attributes {dimension_semantics = [#tpu.dimension_semantics<parallel>], iteration_bounds = array<i64: 2>, scalar_prefetch = 0 : i64, scratch_operands = 0 : i64, tpu.core_type = #tpu.core_type<tc>, window_params = [{transform_indices = @transform_0, window_bounds = array<i64: 8, 32>}, {pipeline_mode = #tpu.pipeline_mode<synchronous>, transform_indices = @transform_1, window_bounds = array<i64: 32, 64>}, {pipeline_mode = #tpu.pipeline_mode<synchronous>, transform_indices = @transform_2, window_bounds = array<i64: 1, 64>}, {pipeline_mode = #tpu.pipeline_mode<synchronous>, transform_indices = @transform_3, window_bounds = array<i64: 64, 32>}, {pipeline_mode = #tpu.pipeline_mode<synchronous>, transform_indices = @transform_4, window_bounds = array<i64: 3, 32>}, {transform_indices = @transform_5, window_bounds = array<i64: 8, 32>}]} {
    %c0 = arith.constant 0 : index
    %c0_0 = arith.constant 0 : index
    %0 = vector.load %arg1[%c0, %c0_0] : memref<8x32xf32, #tpu.memory_space<vmem>>, vector<8x32xf32>
    %1 = arith.truncf %0 : vector<8x32xf32> to vector<8x32xbf16>
    %c0_1 = arith.constant 0 : index
    %c0_2 = arith.constant 0 : index
    %2 = vector.load %arg2[%c0_1, %c0_2] : memref<32x64xbf16, #tpu.memory_space<vmem>>, vector<32x64xbf16>
    %cst = arith.constant dense<0.000000e+00> : vector<8x64xf32>
    %3 = tpu.matmul %1, %2, %cst {dimension_numbers = #tpu.dot_dimension_numbers<[1], [0], [0], [1], [0, 0, 1, 1], [], []>} : vector<8x32xbf16>, vector<32x64xbf16>, vector<8x64xf32> -> vector<8x64xf32>
    %c0_3 = arith.constant 0 : index
    %c0_4 = arith.constant 0 : index
    %4 = vector.load %arg3[%c0_3, %c0_4] : memref<1x64xf32, #tpu.memory_space<vmem>>, vector<1x64xf32>
    %5 = vector.broadcast %4 : vector<1x64xf32> to vector<8x64xf32>
    %6 = arith.addf %3, %5 : vector<8x64xf32>
    %cst_5 = arith.constant 0.000000e+00 : f32
    %7 = vector.broadcast %cst_5 : f32 to vector<8x64xf32>
    %8 = arith.maximumf %6, %7 : vector<8x64xf32>
    %9 = arith.truncf %8 : vector<8x64xf32> to vector<8x64xbf16>
    %c0_6 = arith.constant 0 : index
    %c0_7 = arith.constant 0 : index
    %10 = vector.load %arg4[%c0_6, %c0_7] : memref<64x32xbf16, #tpu.memory_space<vmem>>, vector<64x32xbf16>
    %cst_8 = arith.constant dense<0.000000e+00> : vector<8x32xf32>
    %11 = tpu.matmul %9, %10, %cst_8 {dimension_numbers = #tpu.dot_dimension_numbers<[1], [0], [0], [1], [0, 0, 1, 1], [], []>} : vector<8x64xbf16>, vector<64x32xbf16>, vector<8x32xf32> -> vector<8x32xf32>
    %c0_9 = arith.constant 0 : index
    %c0_10 = arith.constant 0 : index
    %12 = vector.load %arg5[%c0_9, %c0_10] : memref<3x32xf32, #tpu.memory_space<vmem>>, vector<1x32xf32>
    %13 = vector.broadcast %12 : vector<1x32xf32> to vector<8x32xf32>
    %14 = arith.addf %11, %13 : vector<8x32xf32>
    %15 = arith.addf %0, %14 : vector<8x32xf32>
    %c1 = arith.constant 1 : index
    %c0_11 = arith.constant 0 : index
    %16 = vector.load %arg5[%c1, %c0_11] : memref<3x32xf32, #tpu.memory_space<vmem>>, vector<1x32xf32>
    %c2 = arith.constant 2 : index
    %c0_12 = arith.constant 0 : index
    %17 = vector.load %arg5[%c2, %c0_12] : memref<3x32xf32, #tpu.memory_space<vmem>>, vector<1x32xf32>
    %cst_13 = arith.constant dense<0.000000e+00> : vector<8xf32>
    %18 = vector.multi_reduction <add>, %15, %cst_13 [1] : vector<8x32xf32> to vector<8xf32>
    %19 = vector.shape_cast %18 : vector<8xf32> to vector<8x1xf32>
    %cst_14 = arith.constant 3.200000e+01 : f32
    %20 = vector.broadcast %cst_14 : f32 to vector<8x1xf32>
    %21 = arith.divf %19, %20 : vector<8x1xf32>
    %22 = vector.broadcast %21 : vector<8x1xf32> to vector<8x32xf32>
    %23 = arith.subf %15, %22 : vector<8x32xf32>
    %24 = arith.mulf %23, %23 : vector<8x32xf32>
    %cst_15 = arith.constant dense<0.000000e+00> : vector<8xf32>
    %25 = vector.multi_reduction <add>, %24, %cst_15 [1] : vector<8x32xf32> to vector<8xf32>
    %26 = vector.shape_cast %25 : vector<8xf32> to vector<8x1xf32>
    %cst_16 = arith.constant 3.200000e+01 : f32
    %27 = vector.broadcast %cst_16 : f32 to vector<8x1xf32>
    %28 = arith.divf %26, %27 : vector<8x1xf32>
    %cst_17 = arith.constant 9.99999974E-6 : f32
    %29 = vector.broadcast %cst_17 : f32 to vector<8x1xf32>
    %30 = arith.addf %28, %29 : vector<8x1xf32>
    %31 = math.rsqrt %30 : vector<8x1xf32>
    %32 = vector.broadcast %31 : vector<8x1xf32> to vector<8x32xf32>
    %33 = arith.mulf %23, %32 : vector<8x32xf32>
    %34 = vector.broadcast %16 : vector<1x32xf32> to vector<8x32xf32>
    %35 = arith.mulf %33, %34 : vector<8x32xf32>
    %36 = vector.broadcast %17 : vector<1x32xf32> to vector<8x32xf32>
    %37 = arith.addf %35, %36 : vector<8x32xf32>
    %c0_18 = arith.constant 0 : index
    %c0_19 = arith.constant 0 : index
    %38 = vector.load %arg6[%c0_18, %c0_19] : memref<8x32xf32, #tpu.memory_space<vmem>>, vector<8x32xf32>
    tpu.vector_store %arg6[%c0_18, %c0_19], %37 {strides = array<i32>} : memref<8x32xf32, #tpu.memory_space<vmem>>, vector<8x32xf32>,
    return
  }
  func.func @transform_0(%arg0: i32) -> (i32, i32) {
    %c0_i32 = arith.constant 0 : i32
    %c0_i32_0 = arith.constant 0 : i32
    return %arg0, %c0_i32 : i32, i32
  }
  func.func @transform_1(%arg0: i32) -> (i32, i32) {
    %c0_i32 = arith.constant 0 : i32
    %c0_i32_0 = arith.constant 0 : i32
    %c0_i32_1 = arith.constant 0 : i32
    return %c0_i32, %c0_i32_0 : i32, i32
  }
  func.func @transform_2(%arg0: i32) -> (i32, i32) {
    %c0_i32 = arith.constant 0 : i32
    %c0_i32_0 = arith.constant 0 : i32
    %c0_i32_1 = arith.constant 0 : i32
    return %c0_i32, %c0_i32_0 : i32, i32
  }
  func.func @transform_3(%arg0: i32) -> (i32, i32) {
    %c0_i32 = arith.constant 0 : i32
    %c0_i32_0 = arith.constant 0 : i32
    %c0_i32_1 = arith.constant 0 : i32
    return %c0_i32, %c0_i32_0 : i32, i32
  }
  func.func @transform_4(%arg0: i32) -> (i32, i32) {
    %c0_i32 = arith.constant 0 : i32
    %c0_i32_0 = arith.constant 0 : i32
    %c0_i32_1 = arith.constant 0 : i32
    return %c0_i32, %c0_i32_0 : i32, i32
  }
  func.func @transform_5(%arg0: i32) -> (i32, i32) {
    %c0_i32 = arith.constant 0 : i32
    %c0_i32_0 = arith.constant 0 : i32
    return %arg0, %c0_i32 : i32, i32
  }
}

module attributes {stable_mosaic.version = 11 : i64} {
  func.func @_tower_kernel(%arg0: i32, %arg1: memref<8x32xf32, #tpu.memory_space<vmem>>, %arg2: memref<32x64xbf16, #tpu.memory_space<vmem>>, %arg3: memref<4x32xf32, #tpu.memory_space<vmem>>, %arg4: memref<64x128xbf16, #tpu.memory_space<vmem>>, %arg5: memref<1x128xf32, #tpu.memory_space<vmem>>, %arg6: memref<8x128xf32, #tpu.memory_space<vmem>>) attributes {dimension_semantics = [#tpu.dimension_semantics<parallel>], iteration_bounds = array<i64: 2>, scalar_prefetch = 0 : i64, scratch_operands = 0 : i64, tpu.core_type = #tpu.core_type<tc>, window_params = [{transform_indices = @transform_0, window_bounds = array<i64: 8, 32>}, {pipeline_mode = #tpu.pipeline_mode<synchronous>, transform_indices = @transform_1, window_bounds = array<i64: 32, 64>}, {pipeline_mode = #tpu.pipeline_mode<synchronous>, transform_indices = @transform_2, window_bounds = array<i64: 4, 32>}, {pipeline_mode = #tpu.pipeline_mode<synchronous>, transform_indices = @transform_3, window_bounds = array<i64: 64, 128>}, {pipeline_mode = #tpu.pipeline_mode<synchronous>, transform_indices = @transform_4, window_bounds = array<i64: 1, 128>}, {transform_indices = @transform_5, window_bounds = array<i64: 8, 128>}]} {
    %c0 = arith.constant 0 : index
    %c0_0 = arith.constant 0 : index
    %0 = vector.load %arg1[%c0, %c0_0] : memref<8x32xf32, #tpu.memory_space<vmem>>, vector<8x32xf32>
    %1 = arith.truncf %0 : vector<8x32xf32> to vector<8x32xbf16>
    %c0_1 = arith.constant 0 : index
    %c0_2 = arith.constant 0 : index
    %2 = vector.load %arg2[%c0_1, %c0_2] : memref<32x64xbf16, #tpu.memory_space<vmem>>, vector<32x64xbf16>
    %cst = arith.constant dense<0.000000e+00> : vector<8x64xf32>
    %3 = tpu.matmul %1, %2, %cst {dimension_numbers = #tpu.dot_dimension_numbers<[1], [0], [0], [1], [0, 0, 1, 1], [], []>} : vector<8x32xbf16>, vector<32x64xbf16>, vector<8x64xf32> -> vector<8x64xf32>
    %4 = vector.extract_strided_slice %3 {offsets = [0, 0], sizes = [8, 32], strides = [1, 1]} : vector<8x64xf32> to vector<8x32xf32>
    %c0_3 = arith.constant 0 : index
    %c0_4 = arith.constant 0 : index
    %5 = vector.load %arg3[%c0_3, %c0_4] : memref<4x32xf32, #tpu.memory_space<vmem>>, vector<1x32xf32>
    %c1 = arith.constant 1 : index
    %c0_5 = arith.constant 0 : index
    %6 = vector.load %arg3[%c1, %c0_5] : memref<4x32xf32, #tpu.memory_space<vmem>>, vector<1x32xf32>
    %cst_6 = arith.constant dense<0.000000e+00> : vector<8xf32>
    %7 = vector.multi_reduction <add>, %4, %cst_6 [1] : vector<8x32xf32> to vector<8xf32>
    %8 = vector.shape_cast %7 : vector<8xf32> to vector<8x1xf32>
    %cst_7 = arith.constant 3.200000e+01 : f32
    %9 = vector.broadcast %cst_7 : f32 to vector<8x1xf32>
    %10 = arith.divf %8, %9 : vector<8x1xf32>
    %11 = vector.broadcast %10 : vector<8x1xf32> to vector<8x32xf32>
    %12 = arith.subf %4, %11 : vector<8x32xf32>
    %13 = arith.mulf %12, %12 : vector<8x32xf32>
    %cst_8 = arith.constant dense<0.000000e+00> : vector<8xf32>
    %14 = vector.multi_reduction <add>, %13, %cst_8 [1] : vector<8x32xf32> to vector<8xf32>
    %15 = vector.shape_cast %14 : vector<8xf32> to vector<8x1xf32>
    %cst_9 = arith.constant 3.200000e+01 : f32
    %16 = vector.broadcast %cst_9 : f32 to vector<8x1xf32>
    %17 = arith.divf %15, %16 : vector<8x1xf32>
    %cst_10 = arith.constant 9.99999974E-6 : f32
    %18 = vector.broadcast %cst_10 : f32 to vector<8x1xf32>
    %19 = arith.addf %17, %18 : vector<8x1xf32>
    %20 = math.rsqrt %19 : vector<8x1xf32>
    %21 = vector.broadcast %20 : vector<8x1xf32> to vector<8x32xf32>
    %22 = arith.mulf %12, %21 : vector<8x32xf32>
    %23 = vector.broadcast %5 : vector<1x32xf32> to vector<8x32xf32>
    %24 = arith.mulf %22, %23 : vector<8x32xf32>
    %25 = vector.broadcast %6 : vector<1x32xf32> to vector<8x32xf32>
    %26 = arith.addf %24, %25 : vector<8x32xf32>
    %cst_11 = arith.constant 0.000000e+00 : f32
    %27 = vector.broadcast %cst_11 : f32 to vector<8x32xf32>
    %28 = arith.maximumf %26, %27 : vector<8x32xf32>
    %29 = vector.extract_strided_slice %3 {offsets = [0, 32], sizes = [8, 32], strides = [1, 1]} : vector<8x64xf32> to vector<8x32xf32>
    %c2 = arith.constant 2 : index
    %c0_12 = arith.constant 0 : index
    %30 = vector.load %arg3[%c2, %c0_12] : memref<4x32xf32, #tpu.memory_space<vmem>>, vector<1x32xf32>
    %c3 = arith.constant 3 : index
    %c0_13 = arith.constant 0 : index
    %31 = vector.load %arg3[%c3, %c0_13] : memref<4x32xf32, #tpu.memory_space<vmem>>, vector<1x32xf32>
    %cst_14 = arith.constant dense<0.000000e+00> : vector<8xf32>
    %32 = vector.multi_reduction <add>, %29, %cst_14 [1] : vector<8x32xf32> to vector<8xf32>
    %33 = vector.shape_cast %32 : vector<8xf32> to vector<8x1xf32>
    %cst_15 = arith.constant 3.200000e+01 : f32
    %34 = vector.broadcast %cst_15 : f32 to vector<8x1xf32>
    %35 = arith.divf %33, %34 : vector<8x1xf32>
    %36 = vector.broadcast %35 : vector<8x1xf32> to vector<8x32xf32>
    %37 = arith.subf %29, %36 : vector<8x32xf32>
    %38 = arith.mulf %37, %37 : vector<8x32xf32>
    %cst_16 = arith.constant dense<0.000000e+00> : vector<8xf32>
    %39 = vector.multi_reduction <add>, %38, %cst_16 [1] : vector<8x32xf32> to vector<8xf32>
    %40 = vector.shape_cast %39 : vector<8xf32> to vector<8x1xf32>
    %cst_17 = arith.constant 3.200000e+01 : f32
    %41 = vector.broadcast %cst_17 : f32 to vector<8x1xf32>
    %42 = arith.divf %40, %41 : vector<8x1xf32>
    %cst_18 = arith.constant 9.99999974E-6 : f32
    %43 = vector.broadcast %cst_18 : f32 to vector<8x1xf32>
    %44 = arith.addf %42, %43 : vector<8x1xf32>
    %45 = math.rsqrt %44 : vector<8x1xf32>
    %46 = vector.broadcast %45 : vector<8x1xf32> to vector<8x32xf32>
    %47 = arith.mulf %37, %46 : vector<8x32xf32>
    %48 = vector.broadcast %30 : vector<1x32xf32> to vector<8x32xf32>
    %49 = arith.mulf %47, %48 : vector<8x32xf32>
    %50 = vector.broadcast %31 : vector<1x32xf32> to vector<8x32xf32>
    %51 = arith.addf %49, %50 : vector<8x32xf32>
    %cst_19 = arith.constant 0.000000e+00 : f32
    %52 = vector.broadcast %cst_19 : f32 to vector<8x32xf32>
    %53 = arith.maximumf %51, %52 : vector<8x32xf32>
    %54 = tpu.concatenate %28, %53 in 1 : vector<8x32xf32>, vector<8x32xf32> -> vector<8x64xf32>
    %55 = arith.truncf %54 : vector<8x64xf32> to vector<8x64xbf16>
    %c0_20 = arith.constant 0 : index
    %c0_21 = arith.constant 0 : index
    %56 = vector.load %arg4[%c0_20, %c0_21] : memref<64x128xbf16, #tpu.memory_space<vmem>>, vector<64x128xbf16>
    %cst_22 = arith.constant dense<0.000000e+00> : vector<8x128xf32>
    %57 = tpu.matmul %55, %56, %cst_22 {dimension_numbers = #tpu.dot_dimension_numbers<[1], [0], [0], [1], [0, 0, 1, 1], [], []>} : vector<8x64xbf16>, vector<64x128xbf16>, vector<8x128xf32> -> vector<8x128xf32>
    %c0_23 = arith.constant 0 : index
    %c0_24 = arith.constant 0 : index
    %58 = vector.load %arg5[%c0_23, %c0_24] : memref<1x128xf32, #tpu.memory_space<vmem>>, vector<1x128xf32>
    %59 = vector.broadcast %58 : vector<1x128xf32> to vector<8x128xf32>
    %60 = arith.addf %57, %59 : vector<8x128xf32>
    %c0_25 = arith.constant 0 : index
    %c0_26 = arith.constant 0 : index
    %61 = vector.load %arg6[%c0_25, %c0_26] : memref<8x128xf32, #tpu.memory_space<vmem>>, vector<8x128xf32>
    tpu.vector_store %arg6[%c0_25, %c0_26], %60 {strides = array<i32>} : memref<8x128xf32, #tpu.memory_space<vmem>>, vector<8x128xf32>,
    return
  }
  func.func @transform_0(%arg0: i32) -> (i32, i32) {
    %c0_i32 = arith.constant 0 : i32
    %c0_i32_0 = arith.constant 0 : i32
    return %arg0, %c0_i32 : i32, i32
  }
  func.func @transform_1(%arg0: i32) -> (i32, i32) {
    %c0_i32 = arith.constant 0 : i32
    %c0_i32_0 = arith.constant 0 : i32
    %c0_i32_1 = arith.constant 0 : i32
    return %c0_i32, %c0_i32_0 : i32, i32
  }
  func.func @transform_2(%arg0: i32) -> (i32, i32) {
    %c0_i32 = arith.constant 0 : i32
    %c0_i32_0 = arith.constant 0 : i32
    %c0_i32_1 = arith.constant 0 : i32
    return %c0_i32, %c0_i32_0 : i32, i32
  }
  func.func @transform_3(%arg0: i32) -> (i32, i32) {
    %c0_i32 = arith.constant 0 : i32
    %c0_i32_0 = arith.constant 0 : i32
    %c0_i32_1 = arith.constant 0 : i32
    return %c0_i32, %c0_i32_0 : i32, i32
  }
  func.func @transform_4(%arg0: i32) -> (i32, i32) {
    %c0_i32 = arith.constant 0 : i32
    %c0_i32_0 = arith.constant 0 : i32
    %c0_i32_1 = arith.constant 0 : i32
    return %c0_i32, %c0_i32_0 : i32, i32
  }
  func.func @transform_5(%arg0: i32) -> (i32, i32) {
    %c0_i32 = arith.constant 0 : i32
    %c0_i32_0 = arith.constant 0 : i32
    return %arg0, %c0_i32 : i32, i32
  }
}

</mosaic_0001>

<llo_original>
// kernel: _lambda_.16
$region0: #{_lambda_.16}
  #allocation0 [shape = 'u32[]', space=smem, size = 0x4, offset = 0x4, fixed_abs, tag = 'smem constant byte address 0x4 - core index']
  #allocation1 [shape = 'u32[72,128]{1,0:T(1,128)}', space=vmem, size = 0x9000, scoped, tag = 'internal scratch']
  %s0 = inlined_call_operand.vmem [shape: bf16[512,32], index: 0, kind: input, shape index: {}]
  %s1 = inlined_call_operand.vmem [shape: bf16[32,32], index: 1, kind: input, shape index: {}]
  %s2 = inlined_call_operand.vmem [shape: f32[1,32], index: 2, kind: input, shape index: {}]
  %s3 = inlined_call_operand.vmem [shape: bf16[512,32], index: 3, kind: output, shape index: {}]
  %s4 = sld [smem:[#allocation0]]
  $region45: #{_lambda_.16} parent=0
    _
  %s6 = ssub.s32 1, %s4
  %s7 = scalar_select 0, %s6, %s4
  loop: start=0, step=1, limit=4
  $region2: #{_lambda_.16} parent=0 // loop_pre_header
    _
  $region3: #{_lambda_.16} parent=0 // loop_header
    %s9 = sphi 0, %s13
    %p10 = scmp.ge.s32.totalorder %s9, 4
    %s16 = sphi 0, %s28
    %s17 = sphi 0, %s24
    %s18 = sphi 0, %s16
    %s19 = sphi 0, %s17
    %s20 = sphi 0, %s18
    %s21 = sphi 0, %s19
    %s31 = sphi 0, %s33
    %s34 = sphi 0, %s31
    %s35 = sphi 0, %s34
    %s51 = sphi 0, %s35
    %s57 = sphi 0, %s59
    %s60 = sphi 0, %s57
    %s61 = sphi 0, %s60
    %s77 = sphi 0, %s61
    %s83 = sphi 0, %s85
    %s86 = sphi 0, %s83
    %s87 = sphi 0, %s86
    %s103 = sphi 0, %s87
    %s111 = sphi 0, %s113
    %s114 = sphi 0, %s111
    %s115 = sphi 0, %s114
    %s131 = sphi 0, %s115
  $region4: #{_lambda_.16} parent=0 // loop_header_branch
    %12 = sbr.rel (%p10) target = $region8
  $region5: #{_lambda_.16} parent=0 // loop_body
    %s14 = ssub.s32 %s9, 1
    %s15 = ssub.s32 %s9, 2
    %s22 = sadd.s32 1, %s17
    %p23 = scmp.ge.s32.totalorder %s22, 1
    %s24 = scalar_select %p23, 0, %s22
    %s25 = sadd.s32 1, %s16
    %s26 = scalar_select %p23, %s25, %s16
    %p27 = scmp.ge.s32.totalorder %s26, 2
    %s28 = scalar_select %p27, 0, %s26
    %s29 = ssub.s32 %s16, %s28
    %p30 = scmp.eq.s32.totalorder %s29, 0
    %s32 = sadd.s32 %s31, 1
    %s33 = scalar_select %p30, %s31, %s32
    %p36 = pneg %p30
    %p37 = scmp.eq.s32.totalorder %s9, 1
    %p38 = por %p36, %p37
    %p39 = scmp.ne.s32.totalorder %s31, %s34
    %p40 = scmp.eq.s32.totalorder %s9, 0
    %p41 = por %p39, %p40
    %p42 = scmp.ne.s32.totalorder %s31, %s34
    %p43 = scmp.eq.s32.totalorder %s14, 1
    %p44 = por %p42, %p43
    %p45 = scmp.ne.s32.totalorder %s34, %s35
    %p46 = scmp.eq.s32.totalorder %s14, 0
    %p47 = por %p45, %p46
    %p48 = scmp.ne.s32.totalorder %s34, %s35
    %p49 = scmp.eq.s32.totalorder %s15, 1
    %p50 = por %p48, %p49
    %p52 = scmp.ne.s32.totalorder %s35, %s51
    %p53 = scmp.eq.s32.totalorder %s15, 0
    %p54 = por %p52, %p53
    %s55 = ssub.s32 %s17, %s24
    %p56 = scmp.eq.s32.totalorder %s55, 0
    %s58 = sadd.s32 %s57, 1
    %s59 = scalar_select %p56, %s57, %s58
    %p62 = pneg %p56
    %p63 = scmp.eq.s32.totalorder %s9, 1
    %p64 = por %p62, %p63
    %p65 = scmp.ne.s32.totalorder %s57, %s60
    %p66 = scmp.eq.s32.totalorder %s9, 0
    %p67 = por %p65, %p66
    %p68 = scmp.ne.s32.totalorder %s57, %s60
    %p69 = scmp.eq.s32.totalorder %s14, 1
    %p70 = por %p68, %p69
    %p71 = scmp.ne.s32.totalorder %s60, %s61
    %p72 = scmp.eq.s32.totalorder %s14, 0
    %p73 = por %p71, %p72
    %p74 = scmp.ne.s32.totalorder %s60, %s61
    %p75 = scmp.eq.s32.totalorder %s15, 1
    %p76 = por %p74, %p75
    %p78 = scmp.ne.s32.totalorder %s61, %s77
    %p79 = scmp.eq.s32.totalorder %s15, 0
    %p80 = por %p78, %p79
    %s81 = ssub.s32 %s17, %s24
    %p82 = scmp.eq.s32.totalorder %s81, 0
    %s84 = sadd.s32 %s83, 1
    %s85 = scalar_select %p82, %s83, %s84
    %p88 = pneg %p82
    %p89 = scmp.eq.s32.totalorder %s9, 1
    %p90 = por %p88, %p89
    %p91 = scmp.ne.s32.totalorder %s83, %s86
    %p92 = scmp.eq.s32.totalorder %s9, 0
    %p93 = por %p91, %p92
    %p94 = scmp.ne.s32.totalorder %s83, %s86
    %p95 = scmp.eq.s32.totalorder %s14, 1
    %p96 = por %p94, %p95
    %p97 = scmp.ne.s32.totalorder %s86, %s87
    %p98 = scmp.eq.s32.totalorder %s14, 0
    %p99 = por %p97, %p98
    %p100 = scmp.ne.s32.totalorder %s86, %s87
    %p101 = scmp.eq.s32.totalorder %s15, 1
    %p102 = por %p100, %p101
    %p104 = scmp.ne.s32.totalorder %s87, %s103
    %p105 = scmp.eq.s32.totalorder %s15, 0
    %p106 = por %p104, %p105
    %s107 = ssub.s32 %s16, %s28
    %s108 = ssub.s32 %s17, %s24
    %s109 = sor.u32 %s107, %s108
    %p110 = scmp.eq.s32.totalorder %s109, 0
    %s112 = sadd.s32 %s111, 1
    %s113 = scalar_select %p110, %s111, %s112
    %p116 = pneg %p110
    %p117 = scmp.eq.s32.totalorder %s9, 1
    %p118 = por %p116, %p117
    %p119 = scmp.ne.s32.totalorder %s111, %s114
    %p120 = scmp.eq.s32.totalorder %s9, 0
    %p121 = por %p119, %p120
    %p122 = scmp.ne.s32.totalorder %s111, %s114
    %p123 = scmp.eq.s32.totalorder %s14, 1
    %p124 = por %p122, %p123
    %p125 = scmp.ne.s32.totalorder %s114, %s115
    %p126 = scmp.eq.s32.totalorder %s14, 0
    %p127 = por %p125, %p126
    %p128 = scmp.ne.s32.totalorder %s114, %s115
    %p129 = scmp.eq.s32.totalorder %s15, 1
    %p130 = por %p128, %p129
    %p132 = scmp.ne.s32.totalorder %s115, %s131
    %p133 = scmp.eq.s32.totalorder %s15, 0
    %p134 = por %p132, %p133
    %p135 = scmp.le.s32.totalorder 1, %s9
    %p136 = scmp.lt.s32.totalorder %s9, 3
    %p137 = pnand %p135, %p136
    %p138 = pneg %p137
    // Predicated region
    $region9: #{_lambda_.16} parent=5 // pred_check
      _
    $region10: #{_lambda_.16} parent=5 // pred_check_branch
      %140 = sbr.rel (%p137) target = $region12
    $region11: #{_lambda_.16} parent=5 // pred_region
      %s141 = ssub.s32 %s9, 1
      // Predicated region
      $region13: #{_lambda_.16} parent=11 // pred_check
        %p142 = pneg %p73
      $region14: #{_lambda_.16} parent=11 // pred_check_branch
        %144 = sbr.rel (%p142) target = $region16
      $region15: #{_lambda_.16} parent=11 // pred_region
        %p145 = scmp.lt.s32.totalorder %s19, 0
        %s146 = scalar_select %p145, %s19, 0
        %s147 = smul.addr %s146, 4
        %s148 = scalar_lea.vmem %s1, %s147
      $region16: #{_lambda_.16} parent=11 // pred_fallthru
        _
      // Predicated region
      $region17: #{_lambda_.16} parent=11 // pred_check
        %p149 = pneg %p99
      $region18: #{_lambda_.16} parent=11 // pred_check_branch
        %151 = sbr.rel (%p149) target = $region20
      $region19: #{_lambda_.16} parent=11 // pred_region
        %p152 = scmp.lt.s32.totalorder %s19, 0
        %s153 = scalar_select %p152, %s19, 0
        %s154 = scalar_lea.vmem %s2, %s153
      $region20: #{_lambda_.16} parent=11 // pred_fallthru
        _
    $region12: #{_lambda_.16} parent=5 // pred_fallthru
      _
    %p155 = scmp.lt.s32.totalorder %s9, 2
    // Predicated region
    $region21: #{_lambda_.16} parent=5 // pred_check
      %p156 = pneg %p155
    $region22: #{_lambda_.16} parent=5 // pred_check_branch
      %158 = sbr.rel (%p156) target = $region24
    $region23: #{_lambda_.16} parent=5 // pred_region
      // Predicated region
      $region25: #{_lambda_.16} parent=23 // pred_check
        %p159 = pneg %p41
      $region26: #{_lambda_.16} parent=23 // pred_check_branch
        %161 = sbr.rel (%p159) target = $region28
      $region27: #{_lambda_.16} parent=23 // pred_region
        %s162 = smul.u32 32, %s16
        %p163 = scmp.lt.s32.totalorder %s162, 63
        %s164 = scalar_select %p163, %s162, 63
        %s165 = smul.addr %s164, 4
        %s166 = scalar_lea.vmem %s0, %s165
        %s167 = smul.u32 32, %s16
      $region28: #{_lambda_.16} parent=23 // pred_fallthru
        _
    $region24: #{_lambda_.16} parent=5 // pred_fallthru
      _
    %p168 = scmp.le.s32.totalorder 1, %s9
    %p169 = scmp.lt.s32.totalorder %s9, 3
    %p170 = pnand %p168, %p169
    %p171 = pneg %p170
    // Predicated region
    $region29: #{_lambda_.16} parent=5 // pred_check
      _
    $region30: #{_lambda_.16} parent=5 // pred_check_branch
      %173 = sbr.rel (%p170) target = $region32
    $region31: #{_lambda_.16} parent=5 // pred_region
      %s174 = ssub.s32 %s9, 1
      %s175 = smul.u32 32, %s18
      %p176 = scmp.lt.s32.totalorder %s175, 63
      %s177 = scalar_select %p176, %s175, 63
      %s178 = smul.addr %s177, 4
      %s179 = scalar_lea.vmem %s0, %s178
      %p180 = pneg %p47
      %p181 = pneg %p44
      %p182 = scmp.lt.s32.totalorder %s19, 0
      %s183 = scalar_select %p182, %s19, 0
      %s184 = smul.addr %s183, 4
      %s185 = scalar_lea.vmem %s1, %s184
      %p186 = pneg %p73
      %p187 = pneg %p70
      %p188 = scmp.lt.s32.totalorder %s19, 0
      %s189 = scalar_select %p188, %s19, 0
      %s190 = scalar_lea.vmem %s2, %s189
      %p191 = pneg %p99
      %p192 = pneg %p96
      %p193 = pneg %p127
      %p194 = pneg %p124
      %s195 = smul.u32 32, %s18
      %p196 = scmp.lt.s32.totalorder %s195, 63
      %s197 = scalar_select %p196, %s195, 63
      %p198 = scmp.lt.s32.totalorder %s19, 0
      %s199 = scalar_select %p198, %s19, 0
      %s200 = sadd.s32 %s199, %s197
      %s201 = smul.addr %s200, 4
      %s202 = scalar_lea.vmem %s3, %s201
      %s203 = smul.u32 32, %s18
      %p204 = scmp.lt.s32.totalorder %s203, 63
      %s205 = scalar_select %p204, %s203, 63
      %s206 = smul.addr %s205, 4
      %s207 = scalar_lea.vmem %s0, %s206
      %s208 = smul.u32 32, %s18
      %p209 = scmp.lt.s32.totalorder %s19, 0
      %s210 = scalar_select %p209, %s19, 0
      %s211 = smul.addr %s210, 4
      %s212 = scalar_lea.vmem %s1, %s211
      %p213 = scmp.lt.s32.totalorder %s19, 0
      %s214 = scalar_select %p213, %s19, 0
      %s215 = scalar_lea.vmem %s2, %s214
      %s216 = smul.u32 32, %s18
      %p217 = scmp.lt.s32.totalorder %s216, 63
      %s218 = scalar_select %p217, %s216, 63
      %p219 = scmp.lt.s32.totalorder %s19, 0
      %s220 = scalar_select %p219, %s19, 0
      %s221 = sadd.s32 %s220, %s218
      %s222 = smul.addr %s221, 4
      %s223 = scalar_lea.vmem %s3, %s222
      %s224 = smul.u32 32, %s18
      %v226 = vld [vmem:[%s207] sm:$0xf]
      %v227 = vld [vmem:[%s207 + $0x4] sm:$0xf]
      %v228 = vld [vmem:[%s207 + $0x8] sm:$0xf]
      %v229 = vld [vmem:[%s207 + $0xc] sm:$0xf]
      %v230 = vld [vmem:[%s207 + $0x10] sm:$0xf]
      %v231 = vld [vmem:[%s207 + $0x14] sm:$0xf]
      %v232 = vld [vmem:[%s207 + $0x18] sm:$0xf]
      %v233 = vld [vmem:[%s207 + $0x1c] sm:$0xf]
      %v234 = vld [vmem:[%s207 + $0x20] sm:$0xf]
      %v235 = vld [vmem:[%s207 + $0x24] sm:$0xf]
      %v236 = vld [vmem:[%s207 + $0x28] sm:$0xf]
      %v237 = vld [vmem:[%s207 + $0x2c] sm:$0xf]
      %v238 = vld [vmem:[%s207 + $0x30] sm:$0xf]
      %v239 = vld [vmem:[%s207 + $0x34] sm:$0xf]
      %v240 = vld [vmem:[%s207 + $0x38] sm:$0xf]
      %v241 = vld [vmem:[%s207 + $0x3c] sm:$0xf]
      %v242 = vld [vmem:[%s207 + $0x40] sm:$0xf]
      %v243 = vld [vmem:[%s207 + $0x44] sm:$0xf]
      %v244 = vld [vmem:[%s207 + $0x48] sm:$0xf]
      %v245 = vld [vmem:[%s207 + $0x4c] sm:$0xf]
      %v246 = vld [vmem:[%s207 + $0x50] sm:$0xf]
      %v247 = vld [vmem:[%s207 + $0x54] sm:$0xf]
      %v248 = vld [vmem:[%s207 + $0x58] sm:$0xf]
      %v249 = vld [vmem:[%s207 + $0x5c] sm:$0xf]
      %v250 = vld [vmem:[%s207 + $0x60] sm:$0xf]
      %v251 = vld [vmem:[%s207 + $0x64] sm:$0xf]
      %v252 = vld [vmem:[%s207 + $0x68] sm:$0xf]
      %v253 = vld [vmem:[%s207 + $0x6c] sm:$0xf]
      %v254 = vld [vmem:[%s207 + $0x70] sm:$0xf]
      %v255 = vld [vmem:[%s207 + $0x74] sm:$0xf]
      %v256 = vld [vmem:[%s207 + $0x78] sm:$0xf]
      %v257 = vld [vmem:[%s207 + $0x7c] sm:$0xf]
      %v258 = vld [vmem:[%s212] sm:$0xf]
      %v259 = vld [vmem:[%s212 + $0x4] sm:$0xf]
      %v260 = vld [vmem:[%s212 + $0x8] sm:$0xf]
      %v261 = vld [vmem:[%s212 + $0xc] sm:$0xf]
      %v262 = vld [vmem:[%s215] sm:$0x1]
      %v264 = vperm.slane %v262, 0
      %v298 = vunpack.c.l.b16 %v226
      %v299 = vunpack.c.l.b16 %v227
      %v300 = vunpack.c.l.b16 %v228
      %v301 = vunpack.c.l.b16 %v229
      %v302 = vunpack.c.l.b16 %v230
      %v303 = vunpack.c.l.b16 %v231
      %v304 = vunpack.c.l.b16 %v232
      %v305 = vunpack.c.l.b16 %v233
      %v306 = vunpack.c.l.b16 %v234
      %v307 = vunpack.c.l.b16 %v235
      %v308 = vunpack.c.l.b16 %v236
      %v309 = vunpack.c.l.b16 %v237
      %v310 = vunpack.c.l.b16 %v238
      %v311 = vunpack.c.l.b16 %v239
      %v312 = vunpack.c.l.b16 %v240
      %v313 = vunpack.c.l.b16 %v241
      %v314 = vunpack.c.l.b16 %v242
      %v315 = vunpack.c.l.b16 %v243
      %v316 = vunpack.c.l.b16 %v244
      %v317 = vunpack.c.l.b16 %v245
      %v318 = vunpack.c.l.b16 %v246
      %v319 = vunpack.c.l.b16 %v247
      %v320 = vunpack.c.l.b16 %v248
      %v321 = vunpack.c.l.b16 %v249
      %v322 = vunpack.c.l.b16 %v250
      %v323 = vunpack.c.l.b16 %v251
      %v324 = vunpack.c.l.b16 %v252
      %v325 = vunpack.c.l.b16 %v253
      %v326 = vunpack.c.l.b16 %v254
      %v327 = vunpack.c.l.b16 %v255
      %v328 = vunpack.c.l.b16 %v256
      %v329 = vunpack.c.l.b16 %v257
      %v330 = vpack.c.b16 %v299, %v298
      %v331 = vpack.c.b16 %v301, %v300
      %v332 = vpack.c.b16 %v303, %v302
      %v333 = vpack.c.b16 %v305, %v304
      %v334 = vpack.c.b16 %v307, %v306
      %v335 = vpack.c.b16 %v309, %v308
      %v336 = vpack.c.b16 %v311, %v310
      %v337 = vpack.c.b16 %v313, %v312
      %v338 = vpack.c.b16 %v315, %v314
      %v339 = vpack.c.b16 %v317, %v316
      %v340 = vpack.c.b16 %v319, %v318
      %v341 = vpack.c.b16 %v321, %v320
      %v342 = vpack.c.b16 %v323, %v322
      %v343 = vpack.c.b16 %v325, %v324
      %v344 = vpack.c.b16 %v327, %v326
      %v345 = vpack.c.b16 %v329, %v328
      %v350 = vunpack.c.l.b16 %v258
      %v351 = vunpack.c.l.b16 %v259
      %v352 = vunpack.c.l.b16 %v260
      %v353 = vunpack.c.l.b16 %v261
      %v354 = vpack.c.b16 %v351, %v350
      %v355 = vpack.c.b16 %v353, %v352
      %vm358 = vcmask 261120
      %v360 = vsel %vm358, %v330, 0
      %v363 = vsel %vm358, %v331, 0
      %v366 = vsel %vm358, %v332, 0
      %v369 = vsel %vm358, %v333, 0
      %v372 = vsel %vm358, %v334, 0
      %v375 = vsel %vm358, %v335, 0
      %v378 = vsel %vm358, %v336, 0
      %v381 = vsel %vm358, %v337, 0
      %v384 = vsel %vm358, %v338, 0
      %v387 = vsel %vm358, %v339, 0
      %v390 = vsel %vm358, %v340, 0
      %v393 = vsel %vm358, %v341, 0
      %v396 = vsel %vm358, %v342, 0
      %v399 = vsel %vm358, %v343, 0
      %v402 = vsel %vm358, %v344, 0
      %v405 = vsel %vm358, %v345, 0
      %407 = vmatpush.bf16.msra.mxu0 0
      %408 = vmatpush.bf16.msra.mxu0 0
      %409 = vmatpush.bf16.msra.mxu0 0
      %410 = vmatpush.bf16.msra.mxu0 0
      %411 = vmatpush.bf16.msra.mxu0 0
      %412 = vmatpush.bf16.msra.mxu0 0
      %413 = vmatpush.bf16.msra.mxu0 %v355
      %414 = vmatpush.bf16.msra.mxu0 %v354
      %415 = vmatmul.bf16.gmra.mxu0 %v360
      %v416 = vpop.f32.mrf.mxu0
      %v417 = vadd.f32 %v264, %v416
      %v418 = vpop.f32.mrf.mxu0
      %v419 = vadd.f32 %v264, %v418
      %420 = vmatmul.bf16.gmra.mxu0 %v363
      %v421 = vpop.f32.mrf.mxu0
      %v422 = vadd.f32 %v264, %v421
      %v423 = vpop.f32.mrf.mxu0
      %v424 = vadd.f32 %v264, %v423
      %425 = vmatmul.bf16.gmra.mxu0 %v366
      %v426 = vpop.f32.mrf.mxu0
      %v427 = vadd.f32 %v264, %v426
      %v428 = vpop.f32.mrf.mxu0
      %v429 = vadd.f32 %v264, %v428
      %430 = vmatmul.bf16.gmra.mxu0 %v369
      %v431 = vpop.f32.mrf.mxu0
      %v432 = vadd.f32 %v264, %v431
      %v433 = vpop.f32.mrf.mxu0
      %v434 = vadd.f32 %v264, %v433
      %435 = vmatmul.bf16.gmra.mxu0 %v372
      %v436 = vpop.f32.mrf.mxu0
      %v437 = vadd.f32 %v264, %v436
      %v438 = vpop.f32.mrf.mxu0
      %v439 = vadd.f32 %v264, %v438
      %440 = vmatmul.bf16.gmra.mxu0 %v375
      %v441 = vpop.f32.mrf.mxu0
      %v442 = vadd.f32 %v264, %v441
      %v443 = vpop.f32.mrf.mxu0
      %v444 = vadd.f32 %v264, %v443
      %445 = vmatmul.bf16.gmra.mxu0 %v378
      %v446 = vpop.f32.mrf.mxu0
      %v447 = vadd.f32 %v264, %v446
      %v448 = vpop.f32.mrf.mxu0
      %v449 = vadd.f32 %v264, %v448
      %450 = vmatmul.bf16.gmra.mxu0 %v381
      %v451 = vpop.f32.mrf.mxu0
      %v452 = vadd.f32 %v264, %v451
      %v453 = vpop.f32.mrf.mxu0
      %v454 = vadd.f32 %v264, %v453
      %455 = vmatmul.bf16.gmra.mxu0 %v384
      %v456 = vpop.f32.mrf.mxu0
      %v457 = vadd.f32 %v264, %v456
      %v458 = vpop.f32.mrf.mxu0
      %v459 = vadd.f32 %v264, %v458
      %460 = vmatmul.bf16.gmra.mxu0 %v387
      %v461 = vpop.f32.mrf.mxu0
      %v462 = vadd.f32 %v264, %v461
      %v463 = vpop.f32.mrf.mxu0
      %v464 = vadd.f32 %v264, %v463
      %465 = vmatmul.bf16.gmra.mxu0 %v390
      %v466 = vpop.f32.mrf.mxu0
      %v467 = vadd.f32 %v264, %v466
      %v468 = vpop.f32.mrf.mxu0
      %v469 = vadd.f32 %v264, %v468
      %470 = vmatmul.bf16.gmra.mxu0 %v393
      %v471 = vpop.f32.mrf.mxu0
      %v472 = vadd.f32 %v264, %v471
      %v473 = vpop.f32.mrf.mxu0
      %v474 = vadd.f32 %v264, %v473
      %475 = vmatmul.bf16.gmra.mxu0 %v396
      %v476 = vpop.f32.mrf.mxu0
      %v477 = vadd.f32 %v264, %v476
      %v478 = vpop.f32.mrf.mxu0
      %v479 = vadd.f32 %v264, %v478
      %480 = vmatmul.bf16.gmra.mxu0 %v399
      %v481 = vpop.f32.mrf.mxu0
      %v482 = vadd.f32 %v264, %v481
      %v483 = vpop.f32.mrf.mxu0
      %v484 = vadd.f32 %v264, %v483
      %485 = vmatmul.bf16.gmra.mxu0 %v402
      %v486 = vpop.f32.mrf.mxu0
      %v487 = vadd.f32 %v264, %v486
      %v488 = vpop.f32.mrf.mxu0
      %v489 = vadd.f32 %v264, %v488
      %490 = vmatmul.bf16.gmra.mxu0 %v405
      %v491 = vpop.f32.mrf.mxu0
      %v492 = vadd.f32 %v264, %v491
      %v493 = vpop.f32.mrf.mxu0
      %v494 = vadd.f32 %v264, %v493
      %495 = vdwg.mxu0
      %v496 = vmax.f32 %v417, 0.0
      %v497 = vmax.f32 %v419, 0.0
      %v498 = vmax.f32 %v422, 0.0
      %v499 = vmax.f32 %v424, 0.0
      %v500 = vmax.f32 %v427, 0.0
      %v501 = vmax.f32 %v429, 0.0
      %v502 = vmax.f32 %v432, 0.0
      %v503 = vmax.f32 %v434, 0.0
      %v504 = vmax.f32 %v437, 0.0
      %v505 = vmax.f32 %v439, 0.0
      %v506 = vmax.f32 %v442, 0.0
      %v507 = vmax.f32 %v444, 0.0
      %v508 = vmax.f32 %v447, 0.0
      %v509 = vmax.f32 %v449, 0.0
      %v510 = vmax.f32 %v452, 0.0
      %v511 = vmax.f32 %v454, 0.0
      %v512 = vmax.f32 %v457, 0.0
      %v513 = vmax.f32 %v459, 0.0
      %v514 = vmax.f32 %v462, 0.0
      %v515 = vmax.f32 %v464, 0.0
      %v516 = vmax.f32 %v467, 0.0
      %v517 = vmax.f32 %v469, 0.0
      %v518 = vmax.f32 %v472, 0.0
      %v519 = vmax.f32 %v474, 0.0
      %v520 = vmax.f32 %v477, 0.0
      %v521 = vmax.f32 %v479, 0.0
      %v522 = vmax.f32 %v482, 0.0
      %v523 = vmax.f32 %v484, 0.0
      %v524 = vmax.f32 %v487, 0.0
      %v525 = vmax.f32 %v489, 0.0
      %v526 = vmax.f32 %v492, 0.0
      %v527 = vmax.f32 %v494, 0.0
      %v528 = vpack.c.bf16 %v496, %v496
      %v529 = vpack.c.bf16 %v497, %v497
      %v530 = vpack.c.bf16 %v498, %v498
      %v531 = vpack.c.bf16 %v499, %v499
      %v532 = vpack.c.bf16 %v500, %v500
      %v533 = vpack.c.bf16 %v501, %v501
      %v534 = vpack.c.bf16 %v502, %v502
      %v535 = vpack.c.bf16 %v503, %v503
      %v536 = vpack.c.bf16 %v504, %v504
      %v537 = vpack.c.bf16 %v505, %v505
      %v538 = vpack.c.bf16 %v506, %v506
      %v539 = vpack.c.bf16 %v507, %v507
      %v540 = vpack.c.bf16 %v508, %v508
      %v541 = vpack.c.bf16 %v509, %v509
      %v542 = vpack.c.bf16 %v510, %v510
      %v543 = vpack.c.bf16 %v511, %v511
      %v544 = vpack.c.bf16 %v512, %v512
      %v545 = vpack.c.bf16 %v513, %v513
      %v546 = vpack.c.bf16 %v514, %v514
      %v547 = vpack.c.bf16 %v515, %v515
      %v548 = vpack.c.bf16 %v516, %v516
      %v549 = vpack.c.bf16 %v517, %v517
      %v550 = vpack.c.bf16 %v518, %v518
      %v551 = vpack.c.bf16 %v519, %v519
      %v552 = vpack.c.bf16 %v520, %v520
      %v553 = vpack.c.bf16 %v521, %v521
      %v554 = vpack.c.bf16 %v522, %v522
      %v555 = vpack.c.bf16 %v523, %v523
      %v556 = vpack.c.bf16 %v524, %v524
      %v557 = vpack.c.bf16 %v525, %v525
      %v558 = vpack.c.bf16 %v526, %v526
      %v559 = vpack.c.bf16 %v527, %v527
      %vm560 = vcmask 257024
      %561 = vst.msk [vmem:[%s223] sm:$0xf] %vm560, %v528
      %562 = vst.msk [vmem:[%s223 + $0x4] sm:$0xf] %vm560, %v529
      %563 = vst.msk [vmem:[%s223 + $0x8] sm:$0xf] %vm560, %v530
      %564 = vst.msk [vmem:[%s223 + $0xc] sm:$0xf] %vm560, %v531
      %565 = vst.msk [vmem:[%s223 + $0x10] sm:$0xf] %vm560, %v532
      %566 = vst.msk [vmem:[%s223 + $0x14] sm:$0xf] %vm560, %v533
      %567 = vst.msk [vmem:[%s223 + $0x18] sm:$0xf] %vm560, %v534
      %568 = vst.msk [vmem:[%s223 + $0x1c] sm:$0xf] %vm560, %v535
      %569 = vst.msk [vmem:[%s223 + $0x20] sm:$0xf] %vm560, %v536
      %570 = vst.msk [vmem:[%s223 + $0x24] sm:$0xf] %vm560, %v537
      %571 = vst.msk [vmem:[%s223 + $0x28] sm:$0xf] %vm560, %v538
      %572 = vst.msk [vmem:[%s223 + $0x2c] sm:$0xf] %vm560, %v539
      %573 = vst.msk [vmem:[%s223 + $0x30] sm:$0xf] %vm560, %v540
      %574 = vst.msk [vmem:[%s223 + $0x34] sm:$0xf] %vm560, %v541
      %575 = vst.msk [vmem:[%s223 + $0x38] sm:$0xf] %vm560, %v542
      %576 = vst.msk [vmem:[%s223 + $0x3c] sm:$0xf] %vm560, %v543
      %577 = vst.msk [vmem:[%s223 + $0x40] sm:$0xf] %vm560, %v544
      %578 = vst.msk [vmem:[%s223 + $0x44] sm:$0xf] %vm560, %v545
      %579 = vst.msk [vmem:[%s223 + $0x48] sm:$0xf] %vm560, %v546
      %580 = vst.msk [vmem:[%s223 + $0x4c] sm:$0xf] %vm560, %v547
      %581 = vst.msk [vmem:[%s223 + $0x50] sm:$0xf] %vm560, %v548
      %582 = vst.msk [vmem:[%s223 + $0x54] sm:$0xf] %vm560, %v549
      %583 = vst.msk [vmem:[%s223 + $0x58] sm:$0xf] %vm560, %v550
      %584 = vst.msk [vmem:[%s223 + $0x5c] sm:$0xf] %vm560, %v551
      %585 = vst.msk [vmem:[%s223 + $0x60] sm:$0xf] %vm560, %v552
      %586 = vst.msk [vmem:[%s223 + $0x64] sm:$0xf] %vm560, %v553
      %587 = vst.msk [vmem:[%s223 + $0x68] sm:$0xf] %vm560, %v554
      %588 = vst.msk [vmem:[%s223 + $0x6c] sm:$0xf] %vm560, %v555
      %589 = vst.msk [vmem:[%s223 + $0x70] sm:$0xf] %vm560, %v556
      %590 = vst.msk [vmem:[%s223 + $0x74] sm:$0xf] %vm560, %v557
      %591 = vst.msk [vmem:[%s223 + $0x78] sm:$0xf] %vm560, %v558
      %592 = vst.msk [vmem:[%s223 + $0x7c] sm:$0xf] %vm560, %v559
      %s593 = smul.u32 32, %s18
      %p594 = scmp.lt.s32.totalorder %s593, 63
      %s595 = scalar_select %p594, %s593, 63
      %p596 = scmp.lt.s32.totalorder %s19, 0
      %s597 = scalar_select %p596, %s19, 0
      %s598 = sadd.s32 %s597, %s595
      %s599 = smul.addr %s598, 4
      %s600 = scalar_lea.vmem %s3, %s599
      // Predicated region
      $region33: #{_lambda_.16} parent=31 // pred_check
        %p601 = pneg %p124
      $region34: #{_lambda_.16} parent=31 // pred_check_branch
        %603 = sbr.rel (%p601) target = $region36
      $region35: #{_lambda_.16} parent=31 // pred_region
        %s604 = smul.u32 32, %s18
      $region36: #{_lambda_.16} parent=31 // pred_fallthru
        _
    $region32: #{_lambda_.16} parent=5 // pred_fallthru
      _
    %p605 = scmp.le.s32.totalorder 2, %s9
    // Predicated region
    $region37: #{_lambda_.16} parent=5 // pred_check
      %p606 = pneg %p605
    $region38: #{_lambda_.16} parent=5 // pred_check_branch
      %608 = sbr.rel (%p606) target = $region40
    $region39: #{_lambda_.16} parent=5 // pred_region
      %s609 = ssub.s32 %s9, 2
      // Predicated region
      $region41: #{_lambda_.16} parent=39 // pred_check
        %p610 = pneg %p130
      $region42: #{_lambda_.16} parent=39 // pred_check_branch
        %612 = sbr.rel (%p610) target = $region44
      $region43: #{_lambda_.16} parent=39 // pred_region
        %s613 = smul.u32 32, %s20
        %p614 = scmp.lt.s32.totalorder %s613, 63
        %s615 = scalar_select %p614, %s613, 63
        %p616 = scmp.lt.s32.totalorder %s21, 0
        %s617 = scalar_select %p616, %s21, 0
        %s618 = sadd.s32 %s617, %s615
        %s619 = smul.addr %s618, 4
        %s620 = scalar_lea.vmem %s3, %s619
      $region44: #{_lambda_.16} parent=39 // pred_fallthru
        _
    $region40: #{_lambda_.16} parent=5 // pred_fallthru
      _
  $region6: #{_lambda_.16} parent=0 // loop_footer
    %s13 = sadd.s32 1, %s9
  $region7: #{_lambda_.16} parent=0 // loop_footer_branch
    %8 = sbr.rel target = $region3
  $region8: #{_lambda_.16} parent=0 // loop_exit
    _

// kernel: _lambda_.17
$region0: #{_lambda_.17}
  #allocation0 [shape = 'u32[]', space=smem, size = 0x4, offset = 0x4, fixed_abs, tag = 'smem constant byte address 0x4 - core index']
  #allocation1 [shape = 'u32[72,128]{1,0:T(1,128)}', space=vmem, size = 0x9000, scoped, tag = 'internal scratch']
  %s0 = inlined_call_operand.vmem [shape: bf16[128,288], index: 0, kind: input, shape index: {}]
  %s1 = inlined_call_operand.vmem [shape: bf16[288,32], index: 1, kind: input, shape index: {}]
  %s2 = inlined_call_operand.vmem [shape: f32[1,32], index: 2, kind: input, shape index: {}]
  %s3 = inlined_call_operand.vmem [shape: bf16[128,32], index: 3, kind: output, shape index: {}]
  %s4 = sld [smem:[#allocation0]]
  $region45: #{_lambda_.17} parent=0
    _
  %s6 = ssub.s32 1, %s4
  %s7 = scalar_select 0, %s6, %s4
  loop: start=0, step=1, limit=4
  $region2: #{_lambda_.17} parent=0 // loop_pre_header
    _
  $region3: #{_lambda_.17} parent=0 // loop_header
    %s9 = sphi 0, %s13
    %p10 = scmp.ge.s32.totalorder %s9, 4
    %s16 = sphi 0, %s28
    %s17 = sphi 0, %s24
    %s18 = sphi 0, %s16
    %s19 = sphi 0, %s17
    %s20 = sphi 0, %s18
    %s21 = sphi 0, %s19
    %s31 = sphi 0, %s33
    %s34 = sphi 0, %s31
    %s35 = sphi 0, %s34
    %s51 = sphi 0, %s35
    %s57 = sphi 0, %s59
    %s60 = sphi 0, %s57
    %s61 = sphi 0, %s60
    %s77 = sphi 0, %s61
    %s83 = sphi 0, %s85
    %s86 = sphi 0, %s83
    %s87 = sphi 0, %s86
    %s103 = sphi 0, %s87
    %s111 = sphi 0, %s113
    %s114 = sphi 0, %s111
    %s115 = sphi 0, %s114
    %s131 = sphi 0, %s115
  $region4: #{_lambda_.17} parent=0 // loop_header_branch
    %12 = sbr.rel (%p10) target = $region8
  $region5: #{_lambda_.17} parent=0 // loop_body
    %s14 = ssub.s32 %s9, 1
    %s15 = ssub.s32 %s9, 2
    %s22 = sadd.s32 1, %s17
    %p23 = scmp.ge.s32.totalorder %s22, 1
    %s24 = scalar_select %p23, 0, %s22
    %s25 = sadd.s32 1, %s16
    %s26 = scalar_select %p23, %s25, %s16
    %p27 = scmp.ge.s32.totalorder %s26, 2
    %s28 = scalar_select %p27, 0, %s26
    %s29 = ssub.s32 %s16, %s28
    %p30 = scmp.eq.s32.totalorder %s29, 0
    %s32 = sadd.s32 %s31, 1
    %s33 = scalar_select %p30, %s31, %s32
    %p36 = pneg %p30
    %p37 = scmp.eq.s32.totalorder %s9, 1
    %p38 = por %p36, %p37
    %p39 = scmp.ne.s32.totalorder %s31, %s34
    %p40 = scmp.eq.s32.totalorder %s9, 0
    %p41 = por %p39, %p40
    %p42 = scmp.ne.s32.totalorder %s31, %s34
    %p43 = scmp.eq.s32.totalorder %s14, 1
    %p44 = por %p42, %p43
    %p45 = scmp.ne.s32.totalorder %s34, %s35
    %p46 = scmp.eq.s32.totalorder %s14, 0
    %p47 = por %p45, %p46
    %p48 = scmp.ne.s32.totalorder %s34, %s35
    %p49 = scmp.eq.s32.totalorder %s15, 1
    %p50 = por %p48, %p49
    %p52 = scmp.ne.s32.totalorder %s35, %s51
    %p53 = scmp.eq.s32.totalorder %s15, 0
    %p54 = por %p52, %p53
    %s55 = ssub.s32 %s17, %s24
    %p56 = scmp.eq.s32.totalorder %s55, 0
    %s58 = sadd.s32 %s57, 1
    %s59 = scalar_select %p56, %s57, %s58
    %p62 = pneg %p56
    %p63 = scmp.eq.s32.totalorder %s9, 1
    %p64 = por %p62, %p63
    %p65 = scmp.ne.s32.totalorder %s57, %s60
    %p66 = scmp.eq.s32.totalorder %s9, 0
    %p67 = por %p65, %p66
    %p68 = scmp.ne.s32.totalorder %s57, %s60
    %p69 = scmp.eq.s32.totalorder %s14, 1
    %p70 = por %p68, %p69
    %p71 = scmp.ne.s32.totalorder %s60, %s61
    %p72 = scmp.eq.s32.totalorder %s14, 0
    %p73 = por %p71, %p72
    %p74 = scmp.ne.s32.totalorder %s60, %s61
    %p75 = scmp.eq.s32.totalorder %s15, 1
    %p76 = por %p74, %p75
    %p78 = scmp.ne.s32.totalorder %s61, %s77
    %p79 = scmp.eq.s32.totalorder %s15, 0
    %p80 = por %p78, %p79
    %s81 = ssub.s32 %s17, %s24
    %p82 = scmp.eq.s32.totalorder %s81, 0
    %s84 = sadd.s32 %s83, 1
    %s85 = scalar_select %p82, %s83, %s84
    %p88 = pneg %p82
    %p89 = scmp.eq.s32.totalorder %s9, 1
    %p90 = por %p88, %p89
    %p91 = scmp.ne.s32.totalorder %s83, %s86
    %p92 = scmp.eq.s32.totalorder %s9, 0
    %p93 = por %p91, %p92
    %p94 = scmp.ne.s32.totalorder %s83, %s86
    %p95 = scmp.eq.s32.totalorder %s14, 1
    %p96 = por %p94, %p95
    %p97 = scmp.ne.s32.totalorder %s86, %s87
    %p98 = scmp.eq.s32.totalorder %s14, 0
    %p99 = por %p97, %p98
    %p100 = scmp.ne.s32.totalorder %s86, %s87
    %p101 = scmp.eq.s32.totalorder %s15, 1
    %p102 = por %p100, %p101
    %p104 = scmp.ne.s32.totalorder %s87, %s103
    %p105 = scmp.eq.s32.totalorder %s15, 0
    %p106 = por %p104, %p105
    %s107 = ssub.s32 %s16, %s28
    %s108 = ssub.s32 %s17, %s24
    %s109 = sor.u32 %s107, %s108
    %p110 = scmp.eq.s32.totalorder %s109, 0
    %s112 = sadd.s32 %s111, 1
    %s113 = scalar_select %p110, %s111, %s112
    %p116 = pneg %p110
    %p117 = scmp.eq.s32.totalorder %s9, 1
    %p118 = por %p116, %p117
    %p119 = scmp.ne.s32.totalorder %s111, %s114
    %p120 = scmp.eq.s32.totalorder %s9, 0
    %p121 = por %p119, %p120
    %p122 = scmp.ne.s32.totalorder %s111, %s114
    %p123 = scmp.eq.s32.totalorder %s14, 1
    %p124 = por %p122, %p123
    %p125 = scmp.ne.s32.totalorder %s114, %s115
    %p126 = scmp.eq.s32.totalorder %s14, 0
    %p127 = por %p125, %p126
    %p128 = scmp.ne.s32.totalorder %s114, %s115
    %p129 = scmp.eq.s32.totalorder %s15, 1
    %p130 = por %p128, %p129
    %p132 = scmp.ne.s32.totalorder %s115, %s131
    %p133 = scmp.eq.s32.totalorder %s15, 0
    %p134 = por %p132, %p133
    %p135 = scmp.le.s32.totalorder 1, %s9
    %p136 = scmp.lt.s32.totalorder %s9, 3
    %p137 = pnand %p135, %p136
    %p138 = pneg %p137
    // Predicated region
    $region9: #{_lambda_.17} parent=5 // pred_check
      _
    $region10: #{_lambda_.17} parent=5 // pred_check_branch
      %140 = sbr.rel (%p137) target = $region12
    $region11: #{_lambda_.17} parent=5 // pred_region
      %s141 = ssub.s32 %s9, 1
      // Predicated region
      $region13: #{_lambda_.17} parent=11 // pred_check
        %p142 = pneg %p73
      $region14: #{_lambda_.17} parent=11 // pred_check_branch
        %144 = sbr.rel (%p142) target = $region16
      $region15: #{_lambda_.17} parent=11 // pred_region
        %p145 = scmp.lt.s32.totalorder %s19, 0
        %s146 = scalar_select %p145, %s19, 0
        %s147 = smul.addr %s146, 4
        %s148 = scalar_lea.vmem %s1, %s147
      $region16: #{_lambda_.17} parent=11 // pred_fallthru
        _
      // Predicated region
      $region17: #{_lambda_.17} parent=11 // pred_check
        %p149 = pneg %p99
      $region18: #{_lambda_.17} parent=11 // pred_check_branch
        %151 = sbr.rel (%p149) target = $region20
      $region19: #{_lambda_.17} parent=11 // pred_region
        %p152 = scmp.lt.s32.totalorder %s19, 0
        %s153 = scalar_select %p152, %s19, 0
        %s154 = scalar_lea.vmem %s2, %s153
      $region20: #{_lambda_.17} parent=11 // pred_fallthru
        _
    $region12: #{_lambda_.17} parent=5 // pred_fallthru
      _
    %p155 = scmp.lt.s32.totalorder %s9, 2
    // Predicated region
    $region21: #{_lambda_.17} parent=5 // pred_check
      %p156 = pneg %p155
    $region22: #{_lambda_.17} parent=5 // pred_check_branch
      %158 = sbr.rel (%p156) target = $region24
    $region23: #{_lambda_.17} parent=5 // pred_region
      // Predicated region
      $region25: #{_lambda_.17} parent=23 // pred_check
        %p159 = pneg %p41
      $region26: #{_lambda_.17} parent=23 // pred_check_branch
        %161 = sbr.rel (%p159) target = $region28
      $region27: #{_lambda_.17} parent=23 // pred_region
        %s162 = smul.u32 8, %s16
        %p163 = scmp.lt.s32.totalorder %s162, 15
        %s164 = scalar_select %p163, %s162, 15
        %s165 = smul.addr %s164, 3
        %s166 = smul.addr %s165, 4
        %s167 = scalar_lea.vmem %s0, %s166
        %s168 = smul.u32 8, %s16
      $region28: #{_lambda_.17} parent=23 // pred_fallthru
        _
    $region24: #{_lambda_.17} parent=5 // pred_fallthru
      _
    %p169 = scmp.le.s32.totalorder 1, %s9
    %p170 = scmp.lt.s32.totalorder %s9, 3
    %p171 = pnand %p169, %p170
    %p172 = pneg %p171
    // Predicated region
    $region29: #{_lambda_.17} parent=5 // pred_check
      _
    $region30: #{_lambda_.17} parent=5 // pred_check_branch
      %174 = sbr.rel (%p171) target = $region32
    $region31: #{_lambda_.17} parent=5 // pred_region
      %s175 = ssub.s32 %s9, 1
      %s176 = smul.u32 8, %s18
      %p177 = scmp.lt.s32.totalorder %s176, 15
      %s178 = scalar_select %p177, %s176, 15
      %s179 = smul.addr %s178, 3
      %s180 = smul.addr %s179, 4
      %s181 = scalar_lea.vmem %s0, %s180
      %p182 = pneg %p47
      %p183 = pneg %p44
      %p184 = scmp.lt.s32.totalorder %s19, 0
      %s185 = scalar_select %p184, %s19, 0
      %s186 = smul.addr %s185, 4
      %s187 = scalar_lea.vmem %s1, %s186
      %p188 = pneg %p73
      %p189 = pneg %p70
      %p190 = scmp.lt.s32.totalorder %s19, 0
      %s191 = scalar_select %p190, %s19, 0
      %s192 = scalar_lea.vmem %s2, %s191
      %p193 = pneg %p99
      %p194 = pneg %p96
      %p195 = pneg %p127
      %p196 = pneg %p124
      %s197 = smul.u32 8, %s18
      %p198 = scmp.lt.s32.totalorder %s197, 15
      %s199 = scalar_select %p198, %s197, 15
      %p200 = scmp.lt.s32.totalorder %s19, 0
      %s201 = scalar_select %p200, %s19, 0
      %s202 = sadd.s32 %s201, %s199
      %s203 = smul.addr %s202, 4
      %s204 = scalar_lea.vmem %s3, %s203
      %s205 = smul.u32 8, %s18
      %p206 = scmp.lt.s32.totalorder %s205, 15
      %s207 = scalar_select %p206, %s205, 15
      %s208 = smul.addr %s207, 3
      %s209 = smul.addr %s208, 4
      %s210 = scalar_lea.vmem %s0, %s209
      %s211 = smul.u32 8, %s18
      %p212 = scmp.lt.s32.totalorder %s19, 0
      %s213 = scalar_select %p212, %s19, 0
      %s214 = smul.addr %s213, 4
      %s215 = scalar_lea.vmem %s1, %s214
      %p216 = scmp.lt.s32.totalorder %s19, 0
      %s217 = scalar_select %p216, %s19, 0
      %s218 = scalar_lea.vmem %s2, %s217
      %s219 = smul.u32 8, %s18
      %p220 = scmp.lt.s32.totalorder %s219, 15
      %s221 = scalar_select %p220, %s219, 15
      %p222 = scmp.lt.s32.totalorder %s19, 0
      %s223 = scalar_select %p222, %s19, 0
      %s224 = sadd.s32 %s223, %s221
      %s225 = smul.addr %s224, 4
      %s226 = scalar_lea.vmem %s3, %s225
      %s227 = smul.u32 8, %s18
      %v229 = vld [vmem:[%s210] sm:$0xff]
      %v230 = vld [vmem:[%s210 + $0x8] sm:$0xf]
      %v231 = vld [vmem:[%s210 + $0xc] sm:$0xff]
      %v232 = vld [vmem:[%s210 + $0x14] sm:$0xf]
      %v233 = vld [vmem:[%s210 + $0x18] sm:$0xff]
      %v234 = vld [vmem:[%s210 + $0x20] sm:$0xf]
      %v235 = vld [vmem:[%s210 + $0x24] sm:$0xff]
      %v236 = vld [vmem:[%s210 + $0x2c] sm:$0xf]
      %v237 = vld [vmem:[%s210 + $0x30] sm:$0xff]
      %v238 = vld [vmem:[%s210 + $0x38] sm:$0xf]
      %v239 = vld [vmem:[%s210 + $0x3c] sm:$0xff]
      %v240 = vld [vmem:[%s210 + $0x44] sm:$0xf]
      %v241 = vld [vmem:[%s210 + $0x48] sm:$0xff]
      %v242 = vld [vmem:[%s210 + $0x50] sm:$0xf]
      %v243 = vld [vmem:[%s210 + $0x54] sm:$0xff]
      %v244 = vld [vmem:[%s210 + $0x5c] sm:$0xf]
      %v245 = vld [vmem:[%s215] sm:$0xf]
      %v246 = vld [vmem:[%s215 + $0x4] sm:$0xf]
      %v247 = vld [vmem:[%s215 + $0x8] sm:$0xf]
      %v248 = vld [vmem:[%s215 + $0xc] sm:$0xf]
      %v249 = vld [vmem:[%s215 + $0x10] sm:$0xf]
      %v250 = vld [vmem:[%s215 + $0x14] sm:$0xf]
      %v251 = vld [vmem:[%s215 + $0x18] sm:$0xf]
      %v252 = vld [vmem:[%s215 + $0x1c] sm:$0xf]
      %v253 = vld [vmem:[%s215 + $0x20] sm:$0xf]
      %v254 = vld [vmem:[%s215 + $0x24] sm:$0xf]
      %v255 = vld [vmem:[%s215 + $0x28] sm:$0xf]
      %v256 = vld [vmem:[%s215 + $0x2c] sm:$0xf]
      %v257 = vld [vmem:[%s215 + $0x30] sm:$0xf]
      %v258 = vld [vmem:[%s215 + $0x34] sm:$0xf]
      %v259 = vld [vmem:[%s215 + $0x38] sm:$0xf]
      %v260 = vld [vmem:[%s215 + $0x3c] sm:$0xf]
      %v261 = vld [vmem:[%s215 + $0x40] sm:$0xf]
      %v262 = vld [vmem:[%s215 + $0x44] sm:$0xf]
      %v263 = vld [vmem:[%s215 + $0x48] sm:$0xf]
      %v264 = vld [vmem:[%s215 + $0x4c] sm:$0xf]
      %v265 = vld [vmem:[%s215 + $0x50] sm:$0xf]
      %v266 = vld [vmem:[%s215 + $0x54] sm:$0xf]
      %v267 = vld [vmem:[%s215 + $0x58] sm:$0xf]
      %v268 = vld [vmem:[%s215 + $0x5c] sm:$0xf]
      %v269 = vld [vmem:[%s215 + $0x60] sm:$0xf]
      %v270 = vld [vmem:[%s215 + $0x64] sm:$0xf]
      %v271 = vld [vmem:[%s215 + $0x68] sm:$0xf]
      %v272 = vld [vmem:[%s215 + $0x6c] sm:$0xf]
      %v273 = vld [vmem:[%s215 + $0x70] sm:$0xf]
      %v274 = vld [vmem:[%s215 + $0x74] sm:$0xf]
      %v275 = vld [vmem:[%s215 + $0x78] sm:$0xf]
      %v276 = vld [vmem:[%s215 + $0x7c] sm:$0xf]
      %v277 = vld [vmem:[%s215 + $0x80] sm:$0xf]
      %v278 = vld [vmem:[%s215 + $0x84] sm:$0xf]
      %v279 = vld [vmem:[%s215 + $0x88] sm:$0xf]
      %v280 = vld [vmem:[%s215 + $0x8c] sm:$0xf]
      %v281 = vld [vmem:[%s218] sm:$0x1]
      %v283 = vperm.slane %v281, 0
      %v301 = vunpack.c.l.b16 %v229
      %v302 = vunpack.c.h.b16 %v229
      %v303 = vunpack.c.l.b16 %v230
      %v304 = vunpack.c.l.b16 %v231
      %v305 = vunpack.c.h.b16 %v231
      %v306 = vunpack.c.l.b16 %v232
      %v307 = vunpack.c.l.b16 %v233
      %v308 = vunpack.c.h.b16 %v233
      %v309 = vunpack.c.l.b16 %v234
      %v310 = vunpack.c.l.b16 %v235
      %v311 = vunpack.c.h.b16 %v235
      %v312 = vunpack.c.l.b16 %v236
      %v313 = vunpack.c.l.b16 %v237
      %v314 = vunpack.c.h.b16 %v237
      %v315 = vunpack.c.l.b16 %v238
      %v316 = vunpack.c.l.b16 %v239
      %v317 = vunpack.c.h.b16 %v239
      %v318 = vunpack.c.l.b16 %v240
      %v319 = vunpack.c.l.b16 %v241
      %v320 = vunpack.c.h.b16 %v241
      %v321 = vunpack.c.l.b16 %v242
      %v322 = vunpack.c.l.b16 %v243
      %v323 = vunpack.c.h.b16 %v243
      %v324 = vunpack.c.l.b16 %v244
      %v325 = vpack.c.b16 %v304, %v301
      %v326 = vpack.c.b16 %v305, %v302
      %v327 = vpack.c.b16 %v306, %v303
      %v328 = vpack.c.b16 %v310, %v307
      %v329 = vpack.c.b16 %v311, %v308
      %v330 = vpack.c.b16 %v312, %v309
      %v331 = vpack.c.b16 %v316, %v313
      %v332 = vpack.c.b16 %v317, %v314
      %v333 = vpack.c.b16 %v318, %v315
      %v334 = vpack.c.b16 %v322, %v319
      %v335 = vpack.c.b16 %v323, %v320
      %v336 = vpack.c.b16 %v324, %v321
      %v381 = vunpack.c.l.b16 %v245
      %v382 = vunpack.c.l.b16 %v246
      %v383 = vunpack.c.l.b16 %v247
      %v384 = vunpack.c.l.b16 %v248
      %v385 = vunpack.c.l.b16 %v249
      %v386 = vunpack.c.l.b16 %v250
      %v387 = vunpack.c.l.b16 %v251
      %v388 = vunpack.c.l.b16 %v252
      %v389 = vunpack.c.l.b16 %v253
      %v390 = vunpack.c.l.b16 %v254
      %v391 = vunpack.c.l.b16 %v255
      %v392 = vunpack.c.l.b16 %v256
      %v393 = vunpack.c.l.b16 %v257
      %v394 = vunpack.c.l.b16 %v258
      %v395 = vunpack.c.l.b16 %v259
      %v396 = vunpack.c.l.b16 %v260
      %v397 = vunpack.c.l.b16 %v261
      %v398 = vunpack.c.l.b16 %v262
      %v399 = vunpack.c.l.b16 %v263
      %v400 = vunpack.c.l.b16 %v264
      %v401 = vunpack.c.l.b16 %v265
      %v402 = vunpack.c.l.b16 %v266
      %v403 = vunpack.c.l.b16 %v267
      %v404 = vunpack.c.l.b16 %v268
      %v405 = vunpack.c.l.b16 %v269
      %v406 = vunpack.c.l.b16 %v270
      %v407 = vunpack.c.l.b16 %v271
      %v408 = vunpack.c.l.b16 %v272
      %v409 = vunpack.c.l.b16 %v273
      %v410 = vunpack.c.l.b16 %v274
      %v411 = vunpack.c.l.b16 %v275
      %v412 = vunpack.c.l.b16 %v276
      %v413 = vunpack.c.l.b16 %v277
      %v414 = vunpack.c.l.b16 %v278
      %v415 = vunpack.c.l.b16 %v279
      %v416 = vunpack.c.l.b16 %v280
      %v417 = vpack.c.b16 %v382, %v381
      %v418 = vpack.c.b16 %v384, %v383
      %v419 = vpack.c.b16 %v386, %v385
      %v420 = vpack.c.b16 %v388, %v387
      %v421 = vpack.c.b16 %v390, %v389
      %v422 = vpack.c.b16 %v392, %v391
      %v423 = vpack.c.b16 %v394, %v393
      %v424 = vpack.c.b16 %v396, %v395
      %v425 = vpack.c.b16 %v398, %v397
      %v426 = vpack.c.b16 %v400, %v399
      %v427 = vpack.c.b16 %v402, %v401
      %v428 = vpack.c.b16 %v404, %v403
      %v429 = vpack.c.b16 %v406, %v405
      %v430 = vpack.c.b16 %v408, %v407
      %v431 = vpack.c.b16 %v410, %v409
      %v432 = vpack.c.b16 %v412, %v411
      %v433 = vpack.c.b16 %v414, %v413
      %v434 = vpack.c.b16 %v416, %v415
      %vm453 = vcmask 261120
      %v455 = vsel %vm453, %v327, 0
      %v458 = vsel %vm453, %v330, 0
      %v461 = vsel %vm453, %v333, 0
      %v464 = vsel %vm453, %v336, 0
      %466 = vmatpush.bf16.msra.mxu0 %v424
      %467 = vmatpush.bf16.msra.mxu0 %v423
      %468 = vmatpush.bf16.msra.mxu0 %v422
      %469 = vmatpush.bf16.msra.mxu0 %v421
      %470 = vmatpush.bf16.msra.mxu0 %v420
      %471 = vmatpush.bf16.msra.mxu0 %v419
      %472 = vmatpush.bf16.msra.mxu0 %v418
      %473 = vmatpush.bf16.msra.mxu0 %v417
      %474 = vmatmul.bf16.gmra.mxu0 %v325
      %v475 = vpop.f32.mrf.mxu0
      %v476 = vadd.f32 %v283, %v475
      %v477 = vpop.f32.mrf.mxu0
      %v478 = vadd.f32 %v283, %v477
      %479 = vmatmul.bf16.gmra.mxu0 %v328
      %v480 = vpop.f32.mrf.mxu0
      %v481 = vadd.f32 %v283, %v480
      %v482 = vpop.f32.mrf.mxu0
      %v483 = vadd.f32 %v283, %v482
      %484 = vmatmul.bf16.gmra.mxu0 %v331
      %v485 = vpop.f32.mrf.mxu0
      %v486 = vadd.f32 %v283, %v485
      %v487 = vpop.f32.mrf.mxu0
      %v488 = vadd.f32 %v283, %v487
      %489 = vmatmul.bf16.gmra.mxu0 %v334
      %v490 = vpop.f32.mrf.mxu0
      %v491 = vadd.f32 %v283, %v490
      %v492 = vpop.f32.mrf.mxu0
      %v493 = vadd.f32 %v283, %v492
      %494 = vdwg.mxu0
      %495 = vmatpush.bf16.msra.mxu0 %v432
      %496 = vmatpush.bf16.msra.mxu0 %v431
      %497 = vmatpush.bf16.msra.mxu0 %v430
      %498 = vmatpush.bf16.msra.mxu0 %v429
      %499 = vmatpush.bf16.msra.mxu0 %v428
      %500 = vmatpush.bf16.msra.mxu0 %v427
      %501 = vmatpush.bf16.msra.mxu0 %v426
      %502 = vmatpush.bf16.msra.mxu0 %v425
      %503 = vmatmul.bf16.gmra.mxu0 %v326
      %v504 = vpop.f32.mrf.mxu0
      %v505 = vadd.f32 %v476, %v504
      %v506 = vpop.f32.mrf.mxu0
      %v507 = vadd.f32 %v478, %v506
      %508 = vmatmul.bf16.gmra.mxu0 %v329
      %v509 = vpop.f32.mrf.mxu0
      %v510 = vadd.f32 %v481, %v509
      %v511 = vpop.f32.mrf.mxu0
      %v512 = vadd.f32 %v483, %v511
      %513 = vmatmul.bf16.gmra.mxu0 %v332
      %v514 = vpop.f32.mrf.mxu0
      %v515 = vadd.f32 %v486, %v514
      %v516 = vpop.f32.mrf.mxu0
      %v517 = vadd.f32 %v488, %v516
      %518 = vmatmul.bf16.gmra.mxu0 %v335
      %v519 = vpop.f32.mrf.mxu0
      %v520 = vadd.f32 %v491, %v519
      %v521 = vpop.f32.mrf.mxu0
      %v522 = vadd.f32 %v493, %v521
      %523 = vdwg.mxu0
      %524 = vmatpush.bf16.msra.mxu0 0
      %525 = vmatpush.bf16.msra.mxu0 0
      %526 = vmatpush.bf16.msra.mxu0 0
      %527 = vmatpush.bf16.msra.mxu0 0
      %528 = vmatpush.bf16.msra.mxu0 0
      %529 = vmatpush.bf16.msra.mxu0 0
      %530 = vmatpush.bf16.msra.mxu0 %v434
      %531 = vmatpush.bf16.msra.mxu0 %v433
      %532 = vmatmul.bf16.gmra.mxu0 %v455
      %v533 = vpop.f32.mrf.mxu0
      %v534 = vadd.f32 %v505, %v533
      %v535 = vpop.f32.mrf.mxu0
      %v536 = vadd.f32 %v507, %v535
      %537 = vmatmul.bf16.gmra.mxu0 %v458
      %v538 = vpop.f32.mrf.mxu0
      %v539 = vadd.f32 %v510, %v538
      %v540 = vpop.f32.mrf.mxu0
      %v541 = vadd.f32 %v512, %v540
      %542 = vmatmul.bf16.gmra.mxu0 %v461
      %v543 = vpop.f32.mrf.mxu0
      %v544 = vadd.f32 %v515, %v543
      %v545 = vpop.f32.mrf.mxu0
      %v546 = vadd.f32 %v517, %v545
      %547 = vmatmul.bf16.gmra.mxu0 %v464
      %v548 = vpop.f32.mrf.mxu0
      %v549 = vadd.f32 %v520, %v548
      %v550 = vpop.f32.mrf.mxu0
      %v551 = vadd.f32 %v522, %v550
      %552 = vdwg.mxu0
      %v553 = vmax.f32 %v534, 0.0
      %v554 = vmax.f32 %v536, 0.0
      %v555 = vmax.f32 %v539, 0.0
      %v556 = vmax.f32 %v541, 0.0
      %v557 = vmax.f32 %v544, 0.0
      %v558 = vmax.f32 %v546, 0.0
      %v559 = vmax.f32 %v549, 0.0
      %v560 = vmax.f32 %v551, 0.0
      %v561 = vpack.c.bf16 %v553, %v553
      %v562 = vpack.c.bf16 %v554, %v554
      %v563 = vpack.c.bf16 %v555, %v555
      %v564 = vpack.c.bf16 %v556, %v556
      %v565 = vpack.c.bf16 %v557, %v557
      %v566 = vpack.c.bf16 %v558, %v558
      %v567 = vpack.c.bf16 %v559, %v559
      %v568 = vpack.c.bf16 %v560, %v560
      %vm569 = vcmask 257024
      %570 = vst.msk [vmem:[%s226] sm:$0xf] %vm569, %v561
      %571 = vst.msk [vmem:[%s226 + $0x4] sm:$0xf] %vm569, %v562
      %572 = vst.msk [vmem:[%s226 + $0x8] sm:$0xf] %vm569, %v563
      %573 = vst.msk [vmem:[%s226 + $0xc] sm:$0xf] %vm569, %v564
      %574 = vst.msk [vmem:[%s226 + $0x10] sm:$0xf] %vm569, %v565
      %575 = vst.msk [vmem:[%s226 + $0x14] sm:$0xf] %vm569, %v566
      %576 = vst.msk [vmem:[%s226 + $0x18] sm:$0xf] %vm569, %v567
      %577 = vst.msk [vmem:[%s226 + $0x1c] sm:$0xf] %vm569, %v568
      %s578 = smul.u32 8, %s18
      %p579 = scmp.lt.s32.totalorder %s578, 15
      %s580 = scalar_select %p579, %s578, 15
      %p581 = scmp.lt.s32.totalorder %s19, 0
      %s582 = scalar_select %p581, %s19, 0
      %s583 = sadd.s32 %s582, %s580
      %s584 = smul.addr %s583, 4
      %s585 = scalar_lea.vmem %s3, %s584
      // Predicated region
      $region33: #{_lambda_.17} parent=31 // pred_check
        %p586 = pneg %p124
      $region34: #{_lambda_.17} parent=31 // pred_check_branch
        %588 = sbr.rel (%p586) target = $region36
      $region35: #{_lambda_.17} parent=31 // pred_region
        %s589 = smul.u32 8, %s18
      $region36: #{_lambda_.17} parent=31 // pred_fallthru
        _
    $region32: #{_lambda_.17} parent=5 // pred_fallthru
      _
    %p590 = scmp.le.s32.totalorder 2, %s9
    // Predicated region
    $region37: #{_lambda_.17} parent=5 // pred_check
      %p591 = pneg %p590
    $region38: #{_lambda_.17} parent=5 // pred_check_branch
      %593 = sbr.rel (%p591) target = $region40
    $region39: #{_lambda_.17} parent=5 // pred_region
      %s594 = ssub.s32 %s9, 2
      // Predicated region
      $region41: #{_lambda_.17} parent=39 // pred_check
        %p595 = pneg %p130
      $region42: #{_lambda_.17} parent=39 // pred_check_branch
        %597 = sbr.rel (%p595) target = $region44
      $region43: #{_lambda_.17} parent=39 // pred_region
        %s598 = smul.u32 8, %s20
        %p599 = scmp.lt.s32.totalorder %s598, 15
        %s600 = scalar_select %p599, %s598, 15
        %p601 = scmp.lt.s32.totalorder %s21, 0
        %s602 = scalar_select %p601, %s21, 0
        %s603 = sadd.s32 %s602, %s600
        %s604 = smul.addr %s603, 4
        %s605 = scalar_lea.vmem %s3, %s604
      $region44: #{_lambda_.17} parent=39 // pred_fallthru
        _
    $region40: #{_lambda_.17} parent=5 // pred_fallthru
      _
  $region6: #{_lambda_.17} parent=0 // loop_footer
    %s13 = sadd.s32 1, %s9
  $region7: #{_lambda_.17} parent=0 // loop_footer_branch
    %8 = sbr.rel target = $region3
  $region8: #{_lambda_.17} parent=0 // loop_exit
    _

// kernel: _lambda_.18
$region0: #{_lambda_.18}
  #allocation0 [shape = 'u32[]', space=smem, size = 0x4, offset = 0x4, fixed_abs, tag = 'smem constant byte address 0x4 - core index']
  #allocation1 [shape = 'u32[72,128]{1,0:T(1,128)}', space=vmem, size = 0x9000, scoped, tag = 'internal scratch']
  %s0 = inlined_call_operand.vmem [shape: bf16[16,32], index: 0, kind: input, shape index: {}]
  %s1 = inlined_call_operand.vmem [shape: bf16[32,96], index: 1, kind: input, shape index: {}]
  %s2 = inlined_call_operand.vmem [shape: f32[1,96], index: 2, kind: input, shape index: {}]
  %s3 = inlined_call_operand.vmem [shape: f32[16,96], index: 3, kind: output, shape index: {}]
  %s4 = sld [smem:[#allocation0]]
  $region45: #{_lambda_.18} parent=0
    _
  %s6 = ssub.s32 1, %s4
  %s7 = scalar_select 0, %s6, %s4
  loop: start=0, step=1, limit=4
  $region2: #{_lambda_.18} parent=0 // loop_pre_header
    _
  $region3: #{_lambda_.18} parent=0 // loop_header
    %s9 = sphi 0, %s13
    %p10 = scmp.ge.s32.totalorder %s9, 4
    %s16 = sphi 0, %s28
    %s17 = sphi 0, %s24
    %s18 = sphi 0, %s16
    %s19 = sphi 0, %s17
    %s20 = sphi 0, %s18
    %s21 = sphi 0, %s19
    %s31 = sphi 0, %s33
    %s34 = sphi 0, %s31
    %s35 = sphi 0, %s34
    %s51 = sphi 0, %s35
    %s57 = sphi 0, %s59
    %s60 = sphi 0, %s57
    %s61 = sphi 0, %s60
    %s77 = sphi 0, %s61
    %s83 = sphi 0, %s85
    %s86 = sphi 0, %s83
    %s87 = sphi 0, %s86
    %s103 = sphi 0, %s87
    %s111 = sphi 0, %s113
    %s114 = sphi 0, %s111
    %s115 = sphi 0, %s114
    %s131 = sphi 0, %s115
  $region4: #{_lambda_.18} parent=0 // loop_header_branch
    %12 = sbr.rel (%p10) target = $region8
  $region5: #{_lambda_.18} parent=0 // loop_body
    %s14 = ssub.s32 %s9, 1
    %s15 = ssub.s32 %s9, 2
    %s22 = sadd.s32 1, %s17
    %p23 = scmp.ge.s32.totalorder %s22, 1
    %s24 = scalar_select %p23, 0, %s22
    %s25 = sadd.s32 1, %s16
    %s26 = scalar_select %p23, %s25, %s16
    %p27 = scmp.ge.s32.totalorder %s26, 2
    %s28 = scalar_select %p27, 0, %s26
    %s29 = ssub.s32 %s16, %s28
    %p30 = scmp.eq.s32.totalorder %s29, 0
    %s32 = sadd.s32 %s31, 1
    %s33 = scalar_select %p30, %s31, %s32
    %p36 = pneg %p30
    %p37 = scmp.eq.s32.totalorder %s9, 1
    %p38 = por %p36, %p37
    %p39 = scmp.ne.s32.totalorder %s31, %s34
    %p40 = scmp.eq.s32.totalorder %s9, 0
    %p41 = por %p39, %p40
    %p42 = scmp.ne.s32.totalorder %s31, %s34
    %p43 = scmp.eq.s32.totalorder %s14, 1
    %p44 = por %p42, %p43
    %p45 = scmp.ne.s32.totalorder %s34, %s35
    %p46 = scmp.eq.s32.totalorder %s14, 0
    %p47 = por %p45, %p46
    %p48 = scmp.ne.s32.totalorder %s34, %s35
    %p49 = scmp.eq.s32.totalorder %s15, 1
    %p50 = por %p48, %p49
    %p52 = scmp.ne.s32.totalorder %s35, %s51
    %p53 = scmp.eq.s32.totalorder %s15, 0
    %p54 = por %p52, %p53
    %s55 = ssub.s32 %s17, %s24
    %p56 = scmp.eq.s32.totalorder %s55, 0
    %s58 = sadd.s32 %s57, 1
    %s59 = scalar_select %p56, %s57, %s58
    %p62 = pneg %p56
    %p63 = scmp.eq.s32.totalorder %s9, 1
    %p64 = por %p62, %p63
    %p65 = scmp.ne.s32.totalorder %s57, %s60
    %p66 = scmp.eq.s32.totalorder %s9, 0
    %p67 = por %p65, %p66
    %p68 = scmp.ne.s32.totalorder %s57, %s60
    %p69 = scmp.eq.s32.totalorder %s14, 1
    %p70 = por %p68, %p69
    %p71 = scmp.ne.s32.totalorder %s60, %s61
    %p72 = scmp.eq.s32.totalorder %s14, 0
    %p73 = por %p71, %p72
    %p74 = scmp.ne.s32.totalorder %s60, %s61
    %p75 = scmp.eq.s32.totalorder %s15, 1
    %p76 = por %p74, %p75
    %p78 = scmp.ne.s32.totalorder %s61, %s77
    %p79 = scmp.eq.s32.totalorder %s15, 0
    %p80 = por %p78, %p79
    %s81 = ssub.s32 %s17, %s24
    %p82 = scmp.eq.s32.totalorder %s81, 0
    %s84 = sadd.s32 %s83, 1
    %s85 = scalar_select %p82, %s83, %s84
    %p88 = pneg %p82
    %p89 = scmp.eq.s32.totalorder %s9, 1
    %p90 = por %p88, %p89
    %p91 = scmp.ne.s32.totalorder %s83, %s86
    %p92 = scmp.eq.s32.totalorder %s9, 0
    %p93 = por %p91, %p92
    %p94 = scmp.ne.s32.totalorder %s83, %s86
    %p95 = scmp.eq.s32.totalorder %s14, 1
    %p96 = por %p94, %p95
    %p97 = scmp.ne.s32.totalorder %s86, %s87
    %p98 = scmp.eq.s32.totalorder %s14, 0
    %p99 = por %p97, %p98
    %p100 = scmp.ne.s32.totalorder %s86, %s87
    %p101 = scmp.eq.s32.totalorder %s15, 1
    %p102 = por %p100, %p101
    %p104 = scmp.ne.s32.totalorder %s87, %s103
    %p105 = scmp.eq.s32.totalorder %s15, 0
    %p106 = por %p104, %p105
    %s107 = ssub.s32 %s16, %s28
    %s108 = ssub.s32 %s17, %s24
    %s109 = sor.u32 %s107, %s108
    %p110 = scmp.eq.s32.totalorder %s109, 0
    %s112 = sadd.s32 %s111, 1
    %s113 = scalar_select %p110, %s111, %s112
    %p116 = pneg %p110
    %p117 = scmp.eq.s32.totalorder %s9, 1
    %p118 = por %p116, %p117
    %p119 = scmp.ne.s32.totalorder %s111, %s114
    %p120 = scmp.eq.s32.totalorder %s9, 0
    %p121 = por %p119, %p120
    %p122 = scmp.ne.s32.totalorder %s111, %s114
    %p123 = scmp.eq.s32.totalorder %s14, 1
    %p124 = por %p122, %p123
    %p125 = scmp.ne.s32.totalorder %s114, %s115
    %p126 = scmp.eq.s32.totalorder %s14, 0
    %p127 = por %p125, %p126
    %p128 = scmp.ne.s32.totalorder %s114, %s115
    %p129 = scmp.eq.s32.totalorder %s15, 1
    %p130 = por %p128, %p129
    %p132 = scmp.ne.s32.totalorder %s115, %s131
    %p133 = scmp.eq.s32.totalorder %s15, 0
    %p134 = por %p132, %p133
    %p135 = scmp.le.s32.totalorder 1, %s9
    %p136 = scmp.lt.s32.totalorder %s9, 3
    %p137 = pnand %p135, %p136
    %p138 = pneg %p137
    // Predicated region
    $region9: #{_lambda_.18} parent=5 // pred_check
      _
    $region10: #{_lambda_.18} parent=5 // pred_check_branch
      %140 = sbr.rel (%p137) target = $region12
    $region11: #{_lambda_.18} parent=5 // pred_region
      %s141 = ssub.s32 %s9, 1
      // Predicated region
      $region13: #{_lambda_.18} parent=11 // pred_check
        %p142 = pneg %p73
      $region14: #{_lambda_.18} parent=11 // pred_check_branch
        %144 = sbr.rel (%p142) target = $region16
      $region15: #{_lambda_.18} parent=11 // pred_region
        %p145 = scmp.lt.s32.totalorder %s19, 0
        %s146 = scalar_select %p145, %s19, 0
        %s147 = smul.addr %s146, 4
        %s148 = scalar_lea.vmem %s1, %s147
      $region16: #{_lambda_.18} parent=11 // pred_fallthru
        _
      // Predicated region
      $region17: #{_lambda_.18} parent=11 // pred_check
        %p149 = pneg %p99
      $region18: #{_lambda_.18} parent=11 // pred_check_branch
        %151 = sbr.rel (%p149) target = $region20
      $region19: #{_lambda_.18} parent=11 // pred_region
        %p152 = scmp.lt.s32.totalorder %s19, 0
        %s153 = scalar_select %p152, %s19, 0
        %s154 = scalar_lea.vmem %s2, %s153
      $region20: #{_lambda_.18} parent=11 // pred_fallthru
        _
    $region12: #{_lambda_.18} parent=5 // pred_fallthru
      _
    %p155 = scmp.lt.s32.totalorder %s9, 2
    // Predicated region
    $region21: #{_lambda_.18} parent=5 // pred_check
      %p156 = pneg %p155
    $region22: #{_lambda_.18} parent=5 // pred_check_branch
      %158 = sbr.rel (%p156) target = $region24
    $region23: #{_lambda_.18} parent=5 // pred_region
      // Predicated region
      $region25: #{_lambda_.18} parent=23 // pred_check
        %p159 = pneg %p41
      $region26: #{_lambda_.18} parent=23 // pred_check_branch
        %161 = sbr.rel (%p159) target = $region28
      $region27: #{_lambda_.18} parent=23 // pred_region
        %p162 = scmp.lt.s32.totalorder %s16, 1
        %s163 = scalar_select %p162, %s16, 1
        %s164 = smul.addr %s163, 4
        %s165 = scalar_lea.vmem %s0, %s164
      $region28: #{_lambda_.18} parent=23 // pred_fallthru
        _
    $region24: #{_lambda_.18} parent=5 // pred_fallthru
      _
    %p166 = scmp.le.s32.totalorder 1, %s9
    %p167 = scmp.lt.s32.totalorder %s9, 3
    %p168 = pnand %p166, %p167
    %p169 = pneg %p168
    // Predicated region
    $region29: #{_lambda_.18} parent=5 // pred_check
      _
    $region30: #{_lambda_.18} parent=5 // pred_check_branch
      %171 = sbr.rel (%p168) target = $region32
    $region31: #{_lambda_.18} parent=5 // pred_region
      %s172 = ssub.s32 %s9, 1
      %p173 = scmp.lt.s32.totalorder %s18, 1
      %s174 = scalar_select %p173, %s18, 1
      %s175 = smul.addr %s174, 4
      %s176 = scalar_lea.vmem %s0, %s175
      %p177 = pneg %p47
      %p178 = pneg %p44
      %p179 = scmp.lt.s32.totalorder %s19, 0
      %s180 = scalar_select %p179, %s19, 0
      %s181 = smul.addr %s180, 4
      %s182 = scalar_lea.vmem %s1, %s181
      %p183 = pneg %p73
      %p184 = pneg %p70
      %p185 = scmp.lt.s32.totalorder %s19, 0
      %s186 = scalar_select %p185, %s19, 0
      %s187 = scalar_lea.vmem %s2, %s186
      %p188 = pneg %p99
      %p189 = pneg %p96
      %p190 = pneg %p127
      %p191 = pneg %p124
      %p192 = scmp.lt.s32.totalorder %s18, 1
      %s193 = scalar_select %p192, %s18, 1
      %p194 = scmp.lt.s32.totalorder %s19, 0
      %s195 = scalar_select %p194, %s19, 0
      %s196 = sadd.s32 %s195, %s193
      %s197 = smul.addr %s196, 8
      %s198 = scalar_lea.vmem %s3, %s197
      %p199 = scmp.lt.s32.totalorder %s18, 1
      %s200 = scalar_select %p199, %s18, 1
      %s201 = smul.addr %s200, 4
      %s202 = scalar_lea.vmem %s0, %s201
      %p203 = scmp.lt.s32.totalorder %s19, 0
      %s204 = scalar_select %p203, %s19, 0
      %s205 = smul.addr %s204, 4
      %s206 = scalar_lea.vmem %s1, %s205
      %p207 = scmp.lt.s32.totalorder %s19, 0
      %s208 = scalar_select %p207, %s19, 0
      %s209 = scalar_lea.vmem %s2, %s208
      %p210 = scmp.lt.s32.totalorder %s18, 1
      %s211 = scalar_select %p210, %s18, 1
      %p212 = scmp.lt.s32.totalorder %s19, 0
      %s213 = scalar_select %p212, %s19, 0
      %s214 = sadd.s32 %s213, %s211
      %s215 = smul.addr %s214, 8
      %s216 = scalar_lea.vmem %s3, %s215
      %v218 = vld [vmem:[%s202] sm:$0xf]
      %v219 = vld [vmem:[%s206] sm:$0xf]
      %v220 = vld [vmem:[%s206 + $0x4] sm:$0xf]
      %v221 = vld [vmem:[%s206 + $0x8] sm:$0xf]
      %v222 = vld [vmem:[%s206 + $0xc] sm:$0xf]
      %v223 = vld [vmem:[%s209] sm:$0x1]
      %v225 = vperm.slane %v223, 0
      %v231 = vunpack.c.l.b16 %v219
      %v232 = vunpack.c.l.b16 %v220
      %v233 = vunpack.c.l.b16 %v221
      %v234 = vunpack.c.l.b16 %v222
      %v235 = vpack.c.b16 %v232, %v231
      %v236 = vpack.c.b16 %v234, %v233
      %vm239 = vcmask 261120
      %v241 = vsel %vm239, %v218, 0
      %243 = vmatpush.bf16.msra.mxu0 0
      %244 = vmatpush.bf16.msra.mxu0 0
      %245 = vmatpush.bf16.msra.mxu0 0
      %246 = vmatpush.bf16.msra.mxu0 0
      %247 = vmatpush.bf16.msra.mxu0 0
      %248 = vmatpush.bf16.msra.mxu0 0
      %249 = vmatpush.bf16.msra.mxu0 %v236
      %250 = vmatpush.bf16.msra.mxu0 %v235
      %251 = vmatmul.bf16.gmra.mxu0 %v241
      %v252 = vpop.f32.mrf.mxu0
      %v253 = vadd.f32 %v225, %v252
      %v254 = vpop.f32.mrf.mxu0
      %255 = vdwg.mxu0
      %vm256 = vcmask 785408
      %257 = vst.msk [vmem:[%s216] sm:$0xff] %vm256, %v253
      %p258 = scmp.lt.s32.totalorder %s18, 1
      %s259 = scalar_select %p258, %s18, 1
      %p260 = scmp.lt.s32.totalorder %s19, 0
      %s261 = scalar_select %p260, %s19, 0
      %s262 = sadd.s32 %s261, %s259
      %s263 = smul.addr %s262, 8
      %s264 = scalar_lea.vmem %s3, %s263
      // Predicated region
      $region33: #{_lambda_.18} parent=31 // pred_check
        %p265 = pneg %p124
      $region34: #{_lambda_.18} parent=31 // pred_check_branch
        %267 = sbr.rel (%p265) target = $region36
      $region35: #{_lambda_.18} parent=31 // pred_region
        _
      $region36: #{_lambda_.18} parent=31 // pred_fallthru
        _
    $region32: #{_lambda_.18} parent=5 // pred_fallthru
      _
    %p268 = scmp.le.s32.totalorder 2, %s9
    // Predicated region
    $region37: #{_lambda_.18} parent=5 // pred_check
      %p269 = pneg %p268
    $region38: #{_lambda_.18} parent=5 // pred_check_branch
      %271 = sbr.rel (%p269) target = $region40
    $region39: #{_lambda_.18} parent=5 // pred_region
      %s272 = ssub.s32 %s9, 2
      // Predicated region
      $region41: #{_lambda_.18} parent=39 // pred_check
        %p273 = pneg %p130
      $region42: #{_lambda_.18} parent=39 // pred_check_branch
        %275 = sbr.rel (%p273) target = $region44
      $region43: #{_lambda_.18} parent=39 // pred_region
        %p276 = scmp.lt.s32.totalorder %s20, 1
        %s277 = scalar_select %p276, %s20, 1
        %p278 = scmp.lt.s32.totalorder %s21, 0
        %s279 = scalar_select %p278, %s21, 0
        %s280 = sadd.s32 %s279, %s277
        %s281 = smul.addr %s280, 8
        %s282 = scalar_lea.vmem %s3, %s281
      $region44: #{_lambda_.18} parent=39 // pred_fallthru
        _
    $region40: #{_lambda_.18} parent=5 // pred_fallthru
      _
  $region6: #{_lambda_.18} parent=0 // loop_footer
    %s13 = sadd.s32 1, %s9
  $region7: #{_lambda_.18} parent=0 // loop_footer_branch
    %8 = sbr.rel target = $region3
  $region8: #{_lambda_.18} parent=0 // loop_exit
    _

// kernel: _lambda_.20
$region0: #{_lambda_.20}
  #allocation0 [shape = 'u32[]', space=smem, size = 0x4, offset = 0x4, fixed_abs, tag = 'smem constant byte address 0x4 - core index']
  #allocation1 [shape = 'u32[72,128]{1,0:T(1,128)}', space=vmem, size = 0x9000, scoped, tag = 'internal scratch']
  %s0 = inlined_call_operand.vmem [shape: bf16[16,32], index: 0, kind: input, shape index: {}]
  %s1 = inlined_call_operand.vmem [shape: bf16[32,512], index: 1, kind: input, shape index: {}]
  %s2 = inlined_call_operand.vmem [shape: f32[1,512], index: 2, kind: input, shape index: {}]
  %s3 = inlined_call_operand.vmem [shape: bf16[16,512], index: 3, kind: output, shape index: {}]
  %s4 = sld [smem:[#allocation0]]
  $region45: #{_lambda_.20} parent=0
    _
  %s6 = ssub.s32 1, %s4
  %s7 = scalar_select 0, %s6, %s4
  loop: start=0, step=1, limit=4
  $region2: #{_lambda_.20} parent=0 // loop_pre_header
    _
  $region3: #{_lambda_.20} parent=0 // loop_header
    %s9 = sphi 0, %s13
    %p10 = scmp.ge.s32.totalorder %s9, 4
    %s16 = sphi 0, %s28
    %s17 = sphi 0, %s24
    %s18 = sphi 0, %s16
    %s19 = sphi 0, %s17
    %s20 = sphi 0, %s18
    %s21 = sphi 0, %s19
    %s31 = sphi 0, %s33
    %s34 = sphi 0, %s31
    %s35 = sphi 0, %s34
    %s51 = sphi 0, %s35
    %s57 = sphi 0, %s59
    %s60 = sphi 0, %s57
    %s61 = sphi 0, %s60
    %s77 = sphi 0, %s61
    %s83 = sphi 0, %s85
    %s86 = sphi 0, %s83
    %s87 = sphi 0, %s86
    %s103 = sphi 0, %s87
    %s111 = sphi 0, %s113
    %s114 = sphi 0, %s111
    %s115 = sphi 0, %s114
    %s131 = sphi 0, %s115
  $region4: #{_lambda_.20} parent=0 // loop_header_branch
    %12 = sbr.rel (%p10) target = $region8
  $region5: #{_lambda_.20} parent=0 // loop_body
    %s14 = ssub.s32 %s9, 1
    %s15 = ssub.s32 %s9, 2
    %s22 = sadd.s32 1, %s17
    %p23 = scmp.ge.s32.totalorder %s22, 1
    %s24 = scalar_select %p23, 0, %s22
    %s25 = sadd.s32 1, %s16
    %s26 = scalar_select %p23, %s25, %s16
    %p27 = scmp.ge.s32.totalorder %s26, 2
    %s28 = scalar_select %p27, 0, %s26
    %s29 = ssub.s32 %s16, %s28
    %p30 = scmp.eq.s32.totalorder %s29, 0
    %s32 = sadd.s32 %s31, 1
    %s33 = scalar_select %p30, %s31, %s32
    %p36 = pneg %p30
    %p37 = scmp.eq.s32.totalorder %s9, 1
    %p38 = por %p36, %p37
    %p39 = scmp.ne.s32.totalorder %s31, %s34
    %p40 = scmp.eq.s32.totalorder %s9, 0
    %p41 = por %p39, %p40
    %p42 = scmp.ne.s32.totalorder %s31, %s34
    %p43 = scmp.eq.s32.totalorder %s14, 1
    %p44 = por %p42, %p43
    %p45 = scmp.ne.s32.totalorder %s34, %s35
    %p46 = scmp.eq.s32.totalorder %s14, 0
    %p47 = por %p45, %p46
    %p48 = scmp.ne.s32.totalorder %s34, %s35
    %p49 = scmp.eq.s32.totalorder %s15, 1
    %p50 = por %p48, %p49
    %p52 = scmp.ne.s32.totalorder %s35, %s51
    %p53 = scmp.eq.s32.totalorder %s15, 0
    %p54 = por %p52, %p53
    %s55 = ssub.s32 %s17, %s24
    %p56 = scmp.eq.s32.totalorder %s55, 0
    %s58 = sadd.s32 %s57, 1
    %s59 = scalar_select %p56, %s57, %s58
    %p62 = pneg %p56
    %p63 = scmp.eq.s32.totalorder %s9, 1
    %p64 = por %p62, %p63
    %p65 = scmp.ne.s32.totalorder %s57, %s60
    %p66 = scmp.eq.s32.totalorder %s9, 0
    %p67 = por %p65, %p66
    %p68 = scmp.ne.s32.totalorder %s57, %s60
    %p69 = scmp.eq.s32.totalorder %s14, 1
    %p70 = por %p68, %p69
    %p71 = scmp.ne.s32.totalorder %s60, %s61
    %p72 = scmp.eq.s32.totalorder %s14, 0
    %p73 = por %p71, %p72
    %p74 = scmp.ne.s32.totalorder %s60, %s61
    %p75 = scmp.eq.s32.totalorder %s15, 1
    %p76 = por %p74, %p75
    %p78 = scmp.ne.s32.totalorder %s61, %s77
    %p79 = scmp.eq.s32.totalorder %s15, 0
    %p80 = por %p78, %p79
    %s81 = ssub.s32 %s17, %s24
    %p82 = scmp.eq.s32.totalorder %s81, 0
    %s84 = sadd.s32 %s83, 1
    %s85 = scalar_select %p82, %s83, %s84
    %p88 = pneg %p82
    %p89 = scmp.eq.s32.totalorder %s9, 1
    %p90 = por %p88, %p89
    %p91 = scmp.ne.s32.totalorder %s83, %s86
    %p92 = scmp.eq.s32.totalorder %s9, 0
    %p93 = por %p91, %p92
    %p94 = scmp.ne.s32.totalorder %s83, %s86
    %p95 = scmp.eq.s32.totalorder %s14, 1
    %p96 = por %p94, %p95
    %p97 = scmp.ne.s32.totalorder %s86, %s87
    %p98 = scmp.eq.s32.totalorder %s14, 0
    %p99 = por %p97, %p98
    %p100 = scmp.ne.s32.totalorder %s86, %s87
    %p101 = scmp.eq.s32.totalorder %s15, 1
    %p102 = por %p100, %p101
    %p104 = scmp.ne.s32.totalorder %s87, %s103
    %p105 = scmp.eq.s32.totalorder %s15, 0
    %p106 = por %p104, %p105
    %s107 = ssub.s32 %s16, %s28
    %s108 = ssub.s32 %s17, %s24
    %s109 = sor.u32 %s107, %s108
    %p110 = scmp.eq.s32.totalorder %s109, 0
    %s112 = sadd.s32 %s111, 1
    %s113 = scalar_select %p110, %s111, %s112
    %p116 = pneg %p110
    %p117 = scmp.eq.s32.totalorder %s9, 1
    %p118 = por %p116, %p117
    %p119 = scmp.ne.s32.totalorder %s111, %s114
    %p120 = scmp.eq.s32.totalorder %s9, 0
    %p121 = por %p119, %p120
    %p122 = scmp.ne.s32.totalorder %s111, %s114
    %p123 = scmp.eq.s32.totalorder %s14, 1
    %p124 = por %p122, %p123
    %p125 = scmp.ne.s32.totalorder %s114, %s115
    %p126 = scmp.eq.s32.totalorder %s14, 0
    %p127 = por %p125, %p126
    %p128 = scmp.ne.s32.totalorder %s114, %s115
    %p129 = scmp.eq.s32.totalorder %s15, 1
    %p130 = por %p128, %p129
    %p132 = scmp.ne.s32.totalorder %s115, %s131
    %p133 = scmp.eq.s32.totalorder %s15, 0
    %p134 = por %p132, %p133
    %p135 = scmp.le.s32.totalorder 1, %s9
    %p136 = scmp.lt.s32.totalorder %s9, 3
    %p137 = pnand %p135, %p136
    %p138 = pneg %p137
    // Predicated region
    $region9: #{_lambda_.20} parent=5 // pred_check
      _
    $region10: #{_lambda_.20} parent=5 // pred_check_branch
      %140 = sbr.rel (%p137) target = $region12
    $region11: #{_lambda_.20} parent=5 // pred_region
      %s141 = ssub.s32 %s9, 1
      // Predicated region
      $region13: #{_lambda_.20} parent=11 // pred_check
        %p142 = pneg %p73
      $region14: #{_lambda_.20} parent=11 // pred_check_branch
        %144 = sbr.rel (%p142) target = $region16
      $region15: #{_lambda_.20} parent=11 // pred_region
        %s145 = smul.u32 4, %s19
        %p146 = scmp.lt.s32.totalorder %s145, 3
        %s147 = scalar_select %p146, %s145, 3
        %s148 = smul.addr %s147, 4
        %s149 = scalar_lea.vmem %s1, %s148
        %s150 = smul.u32 4, %s19
      $region16: #{_lambda_.20} parent=11 // pred_fallthru
        _
      // Predicated region
      $region17: #{_lambda_.20} parent=11 // pred_check
        %p151 = pneg %p99
      $region18: #{_lambda_.20} parent=11 // pred_check_branch
        %153 = sbr.rel (%p151) target = $region20
      $region19: #{_lambda_.20} parent=11 // pred_region
        %s154 = smul.u32 4, %s19
        %p155 = scmp.lt.s32.totalorder %s154, 3
        %s156 = scalar_select %p155, %s154, 3
        %s157 = scalar_lea.vmem %s2, %s156
        %s158 = smul.u32 4, %s19
      $region20: #{_lambda_.20} parent=11 // pred_fallthru
        _
    $region12: #{_lambda_.20} parent=5 // pred_fallthru
      _
    %p159 = scmp.lt.s32.totalorder %s9, 2
    // Predicated region
    $region21: #{_lambda_.20} parent=5 // pred_check
      %p160 = pneg %p159
    $region22: #{_lambda_.20} parent=5 // pred_check_branch
      %162 = sbr.rel (%p160) target = $region24
    $region23: #{_lambda_.20} parent=5 // pred_region
      // Predicated region
      $region25: #{_lambda_.20} parent=23 // pred_check
        %p163 = pneg %p41
      $region26: #{_lambda_.20} parent=23 // pred_check_branch
        %165 = sbr.rel (%p163) target = $region28
      $region27: #{_lambda_.20} parent=23 // pred_region
        %p166 = scmp.lt.s32.totalorder %s16, 1
        %s167 = scalar_select %p166, %s16, 1
        %s168 = smul.addr %s167, 4
        %s169 = scalar_lea.vmem %s0, %s168
      $region28: #{_lambda_.20} parent=23 // pred_fallthru
        _
    $region24: #{_lambda_.20} parent=5 // pred_fallthru
      _
    %p170 = scmp.le.s32.totalorder 1, %s9
    %p171 = scmp.lt.s32.totalorder %s9, 3
    %p172 = pnand %p170, %p171
    %p173 = pneg %p172
    // Predicated region
    $region29: #{_lambda_.20} parent=5 // pred_check
      _
    $region30: #{_lambda_.20} parent=5 // pred_check_branch
      %175 = sbr.rel (%p172) target = $region32
    $region31: #{_lambda_.20} parent=5 // pred_region
      %s176 = ssub.s32 %s9, 1
      %p177 = scmp.lt.s32.totalorder %s18, 1
      %s178 = scalar_select %p177, %s18, 1
      %s179 = smul.addr %s178, 4
      %s180 = scalar_lea.vmem %s0, %s179
      %p181 = pneg %p47
      %p182 = pneg %p44
      %s183 = smul.u32 4, %s19
      %p184 = scmp.lt.s32.totalorder %s183, 3
      %s185 = scalar_select %p184, %s183, 3
      %s186 = smul.addr %s185, 4
      %s187 = scalar_lea.vmem %s1, %s186
      %p188 = pneg %p73
      %p189 = pneg %p70
      %s190 = smul.u32 4, %s19
      %p191 = scmp.lt.s32.totalorder %s190, 3
      %s192 = scalar_select %p191, %s190, 3
      %s193 = scalar_lea.vmem %s2, %s192
      %p194 = pneg %p99
      %p195 = pneg %p96
      %p196 = pneg %p127
      %p197 = pneg %p124
      %s198 = smul.u32 4, %s19
      %p199 = scmp.lt.s32.totalorder %s18, 1
      %s200 = scalar_select %p199, %s18, 1
      %p201 = scmp.lt.s32.totalorder %s198, 3
      %s202 = scalar_select %p201, %s198, 3
      %s203 = smul.addr %s200, 4
      %s204 = sadd.s32 %s202, %s203
      %s205 = smul.addr %s204, 4
      %s206 = scalar_lea.vmem %s3, %s205
      %p207 = scmp.lt.s32.totalorder %s18, 1
      %s208 = scalar_select %p207, %s18, 1
      %s209 = smul.addr %s208, 4
      %s210 = scalar_lea.vmem %s0, %s209
      %s211 = smul.u32 4, %s19
      %p212 = scmp.lt.s32.totalorder %s211, 3
      %s213 = scalar_select %p212, %s211, 3
      %s214 = smul.addr %s213, 4
      %s215 = scalar_lea.vmem %s1, %s214
      %s216 = smul.u32 4, %s19
      %s217 = smul.u32 4, %s19
      %p218 = scmp.lt.s32.totalorder %s217, 3
      %s219 = scalar_select %p218, %s217, 3
      %s220 = scalar_lea.vmem %s2, %s219
      %s221 = smul.u32 4, %s19
      %s222 = smul.u32 4, %s19
      %p223 = scmp.lt.s32.totalorder %s18, 1
      %s224 = scalar_select %p223, %s18, 1
      %p225 = scmp.lt.s32.totalorder %s222, 3
      %s226 = scalar_select %p225, %s222, 3
      %s227 = smul.addr %s224, 4
      %s228 = sadd.s32 %s226, %s227
      %s229 = smul.addr %s228, 4
      %s230 = scalar_lea.vmem %s3, %s229
      %s231 = smul.u32 4, %s19
      %v233 = vld [vmem:[%s210] sm:$0xf]
      %v234 = vld [vmem:[%s215] sm:$0xff]
      %v235 = vld [vmem:[%s215 + $0x8] sm:$0xff]
      %v236 = vld [vmem:[%s215 + $0x10] sm:$0xff]
      %v237 = vld [vmem:[%s215 + $0x18] sm:$0xff]
      %v238 = vld [vmem:[%s215 + $0x20] sm:$0xff]
      %v239 = vld [vmem:[%s215 + $0x28] sm:$0xff]
      %v240 = vld [vmem:[%s215 + $0x30] sm:$0xff]
      %v241 = vld [vmem:[%s215 + $0x38] sm:$0xff]
      %v242 = vld [vmem:[%s220] sm:$0xf]
      %v244 = vperm.slane %v242, 0
      %v245 = vperm.slane %v242, 1
      %v246 = vperm.slane %v242, 2
      %v247 = vperm.slane %v242, 3
      %v260 = vunpack.c.l.b16 %v234
      %v261 = vunpack.c.h.b16 %v234
      %v262 = vunpack.c.l.b16 %v235
      %v263 = vunpack.c.h.b16 %v235
      %v264 = vunpack.c.l.b16 %v236
      %v265 = vunpack.c.h.b16 %v236
      %v266 = vunpack.c.l.b16 %v237
      %v267 = vunpack.c.h.b16 %v237
      %v268 = vunpack.c.l.b16 %v238
      %v269 = vunpack.c.h.b16 %v238
      %v270 = vunpack.c.l.b16 %v239
      %v271 = vunpack.c.h.b16 %v239
      %v272 = vunpack.c.l.b16 %v240
      %v273 = vunpack.c.h.b16 %v240
      %v274 = vunpack.c.l.b16 %v241
      %v275 = vunpack.c.h.b16 %v241
      %v276 = vpack.c.b16 %v264, %v260
      %v277 = vpack.c.b16 %v265, %v261
      %v278 = vpack.c.b16 %v266, %v262
      %v279 = vpack.c.b16 %v267, %v263
      %v280 = vpack.c.b16 %v272, %v268
      %v281 = vpack.c.b16 %v273, %v269
      %v282 = vpack.c.b16 %v274, %v270
      %v283 = vpack.c.b16 %v275, %v271
      %vm292 = vcmask 261120
      %v294 = vsel %vm292, %v233, 0
      %296 = vmatpush.bf16.msra.mxu0 0
      %297 = vmatpush.bf16.msra.mxu0 0
      %298 = vmatpush.bf16.msra.mxu0 0
      %299 = vmatpush.bf16.msra.mxu0 0
      %300 = vmatpush.bf16.msra.mxu0 0
      %301 = vmatpush.bf16.msra.mxu0 0
      %302 = vmatpush.bf16.msra.mxu0 %v280
      %303 = vmatpush.bf16.msra.mxu0 %v276
      %304 = vmatmul.bf16.gmra.mxu0 %v294
      %v305 = vpop.f32.mrf.mxu0
      %v306 = vadd.f32 %v244, %v305
      %v307 = vpop.f32.mrf.mxu0
      %308 = vdwg.mxu0
      %309 = vmatpush.bf16.msra.mxu0 0
      %310 = vmatpush.bf16.msra.mxu0 0
      %311 = vmatpush.bf16.msra.mxu0 0
      %312 = vmatpush.bf16.msra.mxu0 0
      %313 = vmatpush.bf16.msra.mxu0 0
      %314 = vmatpush.bf16.msra.mxu0 0
      %315 = vmatpush.bf16.msra.mxu0 %v281
      %316 = vmatpush.bf16.msra.mxu0 %v277
      %317 = vmatmul.bf16.gmra.mxu0 %v294
      %v318 = vpop.f32.mrf.mxu0
      %v319 = vadd.f32 %v245, %v318
      %v320 = vpop.f32.mrf.mxu0
      %321 = vdwg.mxu0
      %322 = vmatpush.bf16.msra.mxu0 0
      %323 = vmatpush.bf16.msra.mxu0 0
      %324 = vmatpush.bf16.msra.mxu0 0
      %325 = vmatpush.bf16.msra.mxu0 0
      %326 = vmatpush.bf16.msra.mxu0 0
      %327 = vmatpush.bf16.msra.mxu0 0
      %328 = vmatpush.bf16.msra.mxu0 %v282
      %329 = vmatpush.bf16.msra.mxu0 %v278
      %330 = vmatmul.bf16.gmra.mxu0 %v294
      %v331 = vpop.f32.mrf.mxu0
      %v332 = vadd.f32 %v246, %v331
      %v333 = vpop.f32.mrf.mxu0
      %334 = vdwg.mxu0
      %335 = vmatpush.bf16.msra.mxu0 0
      %336 = vmatpush.bf16.msra.mxu0 0
      %337 = vmatpush.bf16.msra.mxu0 0
      %338 = vmatpush.bf16.msra.mxu0 0
      %339 = vmatpush.bf16.msra.mxu0 0
      %340 = vmatpush.bf16.msra.mxu0 0
      %341 = vmatpush.bf16.msra.mxu0 %v283
      %342 = vmatpush.bf16.msra.mxu0 %v279
      %343 = vmatmul.bf16.gmra.mxu0 %v294
      %v344 = vpop.f32.mrf.mxu0
      %v345 = vadd.f32 %v247, %v344
      %v346 = vpop.f32.mrf.mxu0
      %347 = vdwg.mxu0
      %v348 = vpack.c.bf16 %v319, %v306
      %v349 = vpack.c.bf16 %v345, %v332
      %350 = vst [vmem:[%s230] sm:$0xff] %v348
      %351 = vst [vmem:[%s230 + $0x8] sm:$0xff] %v349
      %s352 = smul.u32 4, %s19
      %p353 = scmp.lt.s32.totalorder %s18, 1
      %s354 = scalar_select %p353, %s18, 1
      %p355 = scmp.lt.s32.totalorder %s352, 3
      %s356 = scalar_select %p355, %s352, 3
      %s357 = smul.addr %s354, 4
      %s358 = sadd.s32 %s356, %s357
      %s359 = smul.addr %s358, 4
      %s360 = scalar_lea.vmem %s3, %s359
      // Predicated region
      $region33: #{_lambda_.20} parent=31 // pred_check
        %p361 = pneg %p124
      $region34: #{_lambda_.20} parent=31 // pred_check_branch
        %363 = sbr.rel (%p361) target = $region36
      $region35: #{_lambda_.20} parent=31 // pred_region
        %s364 = smul.u32 4, %s19
      $region36: #{_lambda_.20} parent=31 // pred_fallthru
        _
    $region32: #{_lambda_.20} parent=5 // pred_fallthru
      _
    %p365 = scmp.le.s32.totalorder 2, %s9
    // Predicated region
    $region37: #{_lambda_.20} parent=5 // pred_check
      %p366 = pneg %p365
    $region38: #{_lambda_.20} parent=5 // pred_check_branch
      %368 = sbr.rel (%p366) target = $region40
    $region39: #{_lambda_.20} parent=5 // pred_region
      %s369 = ssub.s32 %s9, 2
      // Predicated region
      $region41: #{_lambda_.20} parent=39 // pred_check
        %p370 = pneg %p130
      $region42: #{_lambda_.20} parent=39 // pred_check_branch
        %372 = sbr.rel (%p370) target = $region44
      $region43: #{_lambda_.20} parent=39 // pred_region
        %s373 = smul.u32 4, %s21
        %p374 = scmp.lt.s32.totalorder %s20, 1
        %s375 = scalar_select %p374, %s20, 1
        %p376 = scmp.lt.s32.totalorder %s373, 3
        %s377 = scalar_select %p376, %s373, 3
        %s378 = smul.addr %s375, 4
        %s379 = sadd.s32 %s377, %s378
        %s380 = smul.addr %s379, 4
        %s381 = scalar_lea.vmem %s3, %s380
      $region44: #{_lambda_.20} parent=39 // pred_fallthru
        _
    $region40: #{_lambda_.20} parent=5 // pred_fallthru
      _
  $region6: #{_lambda_.20} parent=0 // loop_footer
    %s13 = sadd.s32 1, %s9
  $region7: #{_lambda_.20} parent=0 // loop_footer_branch
    %8 = sbr.rel target = $region3
  $region8: #{_lambda_.20} parent=0 // loop_exit
    _

// kernel: _lambda_.19
$region0: #{_lambda_.19}
  #allocation0 [shape = 'u32[]', space=smem, size = 0x4, offset = 0x4, fixed_abs, tag = 'smem constant byte address 0x4 - core index']
  #allocation1 [shape = 'u32[72,128]{1,0:T(1,128)}', space=vmem, size = 0x9000, scoped, tag = 'internal scratch']
  %s0 = inlined_call_operand.vmem [shape: bf16[16,32], index: 0, kind: input, shape index: {}]
  %s1 = inlined_call_operand.vmem [shape: f32[16,32], index: 1, kind: input, shape index: {}]
  %s2 = inlined_call_operand.vmem [shape: bf16[32,32], index: 2, kind: input, shape index: {}]
  %s3 = inlined_call_operand.vmem [shape: f32[3,32], index: 3, kind: input, shape index: {}]
  %s4 = inlined_call_operand.vmem [shape: f32[16,32], index: 4, kind: output, shape index: {}]
  %s5 = sld [smem:[#allocation0]]
  $region49: #{_lambda_.19} parent=0
    _
  %s7 = ssub.s32 1, %s5
  %s8 = scalar_select 0, %s7, %s5
  loop: start=0, step=1, limit=4
  $region2: #{_lambda_.19} parent=0 // loop_pre_header
    _
  $region3: #{_lambda_.19} parent=0 // loop_header
    %s10 = sphi 0, %s14
    %p11 = scmp.ge.s32.totalorder %s10, 4
    %s20 = sphi 0, %s22
    %s23 = sphi 0, %s20
    %s24 = sphi 0, %s23
    %s40 = sphi 0, %s24
    %s46 = sphi 0, %s48
    %s49 = sphi 0, %s46
    %s50 = sphi 0, %s49
    %s66 = sphi 0, %s50
    %s70 = sphi 0, %s70
    %s72 = sphi 0, %s70
    %s73 = sphi 0, %s72
    %s87 = sphi 0, %s73
    %s91 = sphi 0, %s91
    %s93 = sphi 0, %s91
    %s94 = sphi 0, %s93
    %s108 = sphi 0, %s94
    %s114 = sphi 0, %s116
    %s117 = sphi 0, %s114
    %s118 = sphi 0, %s117
    %s134 = sphi 0, %s118
  $region4: #{_lambda_.19} parent=0 // loop_header_branch
    %13 = sbr.rel (%p11) target = $region8
  $region5: #{_lambda_.19} parent=0 // loop_body
    %s15 = ssub.s32 %s10, 1
    %s16 = ssub.s32 %s10, 2
    %s17 = sadd.s32 %s10, 1
    %s18 = ssub.s32 %s10, %s17
    %p19 = scmp.eq.s32.totalorder %s18, 0
    %s21 = sadd.s32 %s20, 1
    %s22 = scalar_select %p19, %s20, %s21
    %p25 = pneg %p19
    %p26 = scmp.eq.s32.totalorder %s10, 1
    %p27 = por %p25, %p26
    %p28 = scmp.ne.s32.totalorder %s20, %s23
    %p29 = scmp.eq.s32.totalorder %s10, 0
    %p30 = por %p28, %p29
    %p31 = scmp.ne.s32.totalorder %s20, %s23
    %p32 = scmp.eq.s32.totalorder %s15, 1
    %p33 = por %p31, %p32
    %p34 = scmp.ne.s32.totalorder %s23, %s24
    %p35 = scmp.eq.s32.totalorder %s15, 0
    %p36 = por %p34, %p35
    %p37 = scmp.ne.s32.totalorder %s23, %s24
    %p38 = scmp.eq.s32.totalorder %s16, 1
    %p39 = por %p37, %p38
    %p41 = scmp.ne.s32.totalorder %s24, %s40
    %p42 = scmp.eq.s32.totalorder %s16, 0
    %p43 = por %p41, %p42
    %s44 = ssub.s32 %s10, %s17
    %p45 = scmp.eq.s32.totalorder %s44, 0
    %s47 = sadd.s32 %s46, 1
    %s48 = scalar_select %p45, %s46, %s47
    %p51 = pneg %p45
    %p52 = scmp.eq.s32.totalorder %s10, 1
    %p53 = por %p51, %p52
    %p54 = scmp.ne.s32.totalorder %s46, %s49
    %p55 = scmp.eq.s32.totalorder %s10, 0
    %p56 = por %p54, %p55
    %p57 = scmp.ne.s32.totalorder %s46, %s49
    %p58 = scmp.eq.s32.totalorder %s15, 1
    %p59 = por %p57, %p58
    %p60 = scmp.ne.s32.totalorder %s49, %s50
    %p61 = scmp.eq.s32.totalorder %s15, 0
    %p62 = por %p60, %p61
    %p63 = scmp.ne.s32.totalorder %s49, %s50
    %p64 = scmp.eq.s32.totalorder %s16, 1
    %p65 = por %p63, %p64
    %p67 = scmp.ne.s32.totalorder %s50, %s66
    %p68 = scmp.eq.s32.totalorder %s16, 0
    %p69 = por %p67, %p68
    %s71 = sadd.s32 %s70, 1
    %p74 = scmp.eq.s32.totalorder %s10, 1
    %p75 = scmp.ne.s32.totalorder %s70, %s72
    %p76 = scmp.eq.s32.totalorder %s10, 0
    %p77 = por %p75, %p76
    %p78 = scmp.ne.s32.totalorder %s70, %s72
    %p79 = scmp.eq.s32.totalorder %s15, 1
    %p80 = por %p78, %p79
    %p81 = scmp.ne.s32.totalorder %s72, %s73
    %p82 = scmp.eq.s32.totalorder %s15, 0
    %p83 = por %p81, %p82
    %p84 = scmp.ne.s32.totalorder %s72, %s73
    %p85 = scmp.eq.s32.totalorder %s16, 1
    %p86 = por %p84, %p85
    %p88 = scmp.ne.s32.totalorder %s73, %s87
    %p89 = scmp.eq.s32.totalorder %s16, 0
    %p90 = por %p88, %p89
    %s92 = sadd.s32 %s91, 1
    %p95 = scmp.eq.s32.totalorder %s10, 1
    %p96 = scmp.ne.s32.totalorder %s91, %s93
    %p97 = scmp.eq.s32.totalorder %s10, 0
    %p98 = por %p96, %p97
    %p99 = scmp.ne.s32.totalorder %s91, %s93
    %p100 = scmp.eq.s32.totalorder %s15, 1
    %p101 = por %p99, %p100
    %p102 = scmp.ne.s32.totalorder %s93, %s94
    %p103 = scmp.eq.s32.totalorder %s15, 0
    %p104 = por %p102, %p103
    %p105 = scmp.ne.s32.totalorder %s93, %s94
    %p106 = scmp.eq.s32.totalorder %s16, 1
    %p107 = por %p105, %p106
    %p109 = scmp.ne.s32.totalorder %s94, %s108
    %p110 = scmp.eq.s32.totalorder %s16, 0
    %p111 = por %p109, %p110
    %s112 = ssub.s32 %s10, %s17
    %p113 = scmp.eq.s32.totalorder %s112, 0
    %s115 = sadd.s32 %s114, 1
    %s116 = scalar_select %p113, %s114, %s115
    %p119 = pneg %p113
    %p120 = scmp.eq.s32.totalorder %s10, 1
    %p121 = por %p119, %p120
    %p122 = scmp.ne.s32.totalorder %s114, %s117
    %p123 = scmp.eq.s32.totalorder %s10, 0
    %p124 = por %p122, %p123
    %p125 = scmp.ne.s32.totalorder %s114, %s117
    %p126 = scmp.eq.s32.totalorder %s15, 1
    %p127 = por %p125, %p126
    %p128 = scmp.ne.s32.totalorder %s117, %s118
    %p129 = scmp.eq.s32.totalorder %s15, 0
    %p130 = por %p128, %p129
    %p131 = scmp.ne.s32.totalorder %s117, %s118
    %p132 = scmp.eq.s32.totalorder %s16, 1
    %p133 = por %p131, %p132
    %p135 = scmp.ne.s32.totalorder %s118, %s134
    %p136 = scmp.eq.s32.totalorder %s16, 0
    %p137 = por %p135, %p136
    %p138 = scmp.le.s32.totalorder 1, %s10
    %p139 = scmp.lt.s32.totalorder %s10, 3
    %p140 = pnand %p138, %p139
    %p141 = pneg %p140
    // Predicated region
    $region9: #{_lambda_.19} parent=5 // pred_check
      _
    $region10: #{_lambda_.19} parent=5 // pred_check_branch
      %143 = sbr.rel (%p140) target = $region12
    $region11: #{_lambda_.19} parent=5 // pred_region
      %s144 = ssub.s32 %s10, 1
      // Predicated region
      $region13: #{_lambda_.19} parent=11 // pred_check
        %p145 = pneg %p83
      $region14: #{_lambda_.19} parent=11 // pred_check_branch
        %147 = sbr.rel (%p145) target = $region16
      $region15: #{_lambda_.19} parent=11 // pred_region
        _
      $region16: #{_lambda_.19} parent=11 // pred_fallthru
        _
      // Predicated region
      $region17: #{_lambda_.19} parent=11 // pred_check
        %p148 = pneg %p104
      $region18: #{_lambda_.19} parent=11 // pred_check_branch
        %150 = sbr.rel (%p148) target = $region20
      $region19: #{_lambda_.19} parent=11 // pred_region
        _
      $region20: #{_lambda_.19} parent=11 // pred_fallthru
        _
    $region12: #{_lambda_.19} parent=5 // pred_fallthru
      _
    %p151 = scmp.lt.s32.totalorder %s10, 2
    // Predicated region
    $region21: #{_lambda_.19} parent=5 // pred_check
      %p152 = pneg %p151
    $region22: #{_lambda_.19} parent=5 // pred_check_branch
      %154 = sbr.rel (%p152) target = $region24
    $region23: #{_lambda_.19} parent=5 // pred_region
      // Predicated region
      $region25: #{_lambda_.19} parent=23 // pred_check
        %p155 = pneg %p30
      $region26: #{_lambda_.19} parent=23 // pred_check_branch
        %157 = sbr.rel (%p155) target = $region28
      $region27: #{_lambda_.19} parent=23 // pred_region
        %p158 = scmp.lt.s32.totalorder %s10, 1
        %s159 = scalar_select %p158, %s10, 1
        %s160 = smul.addr %s159, 4
        %s161 = scalar_lea.vmem %s0, %s160
      $region28: #{_lambda_.19} parent=23 // pred_fallthru
        _
      // Predicated region
      $region29: #{_lambda_.19} parent=23 // pred_check
        %p162 = pneg %p56
      $region30: #{_lambda_.19} parent=23 // pred_check_branch
        %164 = sbr.rel (%p162) target = $region32
      $region31: #{_lambda_.19} parent=23 // pred_region
        %p165 = scmp.lt.s32.totalorder %s10, 1
        %s166 = scalar_select %p165, %s10, 1
        %s167 = smul.addr %s166, 8
        %s168 = scalar_lea.vmem %s1, %s167
      $region32: #{_lambda_.19} parent=23 // pred_fallthru
        _
    $region24: #{_lambda_.19} parent=5 // pred_fallthru
      _
    %p169 = scmp.le.s32.totalorder 1, %s10
    %p170 = scmp.lt.s32.totalorder %s10, 3
    %p171 = pnand %p169, %p170
    %p172 = pneg %p171
    // Predicated region
    $region33: #{_lambda_.19} parent=5 // pred_check
      _
    $region34: #{_lambda_.19} parent=5 // pred_check_branch
      %174 = sbr.rel (%p171) target = $region36
    $region35: #{_lambda_.19} parent=5 // pred_region
      %s175 = ssub.s32 %s10, 1
      %p176 = scmp.lt.s32.totalorder %s15, 1
      %s177 = scalar_select %p176, %s15, 1
      %s178 = smul.addr %s177, 4
      %s179 = scalar_lea.vmem %s0, %s178
      %p180 = pneg %p36
      %p181 = pneg %p33
      %p182 = scmp.lt.s32.totalorder %s15, 1
      %s183 = scalar_select %p182, %s15, 1
      %s184 = smul.addr %s183, 8
      %s185 = scalar_lea.vmem %s1, %s184
      %p186 = pneg %p62
      %p187 = pneg %p59
      %p188 = pneg %p83
      %p189 = pneg %p80
      %p190 = pneg %p104
      %p191 = pneg %p101
      %p192 = pneg %p130
      %p193 = pneg %p127
      %p194 = scmp.lt.s32.totalorder %s15, 1
      %s195 = scalar_select %p194, %s15, 1
      %s196 = smul.addr %s195, 8
      %s197 = scalar_lea.vmem %s4, %s196
      %p198 = scmp.lt.s32.totalorder %s15, 1
      %s199 = scalar_select %p198, %s15, 1
      %s200 = smul.addr %s199, 4
      %s201 = scalar_lea.vmem %s0, %s200
      %p202 = scmp.lt.s32.totalorder %s15, 1
      %s203 = scalar_select %p202, %s15, 1
      %s204 = smul.addr %s203, 8
      %s205 = scalar_lea.vmem %s1, %s204
      %p206 = scmp.lt.s32.totalorder %s15, 1
      %s207 = scalar_select %p206, %s15, 1
      %s208 = smul.addr %s207, 8
      %s209 = scalar_lea.vmem %s4, %s208
      %v211 = vld [vmem:[%s201] sm:$0xf]
      %v212 = vld [vmem:[%s2] sm:$0xf]
      %v213 = vld [vmem:[%s2 + $0x4] sm:$0xf]
      %v214 = vld [vmem:[%s2 + $0x8] sm:$0xf]
      %v215 = vld [vmem:[%s2 + $0xc] sm:$0xf]
      %v216 = vld [vmem:[%s3] sm:$0x1]
      %v217 = vperm.slane %v216, 0
      %v222 = vunpack.c.l.b16 %v212
      %v223 = vunpack.c.l.b16 %v213
      %v224 = vunpack.c.l.b16 %v214
      %v225 = vunpack.c.l.b16 %v215
      %v226 = vpack.c.b16 %v223, %v222
      %v227 = vpack.c.b16 %v225, %v224
      %vm230 = vcmask 261120
      %v232 = vsel %vm230, %v211, 0
      %234 = vmatpush.bf16.msra.mxu0 0
      %235 = vmatpush.bf16.msra.mxu0 0
      %236 = vmatpush.bf16.msra.mxu0 0
      %237 = vmatpush.bf16.msra.mxu0 0
      %238 = vmatpush.bf16.msra.mxu0 0
      %239 = vmatpush.bf16.msra.mxu0 0
      %240 = vmatpush.bf16.msra.mxu0 %v227
      %241 = vmatpush.bf16.msra.mxu0 %v226
      %242 = vmatmul.bf16.gmra.mxu0 %v232
      %v243 = vpop.f32.mrf.mxu0
      %v244 = vadd.f32 %v217, %v243
      %v245 = vpop.f32.mrf.mxu0
      %246 = vdwg.mxu0
      %v247 = vld [vmem:[%s205] sm:$0xff]
      %v248 = vadd.f32 %v247, %v244
      %v249 = vld [vmem:[%s3 + $0x1] sm:$0x1]
      %v250 = vld [vmem:[%s3 + $0x2] sm:$0x1]
      %v251 = vsel %vm230, %v248, 0.0
      %252 = vadd.xlane.f32.xlu0 %v251
      %v253 = vpop.xlane.xlu0 %252
      %v254 = vrcp.pop 32.0
      %v255 = vmul.f32 32.0, %v254
      %v256 = vsub.f32 1.0, %v255
      %v257 = vmul.f32 %v254, %v256
      %v258 = vadd.f32 %v254, %v257
      %vm259 = vweird.f32 %v254
      %v260 = vsel %vm259, %v254, %v258
      %v261 = vmul.f32 %v253, %v260
      %v262 = vsub.f32 %v248, %v261
      %v263 = vmul.f32 %v262, %v262
      %v264 = vsel %vm230, %v263, 0.0
      %265 = vadd.xlane.f32.xlu0 %v264
      %v266 = vpop.xlane.xlu0 %265
      %v267 = vmul.f32 %v266, %v260
      %v268 = vadd.f32 %v267, 1e-05
      %v269 = vrsqrt.pop %v268
      %v270 = vmul.f32 %v269, %v268
      %v271 = vmul.f32 %v270, %v269
      %v272 = vmul.f32 0.5, %v271
      %v273 = vsub.f32 1.5, %v272
      %v274 = vmul.f32 %v269, %v273
      %vm275 = vweird.f32 %v268
      %vm276 = vweird.f32 %v269
      %vm277 = vmor %vm275, %vm276
      %v278 = vsel %vm277, %v269, %v274
      %v279 = vmul.f32 %v262, %v278
      %v280 = vperm.slane %v249, 0
      %v281 = vmul.f32 %v279, %v280
      %v282 = vperm.slane %v250, 0
      %v283 = vadd.f32 %v281, %v282
      %284 = vst.msk [vmem:[%s209] sm:$0xff] %vm230, %v283
      %p285 = scmp.lt.s32.totalorder %s15, 1
      %s286 = scalar_select %p285, %s15, 1
      %s287 = smul.addr %s286, 8
      %s288 = scalar_lea.vmem %s4, %s287
      // Predicated region
      $region37: #{_lambda_.19} parent=35 // pred_check
        %p289 = pneg %p127
      $region38: #{_lambda_.19} parent=35 // pred_check_branch
        %291 = sbr.rel (%p289) target = $region40
      $region39: #{_lambda_.19} parent=35 // pred_region
        _
      $region40: #{_lambda_.19} parent=35 // pred_fallthru
        _
    $region36: #{_lambda_.19} parent=5 // pred_fallthru
      _
    %p292 = scmp.le.s32.totalorder 2, %s10
    // Predicated region
    $region41: #{_lambda_.19} parent=5 // pred_check
      %p293 = pneg %p292
    $region42: #{_lambda_.19} parent=5 // pred_check_branch
      %295 = sbr.rel (%p293) target = $region44
    $region43: #{_lambda_.19} parent=5 // pred_region
      %s296 = ssub.s32 %s10, 2
      // Predicated region
      $region45: #{_lambda_.19} parent=43 // pred_check
        %p297 = pneg %p133
      $region46: #{_lambda_.19} parent=43 // pred_check_branch
        %299 = sbr.rel (%p297) target = $region48
      $region47: #{_lambda_.19} parent=43 // pred_region
        %p300 = scmp.lt.s32.totalorder %s16, 1
        %s301 = scalar_select %p300, %s16, 1
        %s302 = smul.addr %s301, 8
        %s303 = scalar_lea.vmem %s4, %s302
      $region48: #{_lambda_.19} parent=43 // pred_fallthru
        _
    $region44: #{_lambda_.19} parent=5 // pred_fallthru
      _
  $region6: #{_lambda_.19} parent=0 // loop_footer
    %s14 = sadd.s32 1, %s10
  $region7: #{_lambda_.19} parent=0 // loop_footer_branch
    %9 = sbr.rel target = $region3
  $region8: #{_lambda_.19} parent=0 // loop_exit
    _

// kernel: _lambda_.21
$region0: #{_lambda_.21}
  #allocation0 [shape = 'u32[]', space=smem, size = 0x4, offset = 0x4, fixed_abs, tag = 'smem constant byte address 0x4 - core index']
  #allocation1 [shape = 'u32[72,128]{1,0:T(1,128)}', space=vmem, size = 0x9000, scoped, tag = 'internal scratch']
  %s0 = inlined_call_operand.vmem [shape: bf16[16,16,32], index: 0, kind: input, shape index: {}]
  %s1 = inlined_call_operand.vmem [shape: bf16[16,32,8], index: 1, kind: input, shape index: {}]
  %s2 = inlined_call_operand.vmem [shape: bf16[16,8,32], index: 2, kind: input, shape index: {}]
  %s3 = inlined_call_operand.vmem [shape: f32[2,8], index: 3, kind: input, shape index: {}]
  %s4 = inlined_call_operand.vmem [shape: f32[2,32], index: 4, kind: input, shape index: {}]
  %s5 = inlined_call_operand.vmem [shape: bf16[16,16,32], index: 5, kind: output, shape index: {}]
  %s6 = sld [smem:[#allocation0]]
  $region53: #{_lambda_.21} parent=0
    _
  %s8 = ssub.s32 1, %s6
  %s9 = scalar_select 0, %s8, %s6
  loop: start=0, step=1, limit=4
  $region2: #{_lambda_.21} parent=0 // loop_pre_header
    _
  $region3: #{_lambda_.21} parent=0 // loop_header
    %s11 = sphi 0, %s15
    %p12 = scmp.ge.s32.totalorder %s11, 4
    %s21 = sphi 0, %s23
    %s24 = sphi 0, %s21
    %s25 = sphi 0, %s24
    %s41 = sphi 0, %s25
    %s47 = sphi 0, %s49
    %s50 = sphi 0, %s47
    %s51 = sphi 0, %s50
    %s67 = sphi 0, %s51
    %s73 = sphi 0, %s75
    %s76 = sphi 0, %s73
    %s77 = sphi 0, %s76
    %s93 = sphi 0, %s77
    %s97 = sphi 0, %s97
    %s99 = sphi 0, %s97
    %s100 = sphi 0, %s99
    %s114 = sphi 0, %s100
    %s118 = sphi 0, %s118
    %s120 = sphi 0, %s118
    %s121 = sphi 0, %s120
    %s135 = sphi 0, %s121
    %s141 = sphi 0, %s143
    %s144 = sphi 0, %s141
    %s145 = sphi 0, %s144
    %s161 = sphi 0, %s145
  $region4: #{_lambda_.21} parent=0 // loop_header_branch
    %14 = sbr.rel (%p12) target = $region8
  $region5: #{_lambda_.21} parent=0 // loop_body
    %s16 = ssub.s32 %s11, 1
    %s17 = ssub.s32 %s11, 2
    %s18 = sadd.s32 %s11, 1
    %s19 = ssub.s32 %s11, %s18
    %p20 = scmp.eq.s32.totalorder %s19, 0
    %s22 = sadd.s32 %s21, 1
    %s23 = scalar_select %p20, %s21, %s22
    %p26 = pneg %p20
    %p27 = scmp.eq.s32.totalorder %s11, 1
    %p28 = por %p26, %p27
    %p29 = scmp.ne.s32.totalorder %s21, %s24
    %p30 = scmp.eq.s32.totalorder %s11, 0
    %p31 = por %p29, %p30
    %p32 = scmp.ne.s32.totalorder %s21, %s24
    %p33 = scmp.eq.s32.totalorder %s16, 1
    %p34 = por %p32, %p33
    %p35 = scmp.ne.s32.totalorder %s24, %s25
    %p36 = scmp.eq.s32.totalorder %s16, 0
    %p37 = por %p35, %p36
    %p38 = scmp.ne.s32.totalorder %s24, %s25
    %p39 = scmp.eq.s32.totalorder %s17, 1
    %p40 = por %p38, %p39
    %p42 = scmp.ne.s32.totalorder %s25, %s41
    %p43 = scmp.eq.s32.totalorder %s17, 0
    %p44 = por %p42, %p43
    %s45 = ssub.s32 %s11, %s18
    %p46 = scmp.eq.s32.totalorder %s45, 0
    %s48 = sadd.s32 %s47, 1
    %s49 = scalar_select %p46, %s47, %s48
    %p52 = pneg %p46
    %p53 = scmp.eq.s32.totalorder %s11, 1
    %p54 = por %p52, %p53
    %p55 = scmp.ne.s32.totalorder %s47, %s50
    %p56 = scmp.eq.s32.totalorder %s11, 0
    %p57 = por %p55, %p56
    %p58 = scmp.ne.s32.totalorder %s47, %s50
    %p59 = scmp.eq.s32.totalorder %s16, 1
    %p60 = por %p58, %p59
    %p61 = scmp.ne.s32.totalorder %s50, %s51
    %p62 = scmp.eq.s32.totalorder %s16, 0
    %p63 = por %p61, %p62
    %p64 = scmp.ne.s32.totalorder %s50, %s51
    %p65 = scmp.eq.s32.totalorder %s17, 1
    %p66 = por %p64, %p65
    %p68 = scmp.ne.s32.totalorder %s51, %s67
    %p69 = scmp.eq.s32.totalorder %s17, 0
    %p70 = por %p68, %p69
    %s71 = ssub.s32 %s11, %s18
    %p72 = scmp.eq.s32.totalorder %s71, 0
    %s74 = sadd.s32 %s73, 1
    %s75 = scalar_select %p72, %s73, %s74
    %p78 = pneg %p72
    %p79 = scmp.eq.s32.totalorder %s11, 1
    %p80 = por %p78, %p79
    %p81 = scmp.ne.s32.totalorder %s73, %s76
    %p82 = scmp.eq.s32.totalorder %s11, 0
    %p83 = por %p81, %p82
    %p84 = scmp.ne.s32.totalorder %s73, %s76
    %p85 = scmp.eq.s32.totalorder %s16, 1
    %p86 = por %p84, %p85
    %p87 = scmp.ne.s32.totalorder %s76, %s77
    %p88 = scmp.eq.s32.totalorder %s16, 0
    %p89 = por %p87, %p88
    %p90 = scmp.ne.s32.totalorder %s76, %s77
    %p91 = scmp.eq.s32.totalorder %s17, 1
    %p92 = por %p90, %p91
    %p94 = scmp.ne.s32.totalorder %s77, %s93
    %p95 = scmp.eq.s32.totalorder %s17, 0
    %p96 = por %p94, %p95
    %s98 = sadd.s32 %s97, 1
    %p101 = scmp.eq.s32.totalorder %s11, 1
    %p102 = scmp.ne.s32.totalorder %s97, %s99
    %p103 = scmp.eq.s32.totalorder %s11, 0
    %p104 = por %p102, %p103
    %p105 = scmp.ne.s32.totalorder %s97, %s99
    %p106 = scmp.eq.s32.totalorder %s16, 1
    %p107 = por %p105, %p106
    %p108 = scmp.ne.s32.totalorder %s99, %s100
    %p109 = scmp.eq.s32.totalorder %s16, 0
    %p110 = por %p108, %p109
    %p111 = scmp.ne.s32.totalorder %s99, %s100
    %p112 = scmp.eq.s32.totalorder %s17, 1
    %p113 = por %p111, %p112
    %p115 = scmp.ne.s32.totalorder %s100, %s114
    %p116 = scmp.eq.s32.totalorder %s17, 0
    %p117 = por %p115, %p116
    %s119 = sadd.s32 %s118, 1
    %p122 = scmp.eq.s32.totalorder %s11, 1
    %p123 = scmp.ne.s32.totalorder %s118, %s120
    %p124 = scmp.eq.s32.totalorder %s11, 0
    %p125 = por %p123, %p124
    %p126 = scmp.ne.s32.totalorder %s118, %s120
    %p127 = scmp.eq.s32.totalorder %s16, 1
    %p128 = por %p126, %p127
    %p129 = scmp.ne.s32.totalorder %s120, %s121
    %p130 = scmp.eq.s32.totalorder %s16, 0
    %p131 = por %p129, %p130
    %p132 = scmp.ne.s32.totalorder %s120, %s121
    %p133 = scmp.eq.s32.totalorder %s17, 1
    %p134 = por %p132, %p133
    %p136 = scmp.ne.s32.totalorder %s121, %s135
    %p137 = scmp.eq.s32.totalorder %s17, 0
    %p138 = por %p136, %p137
    %s139 = ssub.s32 %s11, %s18
    %p140 = scmp.eq.s32.totalorder %s139, 0
    %s142 = sadd.s32 %s141, 1
    %s143 = scalar_select %p140, %s141, %s142
    %p146 = pneg %p140
    %p147 = scmp.eq.s32.totalorder %s11, 1
    %p148 = por %p146, %p147
    %p149 = scmp.ne.s32.totalorder %s141, %s144
    %p150 = scmp.eq.s32.totalorder %s11, 0
    %p151 = por %p149, %p150
    %p152 = scmp.ne.s32.totalorder %s141, %s144
    %p153 = scmp.eq.s32.totalorder %s16, 1
    %p154 = por %p152, %p153
    %p155 = scmp.ne.s32.totalorder %s144, %s145
    %p156 = scmp.eq.s32.totalorder %s16, 0
    %p157 = por %p155, %p156
    %p158 = scmp.ne.s32.totalorder %s144, %s145
    %p159 = scmp.eq.s32.totalorder %s17, 1
    %p160 = por %p158, %p159
    %p162 = scmp.ne.s32.totalorder %s145, %s161
    %p163 = scmp.eq.s32.totalorder %s17, 0
    %p164 = por %p162, %p163
    %p165 = scmp.le.s32.totalorder 1, %s11
    %p166 = scmp.lt.s32.totalorder %s11, 3
    %p167 = pnand %p165, %p166
    %p168 = pneg %p167
    // Predicated region
    $region9: #{_lambda_.21} parent=5 // pred_check
      _
    $region10: #{_lambda_.21} parent=5 // pred_check_branch
      %170 = sbr.rel (%p167) target = $region12
    $region11: #{_lambda_.21} parent=5 // pred_region
      %s171 = ssub.s32 %s11, 1
      // Predicated region
      $region13: #{_lambda_.21} parent=11 // pred_check
        %p172 = pneg %p110
      $region14: #{_lambda_.21} parent=11 // pred_check_branch
        %174 = sbr.rel (%p172) target = $region16
      $region15: #{_lambda_.21} parent=11 // pred_region
        _
      $region16: #{_lambda_.21} parent=11 // pred_fallthru
        _
      // Predicated region
      $region17: #{_lambda_.21} parent=11 // pred_check
        %p175 = pneg %p131
      $region18: #{_lambda_.21} parent=11 // pred_check_branch
        %177 = sbr.rel (%p175) target = $region20
      $region19: #{_lambda_.21} parent=11 // pred_region
        _
      $region20: #{_lambda_.21} parent=11 // pred_fallthru
        _
    $region12: #{_lambda_.21} parent=5 // pred_fallthru
      _
    %p178 = scmp.lt.s32.totalorder %s11, 2
    // Predicated region
    $region21: #{_lambda_.21} parent=5 // pred_check
      %p179 = pneg %p178
    $region22: #{_lambda_.21} parent=5 // pred_check_branch
      %181 = sbr.rel (%p179) target = $region24
    $region23: #{_lambda_.21} parent=5 // pred_region
      // Predicated region
      $region25: #{_lambda_.21} parent=23 // pred_check
        %p182 = pneg %p31
      $region26: #{_lambda_.21} parent=23 // pred_check_branch
        %184 = sbr.rel (%p182) target = $region28
      $region27: #{_lambda_.21} parent=23 // pred_region
        %s185 = smul.u32 8, %s11
        %p186 = scmp.lt.s32.totalorder %s185, 15
        %s187 = scalar_select %p186, %s185, 15
        %s188 = smul.addr %s187, 2
        %s189 = smul.addr %s188, 4
        %s190 = scalar_lea.vmem %s0, %s189
        %s191 = smul.u32 8, %s11
      $region28: #{_lambda_.21} parent=23 // pred_fallthru
        _
      // Predicated region
      $region29: #{_lambda_.21} parent=23 // pred_check
        %p192 = pneg %p57
      $region30: #{_lambda_.21} parent=23 // pred_check_branch
        %194 = sbr.rel (%p192) target = $region32
      $region31: #{_lambda_.21} parent=23 // pred_region
        %s195 = smul.u32 8, %s11
        %p196 = scmp.lt.s32.totalorder %s195, 15
        %s197 = scalar_select %p196, %s195, 15
        %s198 = smul.addr %s197, 4
        %s199 = smul.addr %s198, 4
        %s200 = scalar_lea.vmem %s1, %s199
        %s201 = smul.u32 8, %s11
      $region32: #{_lambda_.21} parent=23 // pred_fallthru
        _
      // Predicated region
      $region33: #{_lambda_.21} parent=23 // pred_check
        %p202 = pneg %p83
      $region34: #{_lambda_.21} parent=23 // pred_check_branch
        %204 = sbr.rel (%p202) target = $region36
      $region35: #{_lambda_.21} parent=23 // pred_region
        %s205 = smul.u32 8, %s11
        %p206 = scmp.lt.s32.totalorder %s205, 15
        %s207 = scalar_select %p206, %s205, 15
        %s208 = smul.addr %s207, 4
        %s209 = scalar_lea.vmem %s2, %s208
        %s210 = smul.u32 8, %s11
      $region36: #{_lambda_.21} parent=23 // pred_fallthru
        _
    $region24: #{_lambda_.21} parent=5 // pred_fallthru
      _
    %p211 = scmp.le.s32.totalorder 1, %s11
    %p212 = scmp.lt.s32.totalorder %s11, 3
    %p213 = pnand %p211, %p212
    %p214 = pneg %p213
    // Predicated region
    $region37: #{_lambda_.21} parent=5 // pred_check
      _
    $region38: #{_lambda_.21} parent=5 // pred_check_branch
      %216 = sbr.rel (%p213) target = $region40
    $region39: #{_lambda_.21} parent=5 // pred_region
      %s217 = ssub.s32 %s11, 1
      %s218 = smul.u32 8, %s16
      %p219 = scmp.lt.s32.totalorder %s218, 15
      %s220 = scalar_select %p219, %s218, 15
      %s221 = smul.addr %s220, 2
      %s222 = smul.addr %s221, 4
      %s223 = scalar_lea.vmem %s0, %s222
      %p224 = pneg %p37
      %p225 = pneg %p34
      %s226 = smul.u32 8, %s16
      %p227 = scmp.lt.s32.totalorder %s226, 15
      %s228 = scalar_select %p227, %s226, 15
      %s229 = smul.addr %s228, 4
      %s230 = smul.addr %s229, 4
      %s231 = scalar_lea.vmem %s1, %s230
      %p232 = pneg %p63
      %p233 = pneg %p60
      %s234 = smul.u32 8, %s16
      %p235 = scmp.lt.s32.totalorder %s234, 15
      %s236 = scalar_select %p235, %s234, 15
      %s237 = smul.addr %s236, 4
      %s238 = scalar_lea.vmem %s2, %s237
      %p239 = pneg %p89
      %p240 = pneg %p86
      %p241 = pneg %p110
      %p242 = pneg %p107
      %p243 = pneg %p131
      %p244 = pneg %p128
      %p245 = pneg %p157
      %p246 = pneg %p154
      %s247 = smul.u32 8, %s16
      %p248 = scmp.lt.s32.totalorder %s247, 15
      %s249 = scalar_select %p248, %s247, 15
      %s250 = smul.addr %s249, 2
      %s251 = smul.addr %s250, 4
      %s252 = scalar_lea.vmem %s5, %s251
      %s253 = smul.u32 8, %s16
      %p254 = scmp.lt.s32.totalorder %s253, 15
      %s255 = scalar_select %p254, %s253, 15
      %s256 = smul.addr %s255, 2
      %s257 = smul.addr %s256, 4
      %s258 = scalar_lea.vmem %s0, %s257
      %s259 = smul.u32 8, %s16
      %s260 = smul.u32 8, %s16
      %p261 = scmp.lt.s32.totalorder %s260, 15
      %s262 = scalar_select %p261, %s260, 15
      %s263 = smul.addr %s262, 4
      %s264 = smul.addr %s263, 4
      %s265 = scalar_lea.vmem %s1, %s264
      %s266 = smul.u32 8, %s16
      %s267 = smul.u32 8, %s16
      %p268 = scmp.lt.s32.totalorder %s267, 15
      %s269 = scalar_select %p268, %s267, 15
      %s270 = smul.addr %s269, 4
      %s271 = scalar_lea.vmem %s2, %s270
      %s272 = smul.u32 8, %s16
      %s273 = smul.u32 8, %s16
      %p274 = scmp.lt.s32.totalorder %s273, 15
      %s275 = scalar_select %p274, %s273, 15
      %s276 = smul.addr %s275, 2
      %s277 = smul.addr %s276, 4
      %s278 = scalar_lea.vmem %s5, %s277
      %s279 = smul.u32 8, %s16
      %v281 = vld [vmem:[%s3] sm:$0x1]
      %v282 = vld [vmem:[%s3 + $0x1] sm:$0x1]
      %v283 = vld [vmem:[%s4] sm:$0x1]
      %v284 = vld [vmem:[%s4 + $0x1] sm:$0x1]
      %v285 = vld [vmem:[%s258] sm:$0xf]
      %v286 = vld [vmem:[%s258 + $0x4] sm:$0xf]
      %v287 = vld [vmem:[%s258 + $0x8] sm:$0xf]
      %v288 = vld [vmem:[%s258 + $0xc] sm:$0xf]
      %v289 = vld [vmem:[%s258 + $0x10] sm:$0xf]
      %v290 = vld [vmem:[%s258 + $0x14] sm:$0xf]
      %v291 = vld [vmem:[%s258 + $0x18] sm:$0xf]
      %v292 = vld [vmem:[%s258 + $0x1c] sm:$0xf]
      %v293 = vld [vmem:[%s258 + $0x20] sm:$0xf]
      %v294 = vld [vmem:[%s258 + $0x24] sm:$0xf]
      %v295 = vld [vmem:[%s258 + $0x28] sm:$0xf]
      %v296 = vld [vmem:[%s258 + $0x2c] sm:$0xf]
      %v297 = vld [vmem:[%s258 + $0x30] sm:$0xf]
      %v298 = vld [vmem:[%s258 + $0x34] sm:$0xf]
      %v299 = vld [vmem:[%s258 + $0x38] sm:$0xf]
      %v300 = vld [vmem:[%s258 + $0x3c] sm:$0xf]
      %v301 = vld [vmem:[%s265] sm:$0xf]
      %v302 = vld [vmem:[%s265 + $0x4] sm:$0xf]
      %v303 = vld [vmem:[%s265 + $0x8] sm:$0xf]
      %v304 = vld [vmem:[%s265 + $0xc] sm:$0xf]
      %v305 = vld [vmem:[%s265 + $0x10] sm:$0xf]
      %v306 = vld [vmem:[%s265 + $0x14] sm:$0xf]
      %v307 = vld [vmem:[%s265 + $0x18] sm:$0xf]
      %v308 = vld [vmem:[%s265 + $0x1c] sm:$0xf]
      %v309 = vld [vmem:[%s265 + $0x20] sm:$0xf]
      %v310 = vld [vmem:[%s265 + $0x24] sm:$0xf]
      %v311 = vld [vmem:[%s265 + $0x28] sm:$0xf]
      %v312 = vld [vmem:[%s265 + $0x2c] sm:$0xf]
      %v313 = vld [vmem:[%s265 + $0x30] sm:$0xf]
      %v314 = vld [vmem:[%s265 + $0x34] sm:$0xf]
      %v315 = vld [vmem:[%s265 + $0x38] sm:$0xf]
      %v316 = vld [vmem:[%s265 + $0x3c] sm:$0xf]
      %v317 = vld [vmem:[%s265 + $0x40] sm:$0xf]
      %v318 = vld [vmem:[%s265 + $0x44] sm:$0xf]
      %v319 = vld [vmem:[%s265 + $0x48] sm:$0xf]
      %v320 = vld [vmem:[%s265 + $0x4c] sm:$0xf]
      %v321 = vld [vmem:[%s265 + $0x50] sm:$0xf]
      %v322 = vld [vmem:[%s265 + $0x54] sm:$0xf]
      %v323 = vld [vmem:[%s265 + $0x58] sm:$0xf]
      %v324 = vld [vmem:[%s265 + $0x5c] sm:$0xf]
      %v325 = vld [vmem:[%s265 + $0x60] sm:$0xf]
      %v326 = vld [vmem:[%s265 + $0x64] sm:$0xf]
      %v327 = vld [vmem:[%s265 + $0x68] sm:$0xf]
      %v328 = vld [vmem:[%s265 + $0x6c] sm:$0xf]
      %v329 = vld [vmem:[%s265 + $0x70] sm:$0xf]
      %v330 = vld [vmem:[%s265 + $0x74] sm:$0xf]
      %v331 = vld [vmem:[%s265 + $0x78] sm:$0xf]
      %v332 = vld [vmem:[%s265 + $0x7c] sm:$0xf]
      %v335 = vunpack.c.l.b16 %v285
      %v336 = vunpack.c.l.b16 %v286
      %v337 = vpack.c.b16 %v336, %v335
      %v342 = vunpack.c.l.b16 %v301
      %v343 = vunpack.c.l.b16 %v302
      %v344 = vunpack.c.l.b16 %v303
      %v345 = vunpack.c.l.b16 %v304
      %v346 = vpack.c.b16 %v343, %v342
      %v347 = vpack.c.b16 %v345, %v344
      %vm350 = vcmask 261120
      %v352 = vsel %vm350, %v337, 0
      %354 = vmatpush.bf16.msra.mxu0 0
      %355 = vmatpush.bf16.msra.mxu0 0
      %356 = vmatpush.bf16.msra.mxu0 0
      %357 = vmatpush.bf16.msra.mxu0 0
      %358 = vmatpush.bf16.msra.mxu0 0
      %359 = vmatpush.bf16.msra.mxu0 0
      %360 = vmatpush.bf16.msra.mxu0 %v347
      %361 = vmatpush.bf16.msra.mxu0 %v346
      %362 = vmatmul.bf16.gmra.mxu0 %v352
      %v363 = vpop.f32.mrf.mxu0
      %v364 = vadd.f32 0.0, %v363
      %v365 = vpop.f32.mrf.mxu0
      %v366 = vadd.f32 0.0, %v365
      %367 = vdwg.mxu0
      %v370 = vunpack.c.l.b16 %v287
      %v371 = vunpack.c.l.b16 %v288
      %v372 = vpack.c.b16 %v371, %v370
      %v377 = vunpack.c.l.b16 %v305
      %v378 = vunpack.c.l.b16 %v306
      %v379 = vunpack.c.l.b16 %v307
      %v380 = vunpack.c.l.b16 %v308
      %v381 = vpack.c.b16 %v378, %v377
      %v382 = vpack.c.b16 %v380, %v379
      %v386 = vsel %vm350, %v372, 0
      %388 = vmatpush.bf16.msra.mxu0 0
      %389 = vmatpush.bf16.msra.mxu0 0
      %390 = vmatpush.bf16.msra.mxu0 0
      %391 = vmatpush.bf16.msra.mxu0 0
      %392 = vmatpush.bf16.msra.mxu0 0
      %393 = vmatpush.bf16.msra.mxu0 0
      %394 = vmatpush.bf16.msra.mxu0 %v382
      %395 = vmatpush.bf16.msra.mxu0 %v381
      %396 = vmatmul.bf16.gmra.mxu0 %v386
      %v397 = vpop.f32.mrf.mxu0
      %v398 = vadd.f32 0.0, %v397
      %v399 = vpop.f32.mrf.mxu0
      %v400 = vadd.f32 0.0, %v399
      %401 = vdwg.mxu0
      %v404 = vunpack.c.l.b16 %v289
      %v405 = vunpack.c.l.b16 %v290
      %v406 = vpack.c.b16 %v405, %v404
      %v411 = vunpack.c.l.b16 %v309
      %v412 = vunpack.c.l.b16 %v310
      %v413 = vunpack.c.l.b16 %v311
      %v414 = vunpack.c.l.b16 %v312
      %v415 = vpack.c.b16 %v412, %v411
      %v416 = vpack.c.b16 %v414, %v413
      %v420 = vsel %vm350, %v406, 0
      %422 = vmatpush.bf16.msra.mxu0 0
      %423 = vmatpush.bf16.msra.mxu0 0
      %424 = vmatpush.bf16.msra.mxu0 0
      %425 = vmatpush.bf16.msra.mxu0 0
      %426 = vmatpush.bf16.msra.mxu0 0
      %427 = vmatpush.bf16.msra.mxu0 0
      %428 = vmatpush.bf16.msra.mxu0 %v416
      %429 = vmatpush.bf16.msra.mxu0 %v415
      %430 = vmatmul.bf16.gmra.mxu0 %v420
      %v431 = vpop.f32.mrf.mxu0
      %v432 = vadd.f32 0.0, %v431
      %v433 = vpop.f32.mrf.mxu0
      %v434 = vadd.f32 0.0, %v433
      %435 = vdwg.mxu0
      %v438 = vunpack.c.l.b16 %v291
      %v439 = vunpack.c.l.b16 %v292
      %v440 = vpack.c.b16 %v439, %v438
      %v445 = vunpack.c.l.b16 %v313
      %v446 = vunpack.c.l.b16 %v314
      %v447 = vunpack.c.l.b16 %v315
      %v448 = vunpack.c.l.b16 %v316
      %v449 = vpack.c.b16 %v446, %v445
      %v450 = vpack.c.b16 %v448, %v447
      %v454 = vsel %vm350, %v440, 0
      %456 = vmatpush.bf16.msra.mxu0 0
      %457 = vmatpush.bf16.msra.mxu0 0
      %458 = vmatpush.bf16.msra.mxu0 0
      %459 = vmatpush.bf16.msra.mxu0 0
      %460 = vmatpush.bf16.msra.mxu0 0
      %461 = vmatpush.bf16.msra.mxu0 0
      %462 = vmatpush.bf16.msra.mxu0 %v450
      %463 = vmatpush.bf16.msra.mxu0 %v449
      %464 = vmatmul.bf16.gmra.mxu0 %v454
      %v465 = vpop.f32.mrf.mxu0
      %v466 = vadd.f32 0.0, %v465
      %v467 = vpop.f32.mrf.mxu0
      %v468 = vadd.f32 0.0, %v467
      %469 = vdwg.mxu0
      %v472 = vunpack.c.l.b16 %v293
      %v473 = vunpack.c.l.b16 %v294
      %v474 = vpack.c.b16 %v473, %v472
      %v479 = vunpack.c.l.b16 %v317
      %v480 = vunpack.c.l.b16 %v318
      %v481 = vunpack.c.l.b16 %v319
      %v482 = vunpack.c.l.b16 %v320
      %v483 = vpack.c.b16 %v480, %v479
      %v484 = vpack.c.b16 %v482, %v481
      %v488 = vsel %vm350, %v474, 0
      %490 = vmatpush.bf16.msra.mxu0 0
      %491 = vmatpush.bf16.msra.mxu0 0
      %492 = vmatpush.bf16.msra.mxu0 0
      %493 = vmatpush.bf16.msra.mxu0 0
      %494 = vmatpush.bf16.msra.mxu0 0
      %495 = vmatpush.bf16.msra.mxu0 0
      %496 = vmatpush.bf16.msra.mxu0 %v484
      %497 = vmatpush.bf16.msra.mxu0 %v483
      %498 = vmatmul.bf16.gmra.mxu0 %v488
      %v499 = vpop.f32.mrf.mxu0
      %v500 = vadd.f32 0.0, %v499
      %v501 = vpop.f32.mrf.mxu0
      %v502 = vadd.f32 0.0, %v501
      %503 = vdwg.mxu0
      %v506 = vunpack.c.l.b16 %v295
      %v507 = vunpack.c.l.b16 %v296
      %v508 = vpack.c.b16 %v507, %v506
      %v513 = vunpack.c.l.b16 %v321
      %v514 = vunpack.c.l.b16 %v322
      %v515 = vunpack.c.l.b16 %v323
      %v516 = vunpack.c.l.b16 %v324
      %v517 = vpack.c.b16 %v514, %v513
      %v518 = vpack.c.b16 %v516, %v515
      %v522 = vsel %vm350, %v508, 0
      %524 = vmatpush.bf16.msra.mxu0 0
      %525 = vmatpush.bf16.msra.mxu0 0
      %526 = vmatpush.bf16.msra.mxu0 0
      %527 = vmatpush.bf16.msra.mxu0 0
      %528 = vmatpush.bf16.msra.mxu0 0
      %529 = vmatpush.bf16.msra.mxu0 0
      %530 = vmatpush.bf16.msra.mxu0 %v518
      %531 = vmatpush.bf16.msra.mxu0 %v517
      %532 = vmatmul.bf16.gmra.mxu0 %v522
      %v533 = vpop.f32.mrf.mxu0
      %v534 = vadd.f32 0.0, %v533
      %v535 = vpop.f32.mrf.mxu0
      %v536 = vadd.f32 0.0, %v535
      %537 = vdwg.mxu0
      %v540 = vunpack.c.l.b16 %v297
      %v541 = vunpack.c.l.b16 %v298
      %v542 = vpack.c.b16 %v541, %v540
      %v547 = vunpack.c.l.b16 %v325
      %v548 = vunpack.c.l.b16 %v326
      %v549 = vunpack.c.l.b16 %v327
      %v550 = vunpack.c.l.b16 %v328
      %v551 = vpack.c.b16 %v548, %v547
      %v552 = vpack.c.b16 %v550, %v549
      %v556 = vsel %vm350, %v542, 0
      %558 = vmatpush.bf16.msra.mxu0 0
      %559 = vmatpush.bf16.msra.mxu0 0
      %560 = vmatpush.bf16.msra.mxu0 0
      %561 = vmatpush.bf16.msra.mxu0 0
      %562 = vmatpush.bf16.msra.mxu0 0
      %563 = vmatpush.bf16.msra.mxu0 0
      %564 = vmatpush.bf16.msra.mxu0 %v552
      %565 = vmatpush.bf16.msra.mxu0 %v551
      %566 = vmatmul.bf16.gmra.mxu0 %v556
      %v567 = vpop.f32.mrf.mxu0
      %v568 = vadd.f32 0.0, %v567
      %v569 = vpop.f32.mrf.mxu0
      %v570 = vadd.f32 0.0, %v569
      %571 = vdwg.mxu0
      %v574 = vunpack.c.l.b16 %v299
      %v575 = vunpack.c.l.b16 %v300
      %v576 = vpack.c.b16 %v575, %v574
      %v581 = vunpack.c.l.b16 %v329
      %v582 = vunpack.c.l.b16 %v330
      %v583 = vunpack.c.l.b16 %v331
      %v584 = vunpack.c.l.b16 %v332
      %v585 = vpack.c.b16 %v582, %v581
      %v586 = vpack.c.b16 %v584, %v583
      %v590 = vsel %vm350, %v576, 0
      %592 = vmatpush.bf16.msra.mxu0 0
      %593 = vmatpush.bf16.msra.mxu0 0
      %594 = vmatpush.bf16.msra.mxu0 0
      %595 = vmatpush.bf16.msra.mxu0 0
      %596 = vmatpush.bf16.msra.mxu0 0
      %597 = vmatpush.bf16.msra.mxu0 0
      %598 = vmatpush.bf16.msra.mxu0 %v586
      %599 = vmatpush.bf16.msra.mxu0 %v585
      %600 = vmatmul.bf16.gmra.mxu0 %v590
      %v601 = vpop.f32.mrf.mxu0
      %v602 = vadd.f32 0.0, %v601
      %v603 = vpop.f32.mrf.mxu0
      %v604 = vadd.f32 0.0, %v603
      %605 = vdwg.mxu0
      %vm606 = vcmask 64512
      %v607 = vsel %vm606, %v364, 0.0
      %608 = vadd.xlane.f32.xlu0 %v607
      %v609 = vpop.xlane.xlu0 %608
      %v610 = vsel %vm606, %v366, 0.0
      %611 = vadd.xlane.f32.xlu0 %v610
      %v612 = vpop.xlane.xlu0 %611
      %v613 = vsel %vm606, %v398, 0.0
      %614 = vadd.xlane.f32.xlu0 %v613
      %v615 = vpop.xlane.xlu0 %614
      %v616 = vsel %vm606, %v400, 0.0
      %617 = vadd.xlane.f32.xlu0 %v616
      %v618 = vpop.xlane.xlu0 %617
      %v619 = vsel %vm606, %v432, 0.0
      %620 = vadd.xlane.f32.xlu0 %v619
      %v621 = vpop.xlane.xlu0 %620
      %v622 = vsel %vm606, %v434, 0.0
      %623 = vadd.xlane.f32.xlu0 %v622
      %v624 = vpop.xlane.xlu0 %623
      %v625 = vsel %vm606, %v466, 0.0
      %626 = vadd.xlane.f32.xlu0 %v625
      %v627 = vpop.xlane.xlu0 %626
      %v628 = vsel %vm606, %v468, 0.0
      %629 = vadd.xlane.f32.xlu0 %v628
      %v630 = vpop.xlane.xlu0 %629
      %v631 = vsel %vm606, %v500, 0.0
      %632 = vadd.xlane.f32.xlu0 %v631
      %v633 = vpop.xlane.xlu0 %632
      %v634 = vsel %vm606, %v502, 0.0
      %635 = vadd.xlane.f32.xlu0 %v634
      %v636 = vpop.xlane.xlu0 %635
      %v637 = vsel %vm606, %v534, 0.0
      %638 = vadd.xlane.f32.xlu0 %v637
      %v639 = vpop.xlane.xlu0 %638
      %v640 = vsel %vm606, %v536, 0.0
      %641 = vadd.xlane.f32.xlu0 %v640
      %v642 = vpop.xlane.xlu0 %641
      %v643 = vsel %vm606, %v568, 0.0
      %644 = vadd.xlane.f32.xlu0 %v643
      %v645 = vpop.xlane.xlu0 %644
      %v646 = vsel %vm606, %v570, 0.0
      %647 = vadd.xlane.f32.xlu0 %v646
      %v648 = vpop.xlane.xlu0 %647
      %v649 = vsel %vm606, %v602, 0.0
      %650 = vadd.xlane.f32.xlu0 %v649
      %v651 = vpop.xlane.xlu0 %650
      %v652 = vsel %vm606, %v604, 0.0
      %653 = vadd.xlane.f32.xlu0 %v652
      %v654 = vpop.xlane.xlu0 %653
      %v655 = vrcp.pop 8.0
      %v656 = vmul.f32 8.0, %v655
      %v657 = vsub.f32 1.0, %v656
      %v658 = vmul.f32 %v655, %v657
      %v659 = vadd.f32 %v655, %v658
      %vm660 = vweird.f32 %v655
      %v661 = vsel %vm660, %v655, %v659
      %v662 = vmul.f32 %v609, %v661
      %v663 = vmul.f32 %v612, %v661
      %v664 = vmul.f32 %v615, %v661
      %v665 = vmul.f32 %v618, %v661
      %v666 = vmul.f32 %v621, %v661
      %v667 = vmul.f32 %v624, %v661
      %v668 = vmul.f32 %v627, %v661
      %v669 = vmul.f32 %v630, %v661
      %v670 = vmul.f32 %v633, %v661
      %v671 = vmul.f32 %v636, %v661
      %v672 = vmul.f32 %v639, %v661
      %v673 = vmul.f32 %v642, %v661
      %v674 = vmul.f32 %v645, %v661
      %v675 = vmul.f32 %v648, %v661
      %v676 = vmul.f32 %v651, %v661
      %v677 = vmul.f32 %v654, %v661
      %v678 = vsub.f32 %v364, %v662
      %v679 = vsub.f32 %v366, %v663
      %v680 = vsub.f32 %v398, %v664
      %v681 = vsub.f32 %v400, %v665
      %v682 = vsub.f32 %v432, %v666
      %v683 = vsub.f32 %v434, %v667
      %v684 = vsub.f32 %v466, %v668
      %v685 = vsub.f32 %v468, %v669
      %v686 = vsub.f32 %v500, %v670
      %v687 = vsub.f32 %v502, %v671
      %v688 = vsub.f32 %v534, %v672
      %v689 = vsub.f32 %v536, %v673
      %v690 = vsub.f32 %v568, %v674
      %v691 = vsub.f32 %v570, %v675
      %v692 = vsub.f32 %v602, %v676
      %v693 = vsub.f32 %v604, %v677
      %v694 = vmul.f32 %v678, %v678
      %v695 = vmul.f32 %v679, %v679
      %v696 = vmul.f32 %v680, %v680
      %v697 = vmul.f32 %v681, %v681
      %v698 = vmul.f32 %v682, %v682
      %v699 = vmul.f32 %v683, %v683
      %v700 = vmul.f32 %v684, %v684
      %v701 = vmul.f32 %v685, %v685
      %v702 = vmul.f32 %v686, %v686
      %v703 = vmul.f32 %v687, %v687
      %v704 = vmul.f32 %v688, %v688
      %v705 = vmul.f32 %v689, %v689
      %v706 = vmul.f32 %v690, %v690
      %v707 = vmul.f32 %v691, %v691
      %v708 = vmul.f32 %v692, %v692
      %v709 = vmul.f32 %v693, %v693
      %v710 = vsel %vm606, %v694, 0.0
      %711 = vadd.xlane.f32.xlu0 %v710
      %v712 = vpop.xlane.xlu0 %711
      %v713 = vsel %vm606, %v695, 0.0
      %714 = vadd.xlane.f32.xlu0 %v713
      %v715 = vpop.xlane.xlu0 %714
      %v716 = vsel %vm606, %v696, 0.0
      %717 = vadd.xlane.f32.xlu0 %v716
      %v718 = vpop.xlane.xlu0 %717
      %v719 = vsel %vm606, %v697, 0.0
      %720 = vadd.xlane.f32.xlu0 %v719
      %v721 = vpop.xlane.xlu0 %720
      %v722 = vsel %vm606, %v698, 0.0
      %723 = vadd.xlane.f32.xlu0 %v722
      %v724 = vpop.xlane.xlu0 %723
      %v725 = vsel %vm606, %v699, 0.0
      %726 = vadd.xlane.f32.xlu0 %v725
      %v727 = vpop.xlane.xlu0 %726
      %v728 = vsel %vm606, %v700, 0.0
      %729 = vadd.xlane.f32.xlu0 %v728
      %v730 = vpop.xlane.xlu0 %729
      %v731 = vsel %vm606, %v701, 0.0
      %732 = vadd.xlane.f32.xlu0 %v731
      %v733 = vpop.xlane.xlu0 %732
      %v734 = vsel %vm606, %v702, 0.0
      %735 = vadd.xlane.f32.xlu0 %v734
      %v736 = vpop.xlane.xlu0 %735
      %v737 = vsel %vm606, %v703, 0.0
      %738 = vadd.xlane.f32.xlu0 %v737
      %v739 = vpop.xlane.xlu0 %738
      %v740 = vsel %vm606, %v704, 0.0
      %741 = vadd.xlane.f32.xlu0 %v740
      %v742 = vpop.xlane.xlu0 %741
      %v743 = vsel %vm606, %v705, 0.0
      %744 = vadd.xlane.f32.xlu0 %v743
      %v745 = vpop.xlane.xlu0 %744
      %v746 = vsel %vm606, %v706, 0.0
      %747 = vadd.xlane.f32.xlu0 %v746
      %v748 = vpop.xlane.xlu0 %747
      %v749 = vsel %vm606, %v707, 0.0
      %750 = vadd.xlane.f32.xlu0 %v749
      %v751 = vpop.xlane.xlu0 %750
      %v752 = vsel %vm606, %v708, 0.0
      %753 = vadd.xlane.f32.xlu0 %v752
      %v754 = vpop.xlane.xlu0 %753
      %v755 = vsel %vm606, %v709, 0.0
      %756 = vadd.xlane.f32.xlu0 %v755
      %v757 = vpop.xlane.xlu0 %756
      %v758 = vmul.f32 %v712, %v661
      %v759 = vmul.f32 %v715, %v661
      %v760 = vmul.f32 %v718, %v661
      %v761 = vmul.f32 %v721, %v661
      %v762 = vmul.f32 %v724, %v661
      %v763 = vmul.f32 %v727, %v661
      %v764 = vmul.f32 %v730, %v661
      %v765 = vmul.f32 %v733, %v661
      %v766 = vmul.f32 %v736, %v661
      %v767 = vmul.f32 %v739, %v661
      %v768 = vmul.f32 %v742, %v661
      %v769 = vmul.f32 %v745, %v661
      %v770 = vmul.f32 %v748, %v661
      %v771 = vmul.f32 %v751, %v661
      %v772 = vmul.f32 %v754, %v661
      %v773 = vmul.f32 %v757, %v661
      %v774 = vadd.f32 %v758, 1e-05
      %v775 = vadd.f32 %v759, 1e-05
      %v776 = vadd.f32 %v760, 1e-05
      %v777 = vadd.f32 %v761, 1e-05
      %v778 = vadd.f32 %v762, 1e-05
      %v779 = vadd.f32 %v763, 1e-05
      %v780 = vadd.f32 %v764, 1e-05
      %v781 = vadd.f32 %v765, 1e-05
      %v782 = vadd.f32 %v766, 1e-05
      %v783 = vadd.f32 %v767, 1e-05
      %v784 = vadd.f32 %v768, 1e-05
      %v785 = vadd.f32 %v769, 1e-05
      %v786 = vadd.f32 %v770, 1e-05
      %v787 = vadd.f32 %v771, 1e-05
      %v788 = vadd.f32 %v772, 1e-05
      %v789 = vadd.f32 %v773, 1e-05
      %v790 = vrsqrt.pop %v774
      %v791 = vmul.f32 %v790, %v774
      %v792 = vmul.f32 %v791, %v790
      %v793 = vmul.f32 0.5, %v792
      %v794 = vsub.f32 1.5, %v793
      %v795 = vmul.f32 %v790, %v794
      %vm796 = vweird.f32 %v774
      %vm797 = vweird.f32 %v790
      %vm798 = vmor %vm796, %vm797
      %v799 = vsel %vm798, %v790, %v795
      %v800 = vrsqrt.pop %v775
      %v801 = vmul.f32 %v800, %v775
      %v802 = vmul.f32 %v801, %v800
      %v803 = vmul.f32 0.5, %v802
      %v804 = vsub.f32 1.5, %v803
      %v805 = vmul.f32 %v800, %v804
      %vm806 = vweird.f32 %v775
      %vm807 = vweird.f32 %v800
      %vm808 = vmor %vm806, %vm807
      %v809 = vsel %vm808, %v800, %v805
      %v810 = vrsqrt.pop %v776
      %v811 = vmul.f32 %v810, %v776
      %v812 = vmul.f32 %v811, %v810
      %v813 = vmul.f32 0.5, %v812
      %v814 = vsub.f32 1.5, %v813
      %v815 = vmul.f32 %v810, %v814
      %vm816 = vweird.f32 %v776
      %vm817 = vweird.f32 %v810
      %vm818 = vmor %vm816, %vm817
      %v819 = vsel %vm818, %v810, %v815
      %v820 = vrsqrt.pop %v777
      %v821 = vmul.f32 %v820, %v777
      %v822 = vmul.f32 %v821, %v820
      %v823 = vmul.f32 0.5, %v822
      %v824 = vsub.f32 1.5, %v823
      %v825 = vmul.f32 %v820, %v824
      %vm826 = vweird.f32 %v777
      %vm827 = vweird.f32 %v820
      %vm828 = vmor %vm826, %vm827
      %v829 = vsel %vm828, %v820, %v825
      %v830 = vrsqrt.pop %v778
      %v831 = vmul.f32 %v830, %v778
      %v832 = vmul.f32 %v831, %v830
      %v833 = vmul.f32 0.5, %v832
      %v834 = vsub.f32 1.5, %v833
      %v835 = vmul.f32 %v830, %v834
      %vm836 = vweird.f32 %v778
      %vm837 = vweird.f32 %v830
      %vm838 = vmor %vm836, %vm837
      %v839 = vsel %vm838, %v830, %v835
      %v840 = vrsqrt.pop %v779
      %v841 = vmul.f32 %v840, %v779
      %v842 = vmul.f32 %v841, %v840
      %v843 = vmul.f32 0.5, %v842
      %v844 = vsub.f32 1.5, %v843
      %v845 = vmul.f32 %v840, %v844
      %vm846 = vweird.f32 %v779
      %vm847 = vweird.f32 %v840
      %vm848 = vmor %vm846, %vm847
      %v849 = vsel %vm848, %v840, %v845
      %v850 = vrsqrt.pop %v780
      %v851 = vmul.f32 %v850, %v780
      %v852 = vmul.f32 %v851, %v850
      %v853 = vmul.f32 0.5, %v852
      %v854 = vsub.f32 1.5, %v853
      %v855 = vmul.f32 %v850, %v854
      %vm856 = vweird.f32 %v780
      %vm857 = vweird.f32 %v850
      %vm858 = vmor %vm856, %vm857
      %v859 = vsel %vm858, %v850, %v855
      %v860 = vrsqrt.pop %v781
      %v861 = vmul.f32 %v860, %v781
      %v862 = vmul.f32 %v861, %v860
      %v863 = vmul.f32 0.5, %v862
      %v864 = vsub.f32 1.5, %v863
      %v865 = vmul.f32 %v860, %v864
      %vm866 = vweird.f32 %v781
      %vm867 = vweird.f32 %v860
      %vm868 = vmor %vm866, %vm867
      %v869 = vsel %vm868, %v860, %v865
      %v870 = vrsqrt.pop %v782
      %v871 = vmul.f32 %v870, %v782
      %v872 = vmul.f32 %v871, %v870
      %v873 = vmul.f32 0.5, %v872
      %v874 = vsub.f32 1.5, %v873
      %v875 = vmul.f32 %v870, %v874
      %vm876 = vweird.f32 %v782
      %vm877 = vweird.f32 %v870
      %vm878 = vmor %vm876, %vm877
      %v879 = vsel %vm878, %v870, %v875
      %v880 = vrsqrt.pop %v783
      %v881 = vmul.f32 %v880, %v783
      %v882 = vmul.f32 %v881, %v880
      %v883 = vmul.f32 0.5, %v882
      %v884 = vsub.f32 1.5, %v883
      %v885 = vmul.f32 %v880, %v884
      %vm886 = vweird.f32 %v783
      %vm887 = vweird.f32 %v880
      %vm888 = vmor %vm886, %vm887
      %v889 = vsel %vm888, %v880, %v885
      %v890 = vrsqrt.pop %v784
      %v891 = vmul.f32 %v890, %v784
      %v892 = vmul.f32 %v891, %v890
      %v893 = vmul.f32 0.5, %v892
      %v894 = vsub.f32 1.5, %v893
      %v895 = vmul.f32 %v890, %v894
      %vm896 = vweird.f32 %v784
      %vm897 = vweird.f32 %v890
      %vm898 = vmor %vm896, %vm897
      %v899 = vsel %vm898, %v890, %v895
      %v900 = vrsqrt.pop %v785
      %v901 = vmul.f32 %v900, %v785
      %v902 = vmul.f32 %v901, %v900
      %v903 = vmul.f32 0.5, %v902
      %v904 = vsub.f32 1.5, %v903
      %v905 = vmul.f32 %v900, %v904
      %vm906 = vweird.f32 %v785
      %vm907 = vweird.f32 %v900
      %vm908 = vmor %vm906, %vm907
      %v909 = vsel %vm908, %v900, %v905
      %v910 = vrsqrt.pop %v786
      %v911 = vmul.f32 %v910, %v786
      %v912 = vmul.f32 %v911, %v910
      %v913 = vmul.f32 0.5, %v912
      %v914 = vsub.f32 1.5, %v913
      %v915 = vmul.f32 %v910, %v914
      %vm916 = vweird.f32 %v786
      %vm917 = vweird.f32 %v910
      %vm918 = vmor %vm916, %vm917
      %v919 = vsel %vm918, %v910, %v915
      %v920 = vrsqrt.pop %v787
      %v921 = vmul.f32 %v920, %v787
      %v922 = vmul.f32 %v921, %v920
      %v923 = vmul.f32 0.5, %v922
      %v924 = vsub.f32 1.5, %v923
      %v925 = vmul.f32 %v920, %v924
      %vm926 = vweird.f32 %v787
      %vm927 = vweird.f32 %v920
      %vm928 = vmor %vm926, %vm927
      %v929 = vsel %vm928, %v920, %v925
      %v930 = vrsqrt.pop %v788
      %v931 = vmul.f32 %v930, %v788
      %v932 = vmul.f32 %v931, %v930
      %v933 = vmul.f32 0.5, %v932
      %v934 = vsub.f32 1.5, %v933
      %v935 = vmul.f32 %v930, %v934
      %vm936 = vweird.f32 %v788
      %vm937 = vweird.f32 %v930
      %vm938 = vmor %vm936, %vm937
      %v939 = vsel %vm938, %v930, %v935
      %v940 = vrsqrt.pop %v789
      %v941 = vmul.f32 %v940, %v789
      %v942 = vmul.f32 %v941, %v940
      %v943 = vmul.f32 0.5, %v942
      %v944 = vsub.f32 1.5, %v943
      %v945 = vmul.f32 %v940, %v944
      %vm946 = vweird.f32 %v789
      %vm947 = vweird.f32 %v940
      %vm948 = vmor %vm946, %vm947
      %v949 = vsel %vm948, %v940, %v945
      %v950 = vmul.f32 %v678, %v799
      %v951 = vmul.f32 %v679, %v809
      %v952 = vmul.f32 %v680, %v819
      %v953 = vmul.f32 %v681, %v829
      %v954 = vmul.f32 %v682, %v839
      %v955 = vmul.f32 %v683, %v849
      %v956 = vmul.f32 %v684, %v859
      %v957 = vmul.f32 %v685, %v869
      %v958 = vmul.f32 %v686, %v879
      %v959 = vmul.f32 %v687, %v889
      %v960 = vmul.f32 %v688, %v899
      %v961 = vmul.f32 %v689, %v909
      %v962 = vmul.f32 %v690, %v919
      %v963 = vmul.f32 %v691, %v929
      %v964 = vmul.f32 %v692, %v939
      %v965 = vmul.f32 %v693, %v949
      %v966 = vperm.slane %v281, 0
      %v967 = vmul.f32 %v950, %v966
      %v968 = vmul.f32 %v951, %v966
      %v969 = vmul.f32 %v952, %v966
      %v970 = vmul.f32 %v953, %v966
      %v971 = vmul.f32 %v954, %v966
      %v972 = vmul.f32 %v955, %v966
      %v973 = vmul.f32 %v956, %v966
      %v974 = vmul.f32 %v957, %v966
      %v975 = vmul.f32 %v958, %v966
      %v976 = vmul.f32 %v959, %v966
      %v977 = vmul.f32 %v960, %v966
      %v978 = vmul.f32 %v961, %v966
      %v979 = vmul.f32 %v962, %v966
      %v980 = vmul.f32 %v963, %v966
      %v981 = vmul.f32 %v964, %v966
      %v982 = vmul.f32 %v965, %v966
      %v983 = vperm.slane %v282, 0
      %v984 = vadd.f32 %v967, %v983
      %v985 = vadd.f32 %v968, %v983
      %v986 = vadd.f32 %v969, %v983
      %v987 = vadd.f32 %v970, %v983
      %v988 = vadd.f32 %v971, %v983
      %v989 = vadd.f32 %v972, %v983
      %v990 = vadd.f32 %v973, %v983
      %v991 = vadd.f32 %v974, %v983
      %v992 = vadd.f32 %v975, %v983
      %v993 = vadd.f32 %v976, %v983
      %v994 = vadd.f32 %v977, %v983
      %v995 = vadd.f32 %v978, %v983
      %v996 = vadd.f32 %v979, %v983
      %v997 = vadd.f32 %v980, %v983
      %v998 = vadd.f32 %v981, %v983
      %v999 = vadd.f32 %v982, %v983
      %v1000 = vmax.f32 %v984, 0.0
      %v1001 = vmax.f32 %v985, 0.0
      %v1002 = vmax.f32 %v986, 0.0
      %v1003 = vmax.f32 %v987, 0.0
      %v1004 = vmax.f32 %v988, 0.0
      %v1005 = vmax.f32 %v989, 0.0
      %v1006 = vmax.f32 %v990, 0.0
      %v1007 = vmax.f32 %v991, 0.0
      %v1008 = vmax.f32 %v992, 0.0
      %v1009 = vmax.f32 %v993, 0.0
      %v1010 = vmax.f32 %v994, 0.0
      %v1011 = vmax.f32 %v995, 0.0
      %v1012 = vmax.f32 %v996, 0.0
      %v1013 = vmax.f32 %v997, 0.0
      %v1014 = vmax.f32 %v998, 0.0
      %v1015 = vmax.f32 %v999, 0.0
      %v1016 = vpack.c.bf16 %v1000, %v1000
      %v1017 = vpack.c.bf16 %v1001, %v1001
      %v1018 = vpack.c.bf16 %v1002, %v1002
      %v1019 = vpack.c.bf16 %v1003, %v1003
      %v1020 = vpack.c.bf16 %v1004, %v1004
      %v1021 = vpack.c.bf16 %v1005, %v1005
      %v1022 = vpack.c.bf16 %v1006, %v1006
      %v1023 = vpack.c.bf16 %v1007, %v1007
      %v1024 = vpack.c.bf16 %v1008, %v1008
      %v1025 = vpack.c.bf16 %v1009, %v1009
      %v1026 = vpack.c.bf16 %v1010, %v1010
      %v1027 = vpack.c.bf16 %v1011, %v1011
      %v1028 = vpack.c.bf16 %v1012, %v1012
      %v1029 = vpack.c.bf16 %v1013, %v1013
      %v1030 = vpack.c.bf16 %v1014, %v1014
      %v1031 = vpack.c.bf16 %v1015, %v1015
      %v1032 = vld [vmem:[%s271] sm:$0xf]
      %v1033 = vld [vmem:[%s271 + $0x4] sm:$0xf]
      %v1034 = vld [vmem:[%s271 + $0x8] sm:$0xf]
      %v1035 = vld [vmem:[%s271 + $0xc] sm:$0xf]
      %v1036 = vld [vmem:[%s271 + $0x10] sm:$0xf]
      %v1037 = vld [vmem:[%s271 + $0x14] sm:$0xf]
      %v1038 = vld [vmem:[%s271 + $0x18] sm:$0xf]
      %v1039 = vld [vmem:[%s271 + $0x1c] sm:$0xf]
      %v1042 = vunpack.c.l.b16 %v1016
      %v1043 = vunpack.c.l.b16 %v1017
      %v1044 = vpack.c.b16 %v1043, %v1042
      %v1046 = vsel %vm606, %v1044, 0
      %vm1048 = vcmask 1043456
      %v1050 = vsel %vm1048, %v1032, 0
      %1052 = vmatpush.bf16.msra.mxu0 0
      %1053 = vmatpush.bf16.msra.mxu0 0
      %1054 = vmatpush.bf16.msra.mxu0 0
      %1055 = vmatpush.bf16.msra.mxu0 0
      %1056 = vmatpush.bf16.msra.mxu0 0
      %1057 = vmatpush.bf16.msra.mxu0 0
      %1058 = vmatpush.bf16.msra.mxu0 0
      %1059 = vmatpush.bf16.msra.mxu0 %v1050
      %1060 = vmatmul.bf16.gmra.mxu0 %v1046
      %v1061 = vpop.f32.mrf.mxu0
      %v1062 = vadd.f32 0.0, %v1061
      %v1063 = vpop.f32.mrf.mxu0
      %v1064 = vadd.f32 0.0, %v1063
      %1065 = vdwg.mxu0
      %v1068 = vunpack.c.l.b16 %v1018
      %v1069 = vunpack.c.l.b16 %v1019
      %v1070 = vpack.c.b16 %v1069, %v1068
      %v1072 = vsel %vm606, %v1070, 0
      %v1075 = vsel %vm1048, %v1033, 0
      %1077 = vmatpush.bf16.msra.mxu0 0
      %1078 = vmatpush.bf16.msra.mxu0 0
      %1079 = vmatpush.bf16.msra.mxu0 0
      %1080 = vmatpush.bf16.msra.mxu0 0
      %1081 = vmatpush.bf16.msra.mxu0 0
      %1082 = vmatpush.bf16.msra.mxu0 0
      %1083 = vmatpush.bf16.msra.mxu0 0
      %1084 = vmatpush.bf16.msra.mxu0 %v1075
      %1085 = vmatmul.bf16.gmra.mxu0 %v1072
      %v1086 = vpop.f32.mrf.mxu0
      %v1087 = vadd.f32 0.0, %v1086
      %v1088 = vpop.f32.mrf.mxu0
      %v1089 = vadd.f32 0.0, %v1088
      %1090 = vdwg.mxu0
      %v1093 = vunpack.c.l.b16 %v1020
      %v1094 = vunpack.c.l.b16 %v1021
      %v1095 = vpack.c.b16 %v1094, %v1093
      %v1097 = vsel %vm606, %v1095, 0
      %v1100 = vsel %vm1048, %v1034, 0
      %1102 = vmatpush.bf16.msra.mxu0 0
      %1103 = vmatpush.bf16.msra.mxu0 0
      %1104 = vmatpush.bf16.msra.mxu0 0
      %1105 = vmatpush.bf16.msra.mxu0 0
      %1106 = vmatpush.bf16.msra.mxu0 0
      %1107 = vmatpush.bf16.msra.mxu0 0
      %1108 = vmatpush.bf16.msra.mxu0 0
      %1109 = vmatpush.bf16.msra.mxu0 %v1100
      %1110 = vmatmul.bf16.gmra.mxu0 %v1097
      %v1111 = vpop.f32.mrf.mxu0
      %v1112 = vadd.f32 0.0, %v1111
      %v1113 = vpop.f32.mrf.mxu0
      %v1114 = vadd.f32 0.0, %v1113
      %1115 = vdwg.mxu0
      %v1118 = vunpack.c.l.b16 %v1022
      %v1119 = vunpack.c.l.b16 %v1023
      %v1120 = vpack.c.b16 %v1119, %v1118
      %v1122 = vsel %vm606, %v1120, 0
      %v1125 = vsel %vm1048, %v1035, 0
      %1127 = vmatpush.bf16.msra.mxu0 0
      %1128 = vmatpush.bf16.msra.mxu0 0
      %1129 = vmatpush.bf16.msra.mxu0 0
      %1130 = vmatpush.bf16.msra.mxu0 0
      %1131 = vmatpush.bf16.msra.mxu0 0
      %1132 = vmatpush.bf16.msra.mxu0 0
      %1133 = vmatpush.bf16.msra.mxu0 0
      %1134 = vmatpush.bf16.msra.mxu0 %v1125
      %1135 = vmatmul.bf16.gmra.mxu0 %v1122
      %v1136 = vpop.f32.mrf.mxu0
      %v1137 = vadd.f32 0.0, %v1136
      %v1138 = vpop.f32.mrf.mxu0
      %v1139 = vadd.f32 0.0, %v1138
      %1140 = vdwg.mxu0
      %v1143 = vunpack.c.l.b16 %v1024
      %v1144 = vunpack.c.l.b16 %v1025
      %v1145 = vpack.c.b16 %v1144, %v1143
      %v1147 = vsel %vm606, %v1145, 0
      %v1150 = vsel %vm1048, %v1036, 0
      %1152 = vmatpush.bf16.msra.mxu0 0
      %1153 = vmatpush.bf16.msra.mxu0 0
      %1154 = vmatpush.bf16.msra.mxu0 0
      %1155 = vmatpush.bf16.msra.mxu0 0
      %1156 = vmatpush.bf16.msra.mxu0 0
      %1157 = vmatpush.bf16.msra.mxu0 0
      %1158 = vmatpush.bf16.msra.mxu0 0
      %1159 = vmatpush.bf16.msra.mxu0 %v1150
      %1160 = vmatmul.bf16.gmra.mxu0 %v1147
      %v1161 = vpop.f32.mrf.mxu0
      %v1162 = vadd.f32 0.0, %v1161
      %v1163 = vpop.f32.mrf.mxu0
      %v1164 = vadd.f32 0.0, %v1163
      %1165 = vdwg.mxu0
      %v1168 = vunpack.c.l.b16 %v1026
      %v1169 = vunpack.c.l.b16 %v1027
      %v1170 = vpack.c.b16 %v1169, %v1168
      %v1172 = vsel %vm606, %v1170, 0
      %v1175 = vsel %vm1048, %v1037, 0
      %1177 = vmatpush.bf16.msra.mxu0 0
      %1178 = vmatpush.bf16.msra.mxu0 0
      %1179 = vmatpush.bf16.msra.mxu0 0
      %1180 = vmatpush.bf16.msra.mxu0 0
      %1181 = vmatpush.bf16.msra.mxu0 0
      %1182 = vmatpush.bf16.msra.mxu0 0
      %1183 = vmatpush.bf16.msra.mxu0 0
      %1184 = vmatpush.bf16.msra.mxu0 %v1175
      %1185 = vmatmul.bf16.gmra.mxu0 %v1172
      %v1186 = vpop.f32.mrf.mxu0
      %v1187 = vadd.f32 0.0, %v1186
      %v1188 = vpop.f32.mrf.mxu0
      %v1189 = vadd.f32 0.0, %v1188
      %1190 = vdwg.mxu0
      %v1193 = vunpack.c.l.b16 %v1028
      %v1194 = vunpack.c.l.b16 %v1029
      %v1195 = vpack.c.b16 %v1194, %v1193
      %v1197 = vsel %vm606, %v1195, 0
      %v1200 = vsel %vm1048, %v1038, 0
      %1202 = vmatpush.bf16.msra.mxu0 0
      %1203 = vmatpush.bf16.msra.mxu0 0
      %1204 = vmatpush.bf16.msra.mxu0 0
      %1205 = vmatpush.bf16.msra.mxu0 0
      %1206 = vmatpush.bf16.msra.mxu0 0
      %1207 = vmatpush.bf16.msra.mxu0 0
      %1208 = vmatpush.bf16.msra.mxu0 0
      %1209 = vmatpush.bf16.msra.mxu0 %v1200
      %1210 = vmatmul.bf16.gmra.mxu0 %v1197
      %v1211 = vpop.f32.mrf.mxu0
      %v1212 = vadd.f32 0.0, %v1211
      %v1213 = vpop.f32.mrf.mxu0
      %v1214 = vadd.f32 0.0, %v1213
      %1215 = vdwg.mxu0
      %v1218 = vunpack.c.l.b16 %v1030
      %v1219 = vunpack.c.l.b16 %v1031
      %v1220 = vpack.c.b16 %v1219, %v1218
      %v1222 = vsel %vm606, %v1220, 0
      %v1225 = vsel %vm1048, %v1039, 0
      %1227 = vmatpush.bf16.msra.mxu0 0
      %1228 = vmatpush.bf16.msra.mxu0 0
      %1229 = vmatpush.bf16.msra.mxu0 0
      %1230 = vmatpush.bf16.msra.mxu0 0
      %1231 = vmatpush.bf16.msra.mxu0 0
      %1232 = vmatpush.bf16.msra.mxu0 0
      %1233 = vmatpush.bf16.msra.mxu0 0
      %1234 = vmatpush.bf16.msra.mxu0 %v1225
      %1235 = vmatmul.bf16.gmra.mxu0 %v1222
      %v1236 = vpop.f32.mrf.mxu0
      %v1237 = vadd.f32 0.0, %v1236
      %v1238 = vpop.f32.mrf.mxu0
      %v1239 = vadd.f32 0.0, %v1238
      %1240 = vdwg.mxu0
      %v1241 = vsel %vm350, %v1062, 0.0
      %1242 = vadd.xlane.f32.xlu0 %v1241
      %v1243 = vpop.xlane.xlu0 %1242
      %v1244 = vsel %vm350, %v1064, 0.0
      %1245 = vadd.xlane.f32.xlu0 %v1244
      %v1246 = vpop.xlane.xlu0 %1245
      %v1247 = vsel %vm350, %v1087, 0.0
      %1248 = vadd.xlane.f32.xlu0 %v1247
      %v1249 = vpop.xlane.xlu0 %1248
      %v1250 = vsel %vm350, %v1089, 0.0
      %1251 = vadd.xlane.f32.xlu0 %v1250
      %v1252 = vpop.xlane.xlu0 %1251
      %v1253 = vsel %vm350, %v1112, 0.0
      %1254 = vadd.xlane.f32.xlu0 %v1253
      %v1255 = vpop.xlane.xlu0 %1254
      %v1256 = vsel %vm350, %v1114, 0.0
      %1257 = vadd.xlane.f32.xlu0 %v1256
      %v1258 = vpop.xlane.xlu0 %1257
      %v1259 = vsel %vm350, %v1137, 0.0
      %1260 = vadd.xlane.f32.xlu0 %v1259
      %v1261 = vpop.xlane.xlu0 %1260
      %v1262 = vsel %vm350, %v1139, 0.0
      %1263 = vadd.xlane.f32.xlu0 %v1262
      %v1264 = vpop.xlane.xlu0 %1263
      %v1265 = vsel %vm350, %v1162, 0.0
      %1266 = vadd.xlane.f32.xlu0 %v1265
      %v1267 = vpop.xlane.xlu0 %1266
      %v1268 = vsel %vm350, %v1164, 0.0
      %1269 = vadd.xlane.f32.xlu0 %v1268
      %v1270 = vpop.xlane.xlu0 %1269
      %v1271 = vsel %vm350, %v1187, 0.0
      %1272 = vadd.xlane.f32.xlu0 %v1271
      %v1273 = vpop.xlane.xlu0 %1272
      %v1274 = vsel %vm350, %v1189, 0.0
      %1275 = vadd.xlane.f32.xlu0 %v1274
      %v1276 = vpop.xlane.xlu0 %1275
      %v1277 = vsel %vm350, %v1212, 0.0
      %1278 = vadd.xlane.f32.xlu0 %v1277
      %v1279 = vpop.xlane.xlu0 %1278
      %v1280 = vsel %vm350, %v1214, 0.0
      %1281 = vadd.xlane.f32.xlu0 %v1280
      %v1282 = vpop.xlane.xlu0 %1281
      %v1283 = vsel %vm350, %v1237, 0.0
      %1284 = vadd.xlane.f32.xlu0 %v1283
      %v1285 = vpop.xlane.xlu0 %1284
      %v1286 = vsel %vm350, %v1239, 0.0
      %1287 = vadd.xlane.f32.xlu0 %v1286
      %v1288 = vpop.xlane.xlu0 %1287
      %v1289 = vrcp.pop 32.0
      %v1290 = vmul.f32 32.0, %v1289
      %v1291 = vsub.f32 1.0, %v1290
      %v1292 = vmul.f32 %v1289, %v1291
      %v1293 = vadd.f32 %v1289, %v1292
      %vm1294 = vweird.f32 %v1289
      %v1295 = vsel %vm1294, %v1289, %v1293
      %v1296 = vmul.f32 %v1243, %v1295
      %v1297 = vmul.f32 %v1246, %v1295
      %v1298 = vmul.f32 %v1249, %v1295
      %v1299 = vmul.f32 %v1252, %v1295
      %v1300 = vmul.f32 %v1255, %v1295
      %v1301 = vmul.f32 %v1258, %v1295
      %v1302 = vmul.f32 %v1261, %v1295
      %v1303 = vmul.f32 %v1264, %v1295
      %v1304 = vmul.f32 %v1267, %v1295
      %v1305 = vmul.f32 %v1270, %v1295
      %v1306 = vmul.f32 %v1273, %v1295
      %v1307 = vmul.f32 %v1276, %v1295
      %v1308 = vmul.f32 %v1279, %v1295
      %v1309 = vmul.f32 %v1282, %v1295
      %v1310 = vmul.f32 %v1285, %v1295
      %v1311 = vmul.f32 %v1288, %v1295
      %v1312 = vsub.f32 %v1062, %v1296
      %v1313 = vsub.f32 %v1064, %v1297
      %v1314 = vsub.f32 %v1087, %v1298
      %v1315 = vsub.f32 %v1089, %v1299
      %v1316 = vsub.f32 %v1112, %v1300
      %v1317 = vsub.f32 %v1114, %v1301
      %v1318 = vsub.f32 %v1137, %v1302
      %v1319 = vsub.f32 %v1139, %v1303
      %v1320 = vsub.f32 %v1162, %v1304
      %v1321 = vsub.f32 %v1164, %v1305
      %v1322 = vsub.f32 %v1187, %v1306
      %v1323 = vsub.f32 %v1189, %v1307
      %v1324 = vsub.f32 %v1212, %v1308
      %v1325 = vsub.f32 %v1214, %v1309
      %v1326 = vsub.f32 %v1237, %v1310
      %v1327 = vsub.f32 %v1239, %v1311
      %v1328 = vmul.f32 %v1312, %v1312
      %v1329 = vmul.f32 %v1313, %v1313
      %v1330 = vmul.f32 %v1314, %v1314
      %v1331 = vmul.f32 %v1315, %v1315
      %v1332 = vmul.f32 %v1316, %v1316
      %v1333 = vmul.f32 %v1317, %v1317
      %v1334 = vmul.f32 %v1318, %v1318
      %v1335 = vmul.f32 %v1319, %v1319
      %v1336 = vmul.f32 %v1320, %v1320
      %v1337 = vmul.f32 %v1321, %v1321
      %v1338 = vmul.f32 %v1322, %v1322
      %v1339 = vmul.f32 %v1323, %v1323
      %v1340 = vmul.f32 %v1324, %v1324
      %v1341 = vmul.f32 %v1325, %v1325
      %v1342 = vmul.f32 %v1326, %v1326
      %v1343 = vmul.f32 %v1327, %v1327
      %v1344 = vsel %vm350, %v1328, 0.0
      %1345 = vadd.xlane.f32.xlu0 %v1344
      %v1346 = vpop.xlane.xlu0 %1345
      %v1347 = vsel %vm350, %v1329, 0.0
      %1348 = vadd.xlane.f32.xlu0 %v1347
      %v1349 = vpop.xlane.xlu0 %1348
      %v1350 = vsel %vm350, %v1330, 0.0
      %1351 = vadd.xlane.f32.xlu0 %v1350
      %v1352 = vpop.xlane.xlu0 %1351
      %v1353 = vsel %vm350, %v1331, 0.0
      %1354 = vadd.xlane.f32.xlu0 %v1353
      %v1355 = vpop.xlane.xlu0 %1354
      %v1356 = vsel %vm350, %v1332, 0.0
      %1357 = vadd.xlane.f32.xlu0 %v1356
      %v1358 = vpop.xlane.xlu0 %1357
      %v1359 = vsel %vm350, %v1333, 0.0
      %1360 = vadd.xlane.f32.xlu0 %v1359
      %v1361 = vpop.xlane.xlu0 %1360
      %v1362 = vsel %vm350, %v1334, 0.0
      %1363 = vadd.xlane.f32.xlu0 %v1362
      %v1364 = vpop.xlane.xlu0 %1363
      %v1365 = vsel %vm350, %v1335, 0.0
      %1366 = vadd.xlane.f32.xlu0 %v1365
      %v1367 = vpop.xlane.xlu0 %1366
      %v1368 = vsel %vm350, %v1336, 0.0
      %1369 = vadd.xlane.f32.xlu0 %v1368
      %v1370 = vpop.xlane.xlu0 %1369
      %v1371 = vsel %vm350, %v1337, 0.0
      %1372 = vadd.xlane.f32.xlu0 %v1371
      %v1373 = vpop.xlane.xlu0 %1372
      %v1374 = vsel %vm350, %v1338, 0.0
      %1375 = vadd.xlane.f32.xlu0 %v1374
      %v1376 = vpop.xlane.xlu0 %1375
      %v1377 = vsel %vm350, %v1339, 0.0
      %1378 = vadd.xlane.f32.xlu0 %v1377
      %v1379 = vpop.xlane.xlu0 %1378
      %v1380 = vsel %vm350, %v1340, 0.0
      %1381 = vadd.xlane.f32.xlu0 %v1380
      %v1382 = vpop.xlane.xlu0 %1381
      %v1383 = vsel %vm350, %v1341, 0.0
      %1384 = vadd.xlane.f32.xlu0 %v1383
      %v1385 = vpop.xlane.xlu0 %1384
      %v1386 = vsel %vm350, %v1342, 0.0
      %1387 = vadd.xlane.f32.xlu0 %v1386
      %v1388 = vpop.xlane.xlu0 %1387
      %v1389 = vsel %vm350, %v1343, 0.0
      %1390 = vadd.xlane.f32.xlu0 %v1389
      %v1391 = vpop.xlane.xlu0 %1390
      %v1392 = vmul.f32 %v1346, %v1295
      %v1393 = vmul.f32 %v1349, %v1295
      %v1394 = vmul.f32 %v1352, %v1295
      %v1395 = vmul.f32 %v1355, %v1295
      %v1396 = vmul.f32 %v1358, %v1295
      %v1397 = vmul.f32 %v1361, %v1295
      %v1398 = vmul.f32 %v1364, %v1295
      %v1399 = vmul.f32 %v1367, %v1295
      %v1400 = vmul.f32 %v1370, %v1295
      %v1401 = vmul.f32 %v1373, %v1295
      %v1402 = vmul.f32 %v1376, %v1295
      %v1403 = vmul.f32 %v1379, %v1295
      %v1404 = vmul.f32 %v1382, %v1295
      %v1405 = vmul.f32 %v1385, %v1295
      %v1406 = vmul.f32 %v1388, %v1295
      %v1407 = vmul.f32 %v1391, %v1295
      %v1408 = vadd.f32 %v1392, 1e-05
      %v1409 = vadd.f32 %v1393, 1e-05
      %v1410 = vadd.f32 %v1394, 1e-05
      %v1411 = vadd.f32 %v1395, 1e-05
      %v1412 = vadd.f32 %v1396, 1e-05
      %v1413 = vadd.f32 %v1397, 1e-05
      %v1414 = vadd.f32 %v1398, 1e-05
      %v1415 = vadd.f32 %v1399, 1e-05
      %v1416 = vadd.f32 %v1400, 1e-05
      %v1417 = vadd.f32 %v1401, 1e-05
      %v1418 = vadd.f32 %v1402, 1e-05
      %v1419 = vadd.f32 %v1403, 1e-05
      %v1420 = vadd.f32 %v1404, 1e-05
      %v1421 = vadd.f32 %v1405, 1e-05
      %v1422 = vadd.f32 %v1406, 1e-05
      %v1423 = vadd.f32 %v1407, 1e-05
      %v1424 = vrsqrt.pop %v1408
      %v1425 = vmul.f32 %v1424, %v1408
      %v1426 = vmul.f32 %v1425, %v1424
      %v1427 = vmul.f32 0.5, %v1426
      %v1428 = vsub.f32 1.5, %v1427
      %v1429 = vmul.f32 %v1424, %v1428
      %vm1430 = vweird.f32 %v1408
      %vm1431 = vweird.f32 %v1424
      %vm1432 = vmor %vm1430, %vm1431
      %v1433 = vsel %vm1432, %v1424, %v1429
      %v1434 = vrsqrt.pop %v1409
      %v1435 = vmul.f32 %v1434, %v1409
      %v1436 = vmul.f32 %v1435, %v1434
      %v1437 = vmul.f32 0.5, %v1436
      %v1438 = vsub.f32 1.5, %v1437
      %v1439 = vmul.f32 %v1434, %v1438
      %vm1440 = vweird.f32 %v1409
      %vm1441 = vweird.f32 %v1434
      %vm1442 = vmor %vm1440, %vm1441
      %v1443 = vsel %vm1442, %v1434, %v1439
      %v1444 = vrsqrt.pop %v1410
      %v1445 = vmul.f32 %v1444, %v1410
      %v1446 = vmul.f32 %v1445, %v1444
      %v1447 = vmul.f32 0.5, %v1446
      %v1448 = vsub.f32 1.5, %v1447
      %v1449 = vmul.f32 %v1444, %v1448
      %vm1450 = vweird.f32 %v1410
      %vm1451 = vweird.f32 %v1444
      %vm1452 = vmor %vm1450, %vm1451
      %v1453 = vsel %vm1452, %v1444, %v1449
      %v1454 = vrsqrt.pop %v1411
      %v1455 = vmul.f32 %v1454, %v1411
      %v1456 = vmul.f32 %v1455, %v1454
      %v1457 = vmul.f32 0.5, %v1456
      %v1458 = vsub.f32 1.5, %v1457
      %v1459 = vmul.f32 %v1454, %v1458
      %vm1460 = vweird.f32 %v1411
      %vm1461 = vweird.f32 %v1454
      %vm1462 = vmor %vm1460, %vm1461
      %v1463 = vsel %vm1462, %v1454, %v1459
      %v1464 = vrsqrt.pop %v1412
      %v1465 = vmul.f32 %v1464, %v1412
      %v1466 = vmul.f32 %v1465, %v1464
      %v1467 = vmul.f32 0.5, %v1466
      %v1468 = vsub.f32 1.5, %v1467
      %v1469 = vmul.f32 %v1464, %v1468
      %vm1470 = vweird.f32 %v1412
      %vm1471 = vweird.f32 %v1464
      %vm1472 = vmor %vm1470, %vm1471
      %v1473 = vsel %vm1472, %v1464, %v1469
      %v1474 = vrsqrt.pop %v1413
      %v1475 = vmul.f32 %v1474, %v1413
      %v1476 = vmul.f32 %v1475, %v1474
      %v1477 = vmul.f32 0.5, %v1476
      %v1478 = vsub.f32 1.5, %v1477
      %v1479 = vmul.f32 %v1474, %v1478
      %vm1480 = vweird.f32 %v1413
      %vm1481 = vweird.f32 %v1474
      %vm1482 = vmor %vm1480, %vm1481
      %v1483 = vsel %vm1482, %v1474, %v1479
      %v1484 = vrsqrt.pop %v1414
      %v1485 = vmul.f32 %v1484, %v1414
      %v1486 = vmul.f32 %v1485, %v1484
      %v1487 = vmul.f32 0.5, %v1486
      %v1488 = vsub.f32 1.5, %v1487
      %v1489 = vmul.f32 %v1484, %v1488
      %vm1490 = vweird.f32 %v1414
      %vm1491 = vweird.f32 %v1484
      %vm1492 = vmor %vm1490, %vm1491
      %v1493 = vsel %vm1492, %v1484, %v1489
      %v1494 = vrsqrt.pop %v1415
      %v1495 = vmul.f32 %v1494, %v1415
      %v1496 = vmul.f32 %v1495, %v1494
      %v1497 = vmul.f32 0.5, %v1496
      %v1498 = vsub.f32 1.5, %v1497
      %v1499 = vmul.f32 %v1494, %v1498
      %vm1500 = vweird.f32 %v1415
      %vm1501 = vweird.f32 %v1494
      %vm1502 = vmor %vm1500, %vm1501
      %v1503 = vsel %vm1502, %v1494, %v1499
      %v1504 = vrsqrt.pop %v1416
      %v1505 = vmul.f32 %v1504, %v1416
      %v1506 = vmul.f32 %v1505, %v1504
      %v1507 = vmul.f32 0.5, %v1506
      %v1508 = vsub.f32 1.5, %v1507
      %v1509 = vmul.f32 %v1504, %v1508
      %vm1510 = vweird.f32 %v1416
      %vm1511 = vweird.f32 %v1504
      %vm1512 = vmor %vm1510, %vm1511
      %v1513 = vsel %vm1512, %v1504, %v1509
      %v1514 = vrsqrt.pop %v1417
      %v1515 = vmul.f32 %v1514, %v1417
      %v1516 = vmul.f32 %v1515, %v1514
      %v1517 = vmul.f32 0.5, %v1516
      %v1518 = vsub.f32 1.5, %v1517
      %v1519 = vmul.f32 %v1514, %v1518
      %vm1520 = vweird.f32 %v1417
      %vm1521 = vweird.f32 %v1514
      %vm1522 = vmor %vm1520, %vm1521
      %v1523 = vsel %vm1522, %v1514, %v1519
      %v1524 = vrsqrt.pop %v1418
      %v1525 = vmul.f32 %v1524, %v1418
      %v1526 = vmul.f32 %v1525, %v1524
      %v1527 = vmul.f32 0.5, %v1526
      %v1528 = vsub.f32 1.5, %v1527
      %v1529 = vmul.f32 %v1524, %v1528
      %vm1530 = vweird.f32 %v1418
      %vm1531 = vweird.f32 %v1524
      %vm1532 = vmor %vm1530, %vm1531
      %v1533 = vsel %vm1532, %v1524, %v1529
      %v1534 = vrsqrt.pop %v1419
      %v1535 = vmul.f32 %v1534, %v1419
      %v1536 = vmul.f32 %v1535, %v1534
      %v1537 = vmul.f32 0.5, %v1536
      %v1538 = vsub.f32 1.5, %v1537
      %v1539 = vmul.f32 %v1534, %v1538
      %vm1540 = vweird.f32 %v1419
      %vm1541 = vweird.f32 %v1534
      %vm1542 = vmor %vm1540, %vm1541
      %v1543 = vsel %vm1542, %v1534, %v1539
      %v1544 = vrsqrt.pop %v1420
      %v1545 = vmul.f32 %v1544, %v1420
      %v1546 = vmul.f32 %v1545, %v1544
      %v1547 = vmul.f32 0.5, %v1546
      %v1548 = vsub.f32 1.5, %v1547
      %v1549 = vmul.f32 %v1544, %v1548
      %vm1550 = vweird.f32 %v1420
      %vm1551 = vweird.f32 %v1544
      %vm1552 = vmor %vm1550, %vm1551
      %v1553 = vsel %vm1552, %v1544, %v1549
      %v1554 = vrsqrt.pop %v1421
      %v1555 = vmul.f32 %v1554, %v1421
      %v1556 = vmul.f32 %v1555, %v1554
      %v1557 = vmul.f32 0.5, %v1556
      %v1558 = vsub.f32 1.5, %v1557
      %v1559 = vmul.f32 %v1554, %v1558
      %vm1560 = vweird.f32 %v1421
      %vm1561 = vweird.f32 %v1554
      %vm1562 = vmor %vm1560, %vm1561
      %v1563 = vsel %vm1562, %v1554, %v1559
      %v1564 = vrsqrt.pop %v1422
      %v1565 = vmul.f32 %v1564, %v1422
      %v1566 = vmul.f32 %v1565, %v1564
      %v1567 = vmul.f32 0.5, %v1566
      %v1568 = vsub.f32 1.5, %v1567
      %v1569 = vmul.f32 %v1564, %v1568
      %vm1570 = vweird.f32 %v1422
      %vm1571 = vweird.f32 %v1564
      %vm1572 = vmor %vm1570, %vm1571
      %v1573 = vsel %vm1572, %v1564, %v1569
      %v1574 = vrsqrt.pop %v1423
      %v1575 = vmul.f32 %v1574, %v1423
      %v1576 = vmul.f32 %v1575, %v1574
      %v1577 = vmul.f32 0.5, %v1576
      %v1578 = vsub.f32 1.5, %v1577
      %v1579 = vmul.f32 %v1574, %v1578
      %vm1580 = vweird.f32 %v1423
      %vm1581 = vweird.f32 %v1574
      %vm1582 = vmor %vm1580, %vm1581
      %v1583 = vsel %vm1582, %v1574, %v1579
      %v1584 = vmul.f32 %v1312, %v1433
      %v1585 = vmul.f32 %v1313, %v1443
      %v1586 = vmul.f32 %v1314, %v1453
      %v1587 = vmul.f32 %v1315, %v1463
      %v1588 = vmul.f32 %v1316, %v1473
      %v1589 = vmul.f32 %v1317, %v1483
      %v1590 = vmul.f32 %v1318, %v1493
      %v1591 = vmul.f32 %v1319, %v1503
      %v1592 = vmul.f32 %v1320, %v1513
      %v1593 = vmul.f32 %v1321, %v1523
      %v1594 = vmul.f32 %v1322, %v1533
      %v1595 = vmul.f32 %v1323, %v1543
      %v1596 = vmul.f32 %v1324, %v1553
      %v1597 = vmul.f32 %v1325, %v1563
      %v1598 = vmul.f32 %v1326, %v1573
      %v1599 = vmul.f32 %v1327, %v1583
      %v1600 = vperm.slane %v283, 0
      %v1601 = vmul.f32 %v1584, %v1600
      %v1602 = vmul.f32 %v1585, %v1600
      %v1603 = vmul.f32 %v1586, %v1600
      %v1604 = vmul.f32 %v1587, %v1600
      %v1605 = vmul.f32 %v1588, %v1600
      %v1606 = vmul.f32 %v1589, %v1600
      %v1607 = vmul.f32 %v1590, %v1600
      %v1608 = vmul.f32 %v1591, %v1600
      %v1609 = vmul.f32 %v1592, %v1600
      %v1610 = vmul.f32 %v1593, %v1600
      %v1611 = vmul.f32 %v1594, %v1600
      %v1612 = vmul.f32 %v1595, %v1600
      %v1613 = vmul.f32 %v1596, %v1600
      %v1614 = vmul.f32 %v1597, %v1600
      %v1615 = vmul.f32 %v1598, %v1600
      %v1616 = vmul.f32 %v1599, %v1600
      %v1617 = vperm.slane %v284, 0
      %v1618 = vadd.f32 %v1601, %v1617
      %v1619 = vadd.f32 %v1602, %v1617
      %v1620 = vadd.f32 %v1603, %v1617
      %v1621 = vadd.f32 %v1604, %v1617
      %v1622 = vadd.f32 %v1605, %v1617
      %v1623 = vadd.f32 %v1606, %v1617
      %v1624 = vadd.f32 %v1607, %v1617
      %v1625 = vadd.f32 %v1608, %v1617
      %v1626 = vadd.f32 %v1609, %v1617
      %v1627 = vadd.f32 %v1610, %v1617
      %v1628 = vadd.f32 %v1611, %v1617
      %v1629 = vadd.f32 %v1612, %v1617
      %v1630 = vadd.f32 %v1613, %v1617
      %v1631 = vadd.f32 %v1614, %v1617
      %v1632 = vadd.f32 %v1615, %v1617
      %v1633 = vadd.f32 %v1616, %v1617
      %v1634 = vmax.f32 %v1618, 0.0
      %v1635 = vmax.f32 %v1619, 0.0
      %v1636 = vmax.f32 %v1620, 0.0
      %v1637 = vmax.f32 %v1621, 0.0
      %v1638 = vmax.f32 %v1622, 0.0
      %v1639 = vmax.f32 %v1623, 0.0
      %v1640 = vmax.f32 %v1624, 0.0
      %v1641 = vmax.f32 %v1625, 0.0
      %v1642 = vmax.f32 %v1626, 0.0
      %v1643 = vmax.f32 %v1627, 0.0
      %v1644 = vmax.f32 %v1628, 0.0
      %v1645 = vmax.f32 %v1629, 0.0
      %v1646 = vmax.f32 %v1630, 0.0
      %v1647 = vmax.f32 %v1631, 0.0
      %v1648 = vmax.f32 %v1632, 0.0
      %v1649 = vmax.f32 %v1633, 0.0
      %v1650 = vpack.c.bf16 %v1634, %v1634
      %v1651 = vpack.c.bf16 %v1635, %v1635
      %v1652 = vpack.c.bf16 %v1636, %v1636
      %v1653 = vpack.c.bf16 %v1637, %v1637
      %v1654 = vpack.c.bf16 %v1638, %v1638
      %v1655 = vpack.c.bf16 %v1639, %v1639
      %v1656 = vpack.c.bf16 %v1640, %v1640
      %v1657 = vpack.c.bf16 %v1641, %v1641
      %v1658 = vpack.c.bf16 %v1642, %v1642
      %v1659 = vpack.c.bf16 %v1643, %v1643
      %v1660 = vpack.c.bf16 %v1644, %v1644
      %v1661 = vpack.c.bf16 %v1645, %v1645
      %v1662 = vpack.c.bf16 %v1646, %v1646
      %v1663 = vpack.c.bf16 %v1647, %v1647
      %v1664 = vpack.c.bf16 %v1648, %v1648
      %v1665 = vpack.c.bf16 %v1649, %v1649
      %vm1666 = vcmask 257024
      %1667 = vst.msk [vmem:[%s278] sm:$0xf] %vm1666, %v1650
      %1668 = vst.msk [vmem:[%s278 + $0x4] sm:$0xf] %vm1666, %v1651
      %1669 = vst.msk [vmem:[%s278 + $0x8] sm:$0xf] %vm1666, %v1652
      %1670 = vst.msk [vmem:[%s278 + $0xc] sm:$0xf] %vm1666, %v1653
      %1671 = vst.msk [vmem:[%s278 + $0x10] sm:$0xf] %vm1666, %v1654
      %1672 = vst.msk [vmem:[%s278 + $0x14] sm:$0xf] %vm1666, %v1655
      %1673 = vst.msk [vmem:[%s278 + $0x18] sm:$0xf] %vm1666, %v1656
      %1674 = vst.msk [vmem:[%s278 + $0x1c] sm:$0xf] %vm1666, %v1657
      %1675 = vst.msk [vmem:[%s278 + $0x20] sm:$0xf] %vm1666, %v1658
      %1676 = vst.msk [vmem:[%s278 + $0x24] sm:$0xf] %vm1666, %v1659
      %1677 = vst.msk [vmem:[%s278 + $0x28] sm:$0xf] %vm1666, %v1660
      %1678 = vst.msk [vmem:[%s278 + $0x2c] sm:$0xf] %vm1666, %v1661
      %1679 = vst.msk [vmem:[%s278 + $0x30] sm:$0xf] %vm1666, %v1662
      %1680 = vst.msk [vmem:[%s278 + $0x34] sm:$0xf] %vm1666, %v1663
      %1681 = vst.msk [vmem:[%s278 + $0x38] sm:$0xf] %vm1666, %v1664
      %1682 = vst.msk [vmem:[%s278 + $0x3c] sm:$0xf] %vm1666, %v1665
      %s1683 = smul.u32 8, %s16
      %p1684 = scmp.lt.s32.totalorder %s1683, 15
      %s1685 = scalar_select %p1684, %s1683, 15
      %s1686 = smul.addr %s1685, 2
      %s1687 = smul.addr %s1686, 4
      %s1688 = scalar_lea.vmem %s5, %s1687
      // Predicated region
      $region41: #{_lambda_.21} parent=39 // pred_check
        %p1689 = pneg %p154
      $region42: #{_lambda_.21} parent=39 // pred_check_branch
        %1691 = sbr.rel (%p1689) target = $region44
      $region43: #{_lambda_.21} parent=39 // pred_region
        %s1692 = smul.u32 8, %s16
      $region44: #{_lambda_.21} parent=39 // pred_fallthru
        _
    $region40: #{_lambda_.21} parent=5 // pred_fallthru
      _
    %p1693 = scmp.le.s32.totalorder 2, %s11
    // Predicated region
    $region45: #{_lambda_.21} parent=5 // pred_check
      %p1694 = pneg %p1693
    $region46: #{_lambda_.21} parent=5 // pred_check_branch
      %1696 = sbr.rel (%p1694) target = $region48
    $region47: #{_lambda_.21} parent=5 // pred_region
      %s1697 = ssub.s32 %s11, 2
      // Predicated region
      $region49: #{_lambda_.21} parent=47 // pred_check
        %p1698 = pneg %p160
      $region50: #{_lambda_.21} parent=47 // pred_check_branch
        %1700 = sbr.rel (%p1698) target = $region52
      $region51: #{_lambda_.21} parent=47 // pred_region
        %s1701 = smul.u32 8, %s17
        %p1702 = scmp.lt.s32.totalorder %s1701, 15
        %s1703 = scalar_select %p1702, %s1701, 15
        %s1704 = smul.addr %s1703, 2
        %s1705 = smul.addr %s1704, 4
        %s1706 = scalar_lea.vmem %s5, %s1705
      $region52: #{_lambda_.21} parent=47 // pred_fallthru
        _
    $region48: #{_lambda_.21} parent=5 // pred_fallthru
      _
  $region6: #{_lambda_.21} parent=0 // loop_footer
    %s15 = sadd.s32 1, %s11
  $region7: #{_lambda_.21} parent=0 // loop_footer_branch
    %10 = sbr.rel target = $region3
  $region8: #{_lambda_.21} parent=0 // loop_exit
    _

// kernel: _lambda_.22
$region0: #{_lambda_.22}
  #allocation0 [shape = 'u32[]', space=smem, size = 0x4, offset = 0x4, fixed_abs, tag = 'smem constant byte address 0x4 - core index']
  #allocation1 [shape = 'u32[72,128]{1,0:T(1,128)}', space=vmem, size = 0x9000, scoped, tag = 'internal scratch']
  %s0 = inlined_call_operand.vmem [shape: bf16[16,512], index: 0, kind: input, shape index: {}]
  %s1 = inlined_call_operand.vmem [shape: f32[16,32], index: 1, kind: input, shape index: {}]
  %s2 = inlined_call_operand.vmem [shape: bf16[512,32], index: 2, kind: input, shape index: {}]
  %s3 = inlined_call_operand.vmem [shape: f32[5,32], index: 3, kind: input, shape index: {}]
  %s4 = inlined_call_operand.vmem [shape: f32[16,32], index: 4, kind: output, shape index: {}]
  %s5 = sld [smem:[#allocation0]]
  $region49: #{_lambda_.22} parent=0
    _
  %s7 = ssub.s32 1, %s5
  %s8 = scalar_select 0, %s7, %s5
  loop: start=0, step=1, limit=4
  $region2: #{_lambda_.22} parent=0 // loop_pre_header
    _
  $region3: #{_lambda_.22} parent=0 // loop_header
    %s10 = sphi 0, %s14
    %p11 = scmp.ge.s32.totalorder %s10, 4
    %s20 = sphi 0, %s22
    %s23 = sphi 0, %s20
    %s24 = sphi 0, %s23
    %s40 = sphi 0, %s24
    %s46 = sphi 0, %s48
    %s49 = sphi 0, %s46
    %s50 = sphi 0, %s49
    %s66 = sphi 0, %s50
    %s70 = sphi 0, %s70
    %s72 = sphi 0, %s70
    %s73 = sphi 0, %s72
    %s87 = sphi 0, %s73
    %s91 = sphi 0, %s91
    %s93 = sphi 0, %s91
    %s94 = sphi 0, %s93
    %s108 = sphi 0, %s94
    %s114 = sphi 0, %s116
    %s117 = sphi 0, %s114
    %s118 = sphi 0, %s117
    %s134 = sphi 0, %s118
  $region4: #{_lambda_.22} parent=0 // loop_header_branch
    %13 = sbr.rel (%p11) target = $region8
  $region5: #{_lambda_.22} parent=0 // loop_body
    %s15 = ssub.s32 %s10, 1
    %s16 = ssub.s32 %s10, 2
    %s17 = sadd.s32 %s10, 1
    %s18 = ssub.s32 %s10, %s17
    %p19 = scmp.eq.s32.totalorder %s18, 0
    %s21 = sadd.s32 %s20, 1
    %s22 = scalar_select %p19, %s20, %s21
    %p25 = pneg %p19
    %p26 = scmp.eq.s32.totalorder %s10, 1
    %p27 = por %p25, %p26
    %p28 = scmp.ne.s32.totalorder %s20, %s23
    %p29 = scmp.eq.s32.totalorder %s10, 0
    %p30 = por %p28, %p29
    %p31 = scmp.ne.s32.totalorder %s20, %s23
    %p32 = scmp.eq.s32.totalorder %s15, 1
    %p33 = por %p31, %p32
    %p34 = scmp.ne.s32.totalorder %s23, %s24
    %p35 = scmp.eq.s32.totalorder %s15, 0
    %p36 = por %p34, %p35
    %p37 = scmp.ne.s32.totalorder %s23, %s24
    %p38 = scmp.eq.s32.totalorder %s16, 1
    %p39 = por %p37, %p38
    %p41 = scmp.ne.s32.totalorder %s24, %s40
    %p42 = scmp.eq.s32.totalorder %s16, 0
    %p43 = por %p41, %p42
    %s44 = ssub.s32 %s10, %s17
    %p45 = scmp.eq.s32.totalorder %s44, 0
    %s47 = sadd.s32 %s46, 1
    %s48 = scalar_select %p45, %s46, %s47
    %p51 = pneg %p45
    %p52 = scmp.eq.s32.totalorder %s10, 1
    %p53 = por %p51, %p52
    %p54 = scmp.ne.s32.totalorder %s46, %s49
    %p55 = scmp.eq.s32.totalorder %s10, 0
    %p56 = por %p54, %p55
    %p57 = scmp.ne.s32.totalorder %s46, %s49
    %p58 = scmp.eq.s32.totalorder %s15, 1
    %p59 = por %p57, %p58
    %p60 = scmp.ne.s32.totalorder %s49, %s50
    %p61 = scmp.eq.s32.totalorder %s15, 0
    %p62 = por %p60, %p61
    %p63 = scmp.ne.s32.totalorder %s49, %s50
    %p64 = scmp.eq.s32.totalorder %s16, 1
    %p65 = por %p63, %p64
    %p67 = scmp.ne.s32.totalorder %s50, %s66
    %p68 = scmp.eq.s32.totalorder %s16, 0
    %p69 = por %p67, %p68
    %s71 = sadd.s32 %s70, 1
    %p74 = scmp.eq.s32.totalorder %s10, 1
    %p75 = scmp.ne.s32.totalorder %s70, %s72
    %p76 = scmp.eq.s32.totalorder %s10, 0
    %p77 = por %p75, %p76
    %p78 = scmp.ne.s32.totalorder %s70, %s72
    %p79 = scmp.eq.s32.totalorder %s15, 1
    %p80 = por %p78, %p79
    %p81 = scmp.ne.s32.totalorder %s72, %s73
    %p82 = scmp.eq.s32.totalorder %s15, 0
    %p83 = por %p81, %p82
    %p84 = scmp.ne.s32.totalorder %s72, %s73
    %p85 = scmp.eq.s32.totalorder %s16, 1
    %p86 = por %p84, %p85
    %p88 = scmp.ne.s32.totalorder %s73, %s87
    %p89 = scmp.eq.s32.totalorder %s16, 0
    %p90 = por %p88, %p89
    %s92 = sadd.s32 %s91, 1
    %p95 = scmp.eq.s32.totalorder %s10, 1
    %p96 = scmp.ne.s32.totalorder %s91, %s93
    %p97 = scmp.eq.s32.totalorder %s10, 0
    %p98 = por %p96, %p97
    %p99 = scmp.ne.s32.totalorder %s91, %s93
    %p100 = scmp.eq.s32.totalorder %s15, 1
    %p101 = por %p99, %p100
    %p102 = scmp.ne.s32.totalorder %s93, %s94
    %p103 = scmp.eq.s32.totalorder %s15, 0
    %p104 = por %p102, %p103
    %p105 = scmp.ne.s32.totalorder %s93, %s94
    %p106 = scmp.eq.s32.totalorder %s16, 1
    %p107 = por %p105, %p106
    %p109 = scmp.ne.s32.totalorder %s94, %s108
    %p110 = scmp.eq.s32.totalorder %s16, 0
    %p111 = por %p109, %p110
    %s112 = ssub.s32 %s10, %s17
    %p113 = scmp.eq.s32.totalorder %s112, 0
    %s115 = sadd.s32 %s114, 1
    %s116 = scalar_select %p113, %s114, %s115
    %p119 = pneg %p113
    %p120 = scmp.eq.s32.totalorder %s10, 1
    %p121 = por %p119, %p120
    %p122 = scmp.ne.s32.totalorder %s114, %s117
    %p123 = scmp.eq.s32.totalorder %s10, 0
    %p124 = por %p122, %p123
    %p125 = scmp.ne.s32.totalorder %s114, %s117
    %p126 = scmp.eq.s32.totalorder %s15, 1
    %p127 = por %p125, %p126
    %p128 = scmp.ne.s32.totalorder %s117, %s118
    %p129 = scmp.eq.s32.totalorder %s15, 0
    %p130 = por %p128, %p129
    %p131 = scmp.ne.s32.totalorder %s117, %s118
    %p132 = scmp.eq.s32.totalorder %s16, 1
    %p133 = por %p131, %p132
    %p135 = scmp.ne.s32.totalorder %s118, %s134
    %p136 = scmp.eq.s32.totalorder %s16, 0
    %p137 = por %p135, %p136
    %p138 = scmp.le.s32.totalorder 1, %s10
    %p139 = scmp.lt.s32.totalorder %s10, 3
    %p140 = pnand %p138, %p139
    %p141 = pneg %p140
    // Predicated region
    $region9: #{_lambda_.22} parent=5 // pred_check
      _
    $region10: #{_lambda_.22} parent=5 // pred_check_branch
      %143 = sbr.rel (%p140) target = $region12
    $region11: #{_lambda_.22} parent=5 // pred_region
      %s144 = ssub.s32 %s10, 1
      // Predicated region
      $region13: #{_lambda_.22} parent=11 // pred_check
        %p145 = pneg %p83
      $region14: #{_lambda_.22} parent=11 // pred_check_branch
        %147 = sbr.rel (%p145) target = $region16
      $region15: #{_lambda_.22} parent=11 // pred_region
        _
      $region16: #{_lambda_.22} parent=11 // pred_fallthru
        _
      // Predicated region
      $region17: #{_lambda_.22} parent=11 // pred_check
        %p148 = pneg %p104
      $region18: #{_lambda_.22} parent=11 // pred_check_branch
        %150 = sbr.rel (%p148) target = $region20
      $region19: #{_lambda_.22} parent=11 // pred_region
        _
      $region20: #{_lambda_.22} parent=11 // pred_fallthru
        _
    $region12: #{_lambda_.22} parent=5 // pred_fallthru
      _
    %p151 = scmp.lt.s32.totalorder %s10, 2
    // Predicated region
    $region21: #{_lambda_.22} parent=5 // pred_check
      %p152 = pneg %p151
    $region22: #{_lambda_.22} parent=5 // pred_check_branch
      %154 = sbr.rel (%p152) target = $region24
    $region23: #{_lambda_.22} parent=5 // pred_region
      // Predicated region
      $region25: #{_lambda_.22} parent=23 // pred_check
        %p155 = pneg %p30
      $region26: #{_lambda_.22} parent=23 // pred_check_branch
        %157 = sbr.rel (%p155) target = $region28
      $region27: #{_lambda_.22} parent=23 // pred_region
        %p158 = scmp.lt.s32.totalorder %s10, 1
        %s159 = scalar_select %p158, %s10, 1
        %s160 = smul.addr %s159, 4
        %s161 = smul.addr %s160, 4
        %s162 = scalar_lea.vmem %s0, %s161
      $region28: #{_lambda_.22} parent=23 // pred_fallthru
        _
      // Predicated region
      $region29: #{_lambda_.22} parent=23 // pred_check
        %p163 = pneg %p56
      $region30: #{_lambda_.22} parent=23 // pred_check_branch
        %165 = sbr.rel (%p163) target = $region32
      $region31: #{_lambda_.22} parent=23 // pred_region
        %p166 = scmp.lt.s32.totalorder %s10, 1
        %s167 = scalar_select %p166, %s10, 1
        %s168 = smul.addr %s167, 8
        %s169 = scalar_lea.vmem %s1, %s168
      $region32: #{_lambda_.22} parent=23 // pred_fallthru
        _
    $region24: #{_lambda_.22} parent=5 // pred_fallthru
      _
    %p170 = scmp.le.s32.totalorder 1, %s10
    %p171 = scmp.lt.s32.totalorder %s10, 3
    %p172 = pnand %p170, %p171
    %p173 = pneg %p172
    // Predicated region
    $region33: #{_lambda_.22} parent=5 // pred_check
      _
    $region34: #{_lambda_.22} parent=5 // pred_check_branch
      %175 = sbr.rel (%p172) target = $region36
    $region35: #{_lambda_.22} parent=5 // pred_region
      %s176 = ssub.s32 %s10, 1
      %p177 = scmp.lt.s32.totalorder %s15, 1
      %s178 = scalar_select %p177, %s15, 1
      %s179 = smul.addr %s178, 4
      %s180 = smul.addr %s179, 4
      %s181 = scalar_lea.vmem %s0, %s180
      %p182 = pneg %p36
      %p183 = pneg %p33
      %p184 = scmp.lt.s32.totalorder %s15, 1
      %s185 = scalar_select %p184, %s15, 1
      %s186 = smul.addr %s185, 8
      %s187 = scalar_lea.vmem %s1, %s186
      %p188 = pneg %p62
      %p189 = pneg %p59
      %p190 = pneg %p83
      %p191 = pneg %p80
      %p192 = pneg %p104
      %p193 = pneg %p101
      %p194 = pneg %p130
      %p195 = pneg %p127
      %p196 = scmp.lt.s32.totalorder %s15, 1
      %s197 = scalar_select %p196, %s15, 1
      %s198 = smul.addr %s197, 8
      %s199 = scalar_lea.vmem %s4, %s198
      %p200 = scmp.lt.s32.totalorder %s15, 1
      %s201 = scalar_select %p200, %s15, 1
      %s202 = smul.addr %s201, 4
      %s203 = smul.addr %s202, 4
      %s204 = scalar_lea.vmem %s0, %s203
      %p205 = scmp.lt.s32.totalorder %s15, 1
      %s206 = scalar_select %p205, %s15, 1
      %s207 = smul.addr %s206, 8
      %s208 = scalar_lea.vmem %s1, %s207
      %p209 = scmp.lt.s32.totalorder %s15, 1
      %s210 = scalar_select %p209, %s15, 1
      %s211 = smul.addr %s210, 8
      %s212 = scalar_lea.vmem %s4, %s211
      %v213 = vld [vmem:[%s204] sm:$0xff]
      %v214 = vld [vmem:[%s204 + $0x8] sm:$0xff]
      %v215 = vld [vmem:[%s2] sm:$0xf]
      %v216 = vld [vmem:[%s2 + $0x4] sm:$0xf]
      %v217 = vld [vmem:[%s2 + $0x8] sm:$0xf]
      %v218 = vld [vmem:[%s2 + $0xc] sm:$0xf]
      %v219 = vld [vmem:[%s2 + $0x10] sm:$0xf]
      %v220 = vld [vmem:[%s2 + $0x14] sm:$0xf]
      %v221 = vld [vmem:[%s2 + $0x18] sm:$0xf]
      %v222 = vld [vmem:[%s2 + $0x1c] sm:$0xf]
      %v223 = vld [vmem:[%s2 + $0x20] sm:$0xf]
      %v224 = vld [vmem:[%s2 + $0x24] sm:$0xf]
      %v225 = vld [vmem:[%s2 + $0x28] sm:$0xf]
      %v226 = vld [vmem:[%s2 + $0x2c] sm:$0xf]
      %v227 = vld [vmem:[%s2 + $0x30] sm:$0xf]
      %v228 = vld [vmem:[%s2 + $0x34] sm:$0xf]
      %v229 = vld [vmem:[%s2 + $0x38] sm:$0xf]
      %v230 = vld [vmem:[%s2 + $0x3c] sm:$0xf]
      %v231 = vld [vmem:[%s2 + $0x40] sm:$0xf]
      %v232 = vld [vmem:[%s2 + $0x44] sm:$0xf]
      %v233 = vld [vmem:[%s2 + $0x48] sm:$0xf]
      %v234 = vld [vmem:[%s2 + $0x4c] sm:$0xf]
      %v235 = vld [vmem:[%s2 + $0x50] sm:$0xf]
      %v236 = vld [vmem:[%s2 + $0x54] sm:$0xf]
      %v237 = vld [vmem:[%s2 + $0x58] sm:$0xf]
      %v238 = vld [vmem:[%s2 + $0x5c] sm:$0xf]
      %v239 = vld [vmem:[%s2 + $0x60] sm:$0xf]
      %v240 = vld [vmem:[%s2 + $0x64] sm:$0xf]
      %v241 = vld [vmem:[%s2 + $0x68] sm:$0xf]
      %v242 = vld [vmem:[%s2 + $0x6c] sm:$0xf]
      %v243 = vld [vmem:[%s2 + $0x70] sm:$0xf]
      %v244 = vld [vmem:[%s2 + $0x74] sm:$0xf]
      %v245 = vld [vmem:[%s2 + $0x78] sm:$0xf]
      %v246 = vld [vmem:[%s2 + $0x7c] sm:$0xf]
      %v247 = vld [vmem:[%s2 + $0x80] sm:$0xf]
      %v248 = vld [vmem:[%s2 + $0x84] sm:$0xf]
      %v249 = vld [vmem:[%s2 + $0x88] sm:$0xf]
      %v250 = vld [vmem:[%s2 + $0x8c] sm:$0xf]
      %v251 = vld [vmem:[%s2 + $0x90] sm:$0xf]
      %v252 = vld [vmem:[%s2 + $0x94] sm:$0xf]
      %v253 = vld [vmem:[%s2 + $0x98] sm:$0xf]
      %v254 = vld [vmem:[%s2 + $0x9c] sm:$0xf]
      %v255 = vld [vmem:[%s2 + $0xa0] sm:$0xf]
      %v256 = vld [vmem:[%s2 + $0xa4] sm:$0xf]
      %v257 = vld [vmem:[%s2 + $0xa8] sm:$0xf]
      %v258 = vld [vmem:[%s2 + $0xac] sm:$0xf]
      %v259 = vld [vmem:[%s2 + $0xb0] sm:$0xf]
      %v260 = vld [vmem:[%s2 + $0xb4] sm:$0xf]
      %v261 = vld [vmem:[%s2 + $0xb8] sm:$0xf]
      %v262 = vld [vmem:[%s2 + $0xbc] sm:$0xf]
      %v263 = vld [vmem:[%s2 + $0xc0] sm:$0xf]
      %v264 = vld [vmem:[%s2 + $0xc4] sm:$0xf]
      %v265 = vld [vmem:[%s2 + $0xc8] sm:$0xf]
      %v266 = vld [vmem:[%s2 + $0xcc] sm:$0xf]
      %v267 = vld [vmem:[%s2 + $0xd0] sm:$0xf]
      %v268 = vld [vmem:[%s2 + $0xd4] sm:$0xf]
      %v269 = vld [vmem:[%s2 + $0xd8] sm:$0xf]
      %v270 = vld [vmem:[%s2 + $0xdc] sm:$0xf]
      %v271 = vld [vmem:[%s2 + $0xe0] sm:$0xf]
      %v272 = vld [vmem:[%s2 + $0xe4] sm:$0xf]
      %v273 = vld [vmem:[%s2 + $0xe8] sm:$0xf]
      %v274 = vld [vmem:[%s2 + $0xec] sm:$0xf]
      %v275 = vld [vmem:[%s2 + $0xf0] sm:$0xf]
      %v276 = vld [vmem:[%s2 + $0xf4] sm:$0xf]
      %v277 = vld [vmem:[%s2 + $0xf8] sm:$0xf]
      %v278 = vld [vmem:[%s2 + $0xfc] sm:$0xf]
      %v279 = vld [vmem:[%s3] sm:$0x1]
      %v280 = vperm.slane %v279, 0
      %v283 = vunpack.c.l.b16 %v213
      %v284 = vunpack.c.h.b16 %v213
      %v285 = vunpack.c.l.b16 %v214
      %v286 = vunpack.c.h.b16 %v214
      %v287 = vpack.c.b16 %v283, %v283
      %v288 = vpack.c.b16 %v284, %v284
      %v289 = vpack.c.b16 %v285, %v285
      %v290 = vpack.c.b16 %v286, %v286
      %v359 = vunpack.c.l.b16 %v215
      %v360 = vunpack.c.l.b16 %v216
      %v361 = vunpack.c.l.b16 %v217
      %v362 = vunpack.c.l.b16 %v218
      %v363 = vunpack.c.l.b16 %v219
      %v364 = vunpack.c.l.b16 %v220
      %v365 = vunpack.c.l.b16 %v221
      %v366 = vunpack.c.l.b16 %v222
      %v367 = vunpack.c.l.b16 %v223
      %v368 = vunpack.c.l.b16 %v224
      %v369 = vunpack.c.l.b16 %v225
      %v370 = vunpack.c.l.b16 %v226
      %v371 = vunpack.c.l.b16 %v227
      %v372 = vunpack.c.l.b16 %v228
      %v373 = vunpack.c.l.b16 %v229
      %v374 = vunpack.c.l.b16 %v230
      %v375 = vunpack.c.l.b16 %v231
      %v376 = vunpack.c.l.b16 %v232
      %v377 = vunpack.c.l.b16 %v233
      %v378 = vunpack.c.l.b16 %v234
      %v379 = vunpack.c.l.b16 %v235
      %v380 = vunpack.c.l.b16 %v236
      %v381 = vunpack.c.l.b16 %v237
      %v382 = vunpack.c.l.b16 %v238
      %v383 = vunpack.c.l.b16 %v239
      %v384 = vunpack.c.l.b16 %v240
      %v385 = vunpack.c.l.b16 %v241
      %v386 = vunpack.c.l.b16 %v242
      %v387 = vunpack.c.l.b16 %v243
      %v388 = vunpack.c.l.b16 %v244
      %v389 = vunpack.c.l.b16 %v245
      %v390 = vunpack.c.l.b16 %v246
      %v391 = vunpack.c.l.b16 %v247
      %v392 = vunpack.c.l.b16 %v248
      %v393 = vunpack.c.l.b16 %v249
      %v394 = vunpack.c.l.b16 %v250
      %v395 = vunpack.c.l.b16 %v251
      %v396 = vunpack.c.l.b16 %v252
      %v397 = vunpack.c.l.b16 %v253
      %v398 = vunpack.c.l.b16 %v254
      %v399 = vunpack.c.l.b16 %v255
      %v400 = vunpack.c.l.b16 %v256
      %v401 = vunpack.c.l.b16 %v257
      %v402 = vunpack.c.l.b16 %v258
      %v403 = vunpack.c.l.b16 %v259
      %v404 = vunpack.c.l.b16 %v260
      %v405 = vunpack.c.l.b16 %v261
      %v406 = vunpack.c.l.b16 %v262
      %v407 = vunpack.c.l.b16 %v263
      %v408 = vunpack.c.l.b16 %v264
      %v409 = vunpack.c.l.b16 %v265
      %v410 = vunpack.c.l.b16 %v266
      %v411 = vunpack.c.l.b16 %v267
      %v412 = vunpack.c.l.b16 %v268
      %v413 = vunpack.c.l.b16 %v269
      %v414 = vunpack.c.l.b16 %v270
      %v415 = vunpack.c.l.b16 %v271
      %v416 = vunpack.c.l.b16 %v272
      %v417 = vunpack.c.l.b16 %v273
      %v418 = vunpack.c.l.b16 %v274
      %v419 = vunpack.c.l.b16 %v275
      %v420 = vunpack.c.l.b16 %v276
      %v421 = vunpack.c.l.b16 %v277
      %v422 = vunpack.c.l.b16 %v278
      %v423 = vpack.c.b16 %v360, %v359
      %v424 = vpack.c.b16 %v362, %v361
      %v425 = vpack.c.b16 %v364, %v363
      %v426 = vpack.c.b16 %v366, %v365
      %v427 = vpack.c.b16 %v368, %v367
      %v428 = vpack.c.b16 %v370, %v369
      %v429 = vpack.c.b16 %v372, %v371
      %v430 = vpack.c.b16 %v374, %v373
      %v431 = vpack.c.b16 %v376, %v375
      %v432 = vpack.c.b16 %v378, %v377
      %v433 = vpack.c.b16 %v380, %v379
      %v434 = vpack.c.b16 %v382, %v381
      %v435 = vpack.c.b16 %v384, %v383
      %v436 = vpack.c.b16 %v386, %v385
      %v437 = vpack.c.b16 %v388, %v387
      %v438 = vpack.c.b16 %v390, %v389
      %v439 = vpack.c.b16 %v392, %v391
      %v440 = vpack.c.b16 %v394, %v393
      %v441 = vpack.c.b16 %v396, %v395
      %v442 = vpack.c.b16 %v398, %v397
      %v443 = vpack.c.b16 %v400, %v399
      %v444 = vpack.c.b16 %v402, %v401
      %v445 = vpack.c.b16 %v404, %v403
      %v446 = vpack.c.b16 %v406, %v405
      %v447 = vpack.c.b16 %v408, %v407
      %v448 = vpack.c.b16 %v410, %v409
      %v449 = vpack.c.b16 %v412, %v411
      %v450 = vpack.c.b16 %v414, %v413
      %v451 = vpack.c.b16 %v416, %v415
      %v452 = vpack.c.b16 %v418, %v417
      %v453 = vpack.c.b16 %v420, %v419
      %v454 = vpack.c.b16 %v422, %v421
      %487 = vmatpush.bf16.msra.mxu0 %v430
      %488 = vmatpush.bf16.msra.mxu0 %v429
      %489 = vmatpush.bf16.msra.mxu0 %v428
      %490 = vmatpush.bf16.msra.mxu0 %v427
      %491 = vmatpush.bf16.msra.mxu0 %v426
      %492 = vmatpush.bf16.msra.mxu0 %v425
      %493 = vmatpush.bf16.msra.mxu0 %v424
      %494 = vmatpush.bf16.msra.mxu0 %v423
      %495 = vmatmul.bf16.gmra.mxu0 %v287
      %v496 = vpop.f32.mrf.mxu0
      %v497 = vadd.f32 %v280, %v496
      %v498 = vpop.f32.mrf.mxu0
      %499 = vdwg.mxu0
      %500 = vmatpush.bf16.msra.mxu0 %v438
      %501 = vmatpush.bf16.msra.mxu0 %v437
      %502 = vmatpush.bf16.msra.mxu0 %v436
      %503 = vmatpush.bf16.msra.mxu0 %v435
      %504 = vmatpush.bf16.msra.mxu0 %v434
      %505 = vmatpush.bf16.msra.mxu0 %v433
      %506 = vmatpush.bf16.msra.mxu0 %v432
      %507 = vmatpush.bf16.msra.mxu0 %v431
      %508 = vmatmul.bf16.gmra.mxu0 %v288
      %v509 = vpop.f32.mrf.mxu0
      %v510 = vadd.f32 %v497, %v509
      %v511 = vpop.f32.mrf.mxu0
      %512 = vdwg.mxu0
      %513 = vmatpush.bf16.msra.mxu0 %v446
      %514 = vmatpush.bf16.msra.mxu0 %v445
      %515 = vmatpush.bf16.msra.mxu0 %v444
      %516 = vmatpush.bf16.msra.mxu0 %v443
      %517 = vmatpush.bf16.msra.mxu0 %v442
      %518 = vmatpush.bf16.msra.mxu0 %v441
      %519 = vmatpush.bf16.msra.mxu0 %v440
      %520 = vmatpush.bf16.msra.mxu0 %v439
      %521 = vmatmul.bf16.gmra.mxu0 %v289
      %v522 = vpop.f32.mrf.mxu0
      %v523 = vadd.f32 %v510, %v522
      %v524 = vpop.f32.mrf.mxu0
      %525 = vdwg.mxu0
      %526 = vmatpush.bf16.msra.mxu0 %v454
      %527 = vmatpush.bf16.msra.mxu0 %v453
      %528 = vmatpush.bf16.msra.mxu0 %v452
      %529 = vmatpush.bf16.msra.mxu0 %v451
      %530 = vmatpush.bf16.msra.mxu0 %v450
      %531 = vmatpush.bf16.msra.mxu0 %v449
      %532 = vmatpush.bf16.msra.mxu0 %v448
      %533 = vmatpush.bf16.msra.mxu0 %v447
      %534 = vmatmul.bf16.gmra.mxu0 %v290
      %v535 = vpop.f32.mrf.mxu0
      %v536 = vadd.f32 %v523, %v535
      %v537 = vpop.f32.mrf.mxu0
      %538 = vdwg.mxu0
      %v539 = vld [vmem:[%s3 + $0x1] sm:$0x1]
      %v540 = vld [vmem:[%s3 + $0x2] sm:$0x1]
      %vm541 = vcmask 261120
      %v542 = vsel %vm541, %v536, 0.0
      %543 = vadd.xlane.f32.xlu0 %v542
      %v544 = vpop.xlane.xlu0 %543
      %v545 = vrcp.pop 32.0
      %v546 = vmul.f32 32.0, %v545
      %v547 = vsub.f32 1.0, %v546
      %v548 = vmul.f32 %v545, %v547
      %v549 = vadd.f32 %v545, %v548
      %vm550 = vweird.f32 %v545
      %v551 = vsel %vm550, %v545, %v549
      %v552 = vmul.f32 %v544, %v551
      %v553 = vsub.f32 %v536, %v552
      %v554 = vmul.f32 %v553, %v553
      %v555 = vsel %vm541, %v554, 0.0
      %556 = vadd.xlane.f32.xlu0 %v555
      %v557 = vpop.xlane.xlu0 %556
      %v558 = vmul.f32 %v557, %v551
      %v559 = vadd.f32 %v558, 1e-05
      %v560 = vrsqrt.pop %v559
      %v561 = vmul.f32 %v560, %v559
      %v562 = vmul.f32 %v561, %v560
      %v563 = vmul.f32 0.5, %v562
      %v564 = vsub.f32 1.5, %v563
      %v565 = vmul.f32 %v560, %v564
      %vm566 = vweird.f32 %v559
      %vm567 = vweird.f32 %v560
      %vm568 = vmor %vm566, %vm567
      %v569 = vsel %vm568, %v560, %v565
      %v570 = vmul.f32 %v553, %v569
      %v571 = vperm.slane %v539, 0
      %v572 = vmul.f32 %v570, %v571
      %v573 = vperm.slane %v540, 0
      %v574 = vadd.f32 %v572, %v573
      %v575 = vmax.f32 %v574, 0.0
      %v576 = vld [vmem:[%s208] sm:$0xff]
      %v577 = vadd.f32 %v576, %v575
      %v578 = vld [vmem:[%s3 + $0x3] sm:$0x1]
      %v579 = vld [vmem:[%s3 + $0x4] sm:$0x1]
      %v580 = vsel %vm541, %v577, 0.0
      %581 = vadd.xlane.f32.xlu0 %v580
      %v582 = vpop.xlane.xlu0 %581
      %v583 = vmul.f32 %v582, %v551
      %v584 = vsub.f32 %v577, %v583
      %v585 = vmul.f32 %v584, %v584
      %v586 = vsel %vm541, %v585, 0.0
      %587 = vadd.xlane.f32.xlu0 %v586
      %v588 = vpop.xlane.xlu0 %587
      %v589 = vmul.f32 %v588, %v551
      %v590 = vadd.f32 %v589, 1e-05
      %v591 = vrsqrt.pop %v590
      %v592 = vmul.f32 %v591, %v590
      %v593 = vmul.f32 %v592, %v591
      %v594 = vmul.f32 0.5, %v593
      %v595 = vsub.f32 1.5, %v594
      %v596 = vmul.f32 %v591, %v595
      %vm597 = vweird.f32 %v590
      %vm598 = vweird.f32 %v591
      %vm599 = vmor %vm597, %vm598
      %v600 = vsel %vm599, %v591, %v596
      %v601 = vmul.f32 %v584, %v600
      %v602 = vperm.slane %v578, 0
      %v603 = vmul.f32 %v601, %v602
      %v604 = vperm.slane %v579, 0
      %v605 = vadd.f32 %v603, %v604
      %606 = vst.msk [vmem:[%s212] sm:$0xff] %vm541, %v605
      %p607 = scmp.lt.s32.totalorder %s15, 1
      %s608 = scalar_select %p607, %s15, 1
      %s609 = smul.addr %s608, 8
      %s610 = scalar_lea.vmem %s4, %s609
      // Predicated region
      $region37: #{_lambda_.22} parent=35 // pred_check
        %p611 = pneg %p127
      $region38: #{_lambda_.22} parent=35 // pred_check_branch
        %613 = sbr.rel (%p611) target = $region40
      $region39: #{_lambda_.22} parent=35 // pred_region
        _
      $region40: #{_lambda_.22} parent=35 // pred_fallthru
        _
    $region36: #{_lambda_.22} parent=5 // pred_fallthru
      _
    %p614 = scmp.le.s32.totalorder 2, %s10
    // Predicated region
    $region41: #{_lambda_.22} parent=5 // pred_check
      %p615 = pneg %p614
    $region42: #{_lambda_.22} parent=5 // pred_check_branch
      %617 = sbr.rel (%p615) target = $region44
    $region43: #{_lambda_.22} parent=5 // pred_region
      %s618 = ssub.s32 %s10, 2
      // Predicated region
      $region45: #{_lambda_.22} parent=43 // pred_check
        %p619 = pneg %p133
      $region46: #{_lambda_.22} parent=43 // pred_check_branch
        %621 = sbr.rel (%p619) target = $region48
      $region47: #{_lambda_.22} parent=43 // pred_region
        %p622 = scmp.lt.s32.totalorder %s16, 1
        %s623 = scalar_select %p622, %s16, 1
        %s624 = smul.addr %s623, 8
        %s625 = scalar_lea.vmem %s4, %s624
      $region48: #{_lambda_.22} parent=43 // pred_fallthru
        _
    $region44: #{_lambda_.22} parent=5 // pred_fallthru
      _
  $region6: #{_lambda_.22} parent=0 // loop_footer
    %s14 = sadd.s32 1, %s10
  $region7: #{_lambda_.22} parent=0 // loop_footer_branch
    %9 = sbr.rel target = $region3
  $region8: #{_lambda_.22} parent=0 // loop_exit
    _

// kernel: _lambda_.23
$region0: #{_lambda_.23}
  #allocation0 [shape = 'u32[]', space=smem, size = 0x4, offset = 0x4, fixed_abs, tag = 'smem constant byte address 0x4 - core index']
  #allocation1 [shape = 'u32[72,128]{1,0:T(1,128)}', space=vmem, size = 0x9000, scoped, tag = 'internal scratch']
  %s0 = inlined_call_operand.vmem [shape: f32[16,32], index: 0, kind: input, shape index: {}]
  %s1 = inlined_call_operand.vmem [shape: bf16[32,64], index: 1, kind: input, shape index: {}]
  %s2 = inlined_call_operand.vmem [shape: f32[1,64], index: 2, kind: input, shape index: {}]
  %s3 = inlined_call_operand.vmem [shape: bf16[64,32], index: 3, kind: input, shape index: {}]
  %s4 = inlined_call_operand.vmem [shape: f32[3,32], index: 4, kind: input, shape index: {}]
  %s5 = inlined_call_operand.vmem [shape: f32[16,32], index: 5, kind: output, shape index: {}]
  %s6 = sld [smem:[#allocation0]]
  $region53: #{_lambda_.23} parent=0
    _
  %s8 = ssub.s32 1, %s6
  %s9 = scalar_select 0, %s8, %s6
  loop: start=0, step=1, limit=4
  $region2: #{_lambda_.23} parent=0 // loop_pre_header
    _
  $region3: #{_lambda_.23} parent=0 // loop_header
    %s11 = sphi 0, %s15
    %p12 = scmp.ge.s32.totalorder %s11, 4
    %s21 = sphi 0, %s23
    %s24 = sphi 0, %s21
    %s25 = sphi 0, %s24
    %s41 = sphi 0, %s25
    %s45 = sphi 0, %s45
    %s47 = sphi 0, %s45
    %s48 = sphi 0, %s47
    %s62 = sphi 0, %s48
    %s66 = sphi 0, %s66
    %s68 = sphi 0, %s66
    %s69 = sphi 0, %s68
    %s83 = sphi 0, %s69
    %s87 = sphi 0, %s87
    %s89 = sphi 0, %s87
    %s90 = sphi 0, %s89
    %s104 = sphi 0, %s90
    %s108 = sphi 0, %s108
    %s110 = sphi 0, %s108
    %s111 = sphi 0, %s110
    %s125 = sphi 0, %s111
    %s131 = sphi 0, %s133
    %s134 = sphi 0, %s131
    %s135 = sphi 0, %s134
    %s151 = sphi 0, %s135
  $region4: #{_lambda_.23} parent=0 // loop_header_branch
    %14 = sbr.rel (%p12) target = $region8
  $region5: #{_lambda_.23} parent=0 // loop_body
    %s16 = ssub.s32 %s11, 1
    %s17 = ssub.s32 %s11, 2
    %s18 = sadd.s32 %s11, 1
    %s19 = ssub.s32 %s11, %s18
    %p20 = scmp.eq.s32.totalorder %s19, 0
    %s22 = sadd.s32 %s21, 1
    %s23 = scalar_select %p20, %s21, %s22
    %p26 = pneg %p20
    %p27 = scmp.eq.s32.totalorder %s11, 1
    %p28 = por %p26, %p27
    %p29 = scmp.ne.s32.totalorder %s21, %s24
    %p30 = scmp.eq.s32.totalorder %s11, 0
    %p31 = por %p29, %p30
    %p32 = scmp.ne.s32.totalorder %s21, %s24
    %p33 = scmp.eq.s32.totalorder %s16, 1
    %p34 = por %p32, %p33
    %p35 = scmp.ne.s32.totalorder %s24, %s25
    %p36 = scmp.eq.s32.totalorder %s16, 0
    %p37 = por %p35, %p36
    %p38 = scmp.ne.s32.totalorder %s24, %s25
    %p39 = scmp.eq.s32.totalorder %s17, 1
    %p40 = por %p38, %p39
    %p42 = scmp.ne.s32.totalorder %s25, %s41
    %p43 = scmp.eq.s32.totalorder %s17, 0
    %p44 = por %p42, %p43
    %s46 = sadd.s32 %s45, 1
    %p49 = scmp.eq.s32.totalorder %s11, 1
    %p50 = scmp.ne.s32.totalorder %s45, %s47
    %p51 = scmp.eq.s32.totalorder %s11, 0
    %p52 = por %p50, %p51
    %p53 = scmp.ne.s32.totalorder %s45, %s47
    %p54 = scmp.eq.s32.totalorder %s16, 1
    %p55 = por %p53, %p54
    %p56 = scmp.ne.s32.totalorder %s47, %s48
    %p57 = scmp.eq.s32.totalorder %s16, 0
    %p58 = por %p56, %p57
    %p59 = scmp.ne.s32.totalorder %s47, %s48
    %p60 = scmp.eq.s32.totalorder %s17, 1
    %p61 = por %p59, %p60
    %p63 = scmp.ne.s32.totalorder %s48, %s62
    %p64 = scmp.eq.s32.totalorder %s17, 0
    %p65 = por %p63, %p64
    %s67 = sadd.s32 %s66, 1
    %p70 = scmp.eq.s32.totalorder %s11, 1
    %p71 = scmp.ne.s32.totalorder %s66, %s68
    %p72 = scmp.eq.s32.totalorder %s11, 0
    %p73 = por %p71, %p72
    %p74 = scmp.ne.s32.totalorder %s66, %s68
    %p75 = scmp.eq.s32.totalorder %s16, 1
    %p76 = por %p74, %p75
    %p77 = scmp.ne.s32.totalorder %s68, %s69
    %p78 = scmp.eq.s32.totalorder %s16, 0
    %p79 = por %p77, %p78
    %p80 = scmp.ne.s32.totalorder %s68, %s69
    %p81 = scmp.eq.s32.totalorder %s17, 1
    %p82 = por %p80, %p81
    %p84 = scmp.ne.s32.totalorder %s69, %s83
    %p85 = scmp.eq.s32.totalorder %s17, 0
    %p86 = por %p84, %p85
    %s88 = sadd.s32 %s87, 1
    %p91 = scmp.eq.s32.totalorder %s11, 1
    %p92 = scmp.ne.s32.totalorder %s87, %s89
    %p93 = scmp.eq.s32.totalorder %s11, 0
    %p94 = por %p92, %p93
    %p95 = scmp.ne.s32.totalorder %s87, %s89
    %p96 = scmp.eq.s32.totalorder %s16, 1
    %p97 = por %p95, %p96
    %p98 = scmp.ne.s32.totalorder %s89, %s90
    %p99 = scmp.eq.s32.totalorder %s16, 0
    %p100 = por %p98, %p99
    %p101 = scmp.ne.s32.totalorder %s89, %s90
    %p102 = scmp.eq.s32.totalorder %s17, 1
    %p103 = por %p101, %p102
    %p105 = scmp.ne.s32.totalorder %s90, %s104
    %p106 = scmp.eq.s32.totalorder %s17, 0
    %p107 = por %p105, %p106
    %s109 = sadd.s32 %s108, 1
    %p112 = scmp.eq.s32.totalorder %s11, 1
    %p113 = scmp.ne.s32.totalorder %s108, %s110
    %p114 = scmp.eq.s32.totalorder %s11, 0
    %p115 = por %p113, %p114
    %p116 = scmp.ne.s32.totalorder %s108, %s110
    %p117 = scmp.eq.s32.totalorder %s16, 1
    %p118 = por %p116, %p117
    %p119 = scmp.ne.s32.totalorder %s110, %s111
    %p120 = scmp.eq.s32.totalorder %s16, 0
    %p121 = por %p119, %p120
    %p122 = scmp.ne.s32.totalorder %s110, %s111
    %p123 = scmp.eq.s32.totalorder %s17, 1
    %p124 = por %p122, %p123
    %p126 = scmp.ne.s32.totalorder %s111, %s125
    %p127 = scmp.eq.s32.totalorder %s17, 0
    %p128 = por %p126, %p127
    %s129 = ssub.s32 %s11, %s18
    %p130 = scmp.eq.s32.totalorder %s129, 0
    %s132 = sadd.s32 %s131, 1
    %s133 = scalar_select %p130, %s131, %s132
    %p136 = pneg %p130
    %p137 = scmp.eq.s32.totalorder %s11, 1
    %p138 = por %p136, %p137
    %p139 = scmp.ne.s32.totalorder %s131, %s134
    %p140 = scmp.eq.s32.totalorder %s11, 0
    %p141 = por %p139, %p140
    %p142 = scmp.ne.s32.totalorder %s131, %s134
    %p143 = scmp.eq.s32.totalorder %s16, 1
    %p144 = por %p142, %p143
    %p145 = scmp.ne.s32.totalorder %s134, %s135
    %p146 = scmp.eq.s32.totalorder %s16, 0
    %p147 = por %p145, %p146
    %p148 = scmp.ne.s32.totalorder %s134, %s135
    %p149 = scmp.eq.s32.totalorder %s17, 1
    %p150 = por %p148, %p149
    %p152 = scmp.ne.s32.totalorder %s135, %s151
    %p153 = scmp.eq.s32.totalorder %s17, 0
    %p154 = por %p152, %p153
    %p155 = scmp.le.s32.totalorder 1, %s11
    %p156 = scmp.lt.s32.totalorder %s11, 3
    %p157 = pnand %p155, %p156
    %p158 = pneg %p157
    // Predicated region
    $region9: #{_lambda_.23} parent=5 // pred_check
      _
    $region10: #{_lambda_.23} parent=5 // pred_check_branch
      %160 = sbr.rel (%p157) target = $region12
    $region11: #{_lambda_.23} parent=5 // pred_region
      %s161 = ssub.s32 %s11, 1
      // Predicated region
      $region13: #{_lambda_.23} parent=11 // pred_check
        %p162 = pneg %p58
      $region14: #{_lambda_.23} parent=11 // pred_check_branch
        %164 = sbr.rel (%p162) target = $region16
      $region15: #{_lambda_.23} parent=11 // pred_region
        _
      $region16: #{_lambda_.23} parent=11 // pred_fallthru
        _
      // Predicated region
      $region17: #{_lambda_.23} parent=11 // pred_check
        %p165 = pneg %p79
      $region18: #{_lambda_.23} parent=11 // pred_check_branch
        %167 = sbr.rel (%p165) target = $region20
      $region19: #{_lambda_.23} parent=11 // pred_region
        _
      $region20: #{_lambda_.23} parent=11 // pred_fallthru
        _
      // Predicated region
      $region21: #{_lambda_.23} parent=11 // pred_check
        %p168 = pneg %p100
      $region22: #{_lambda_.23} parent=11 // pred_check_branch
        %170 = sbr.rel (%p168) target = $region24
      $region23: #{_lambda_.23} parent=11 // pred_region
        _
      $region24: #{_lambda_.23} parent=11 // pred_fallthru
        _
      // Predicated region
      $region25: #{_lambda_.23} parent=11 // pred_check
        %p171 = pneg %p121
      $region26: #{_lambda_.23} parent=11 // pred_check_branch
        %173 = sbr.rel (%p171) target = $region28
      $region27: #{_lambda_.23} parent=11 // pred_region
        _
      $region28: #{_lambda_.23} parent=11 // pred_fallthru
        _
    $region12: #{_lambda_.23} parent=5 // pred_fallthru
      _
    %p174 = scmp.lt.s32.totalorder %s11, 2
    // Predicated region
    $region29: #{_lambda_.23} parent=5 // pred_check
      %p175 = pneg %p174
    $region30: #{_lambda_.23} parent=5 // pred_check_branch
      %177 = sbr.rel (%p175) target = $region32
    $region31: #{_lambda_.23} parent=5 // pred_region
      // Predicated region
      $region33: #{_lambda_.23} parent=31 // pred_check
        %p178 = pneg %p31
      $region34: #{_lambda_.23} parent=31 // pred_check_branch
        %180 = sbr.rel (%p178) target = $region36
      $region35: #{_lambda_.23} parent=31 // pred_region
        %p181 = scmp.lt.s32.totalorder %s11, 1
        %s182 = scalar_select %p181, %s11, 1
        %s183 = smul.addr %s182, 8
        %s184 = scalar_lea.vmem %s0, %s183
      $region36: #{_lambda_.23} parent=31 // pred_fallthru
        _
    $region32: #{_lambda_.23} parent=5 // pred_fallthru
      _
    %p185 = scmp.le.s32.totalorder 1, %s11
    %p186 = scmp.lt.s32.totalorder %s11, 3
    %p187 = pnand %p185, %p186
    %p188 = pneg %p187
    // Predicated region
    $region37: #{_lambda_.23} parent=5 // pred_check
      _
    $region38: #{_lambda_.23} parent=5 // pred_check_branch
      %190 = sbr.rel (%p187) target = $region40
    $region39: #{_lambda_.23} parent=5 // pred_region
      %s191 = ssub.s32 %s11, 1
      %p192 = scmp.lt.s32.totalorder %s16, 1
      %s193 = scalar_select %p192, %s16, 1
      %s194 = smul.addr %s193, 8
      %s195 = scalar_lea.vmem %s0, %s194
      %p196 = pneg %p37
      %p197 = pneg %p34
      %p198 = pneg %p58
      %p199 = pneg %p55
      %p200 = pneg %p79
      %p201 = pneg %p76
      %p202 = pneg %p100
      %p203 = pneg %p97
      %p204 = pneg %p121
      %p205 = pneg %p118
      %p206 = pneg %p147
      %p207 = pneg %p144
      %p208 = scmp.lt.s32.totalorder %s16, 1
      %s209 = scalar_select %p208, %s16, 1
      %s210 = smul.addr %s209, 8
      %s211 = scalar_lea.vmem %s5, %s210
      %p212 = scmp.lt.s32.totalorder %s16, 1
      %s213 = scalar_select %p212, %s16, 1
      %s214 = smul.addr %s213, 8
      %s215 = scalar_lea.vmem %s0, %s214
      %p216 = scmp.lt.s32.totalorder %s16, 1
      %s217 = scalar_select %p216, %s16, 1
      %s218 = smul.addr %s217, 8
      %s219 = scalar_lea.vmem %s5, %s218
      %v221 = vld [vmem:[%s215] sm:$0xff]
      %v222 = vpack.c.bf16 %v221, %v221
      %v223 = vld [vmem:[%s1] sm:$0xf]
      %v224 = vld [vmem:[%s1 + $0x4] sm:$0xf]
      %v225 = vld [vmem:[%s1 + $0x8] sm:$0xf]
      %v226 = vld [vmem:[%s1 + $0xc] sm:$0xf]
      %v227 = vld [vmem:[%s2] sm:$0x1]
      %v229 = vperm.slane %v227, 0
      %v235 = vunpack.c.l.b16 %v223
      %v236 = vunpack.c.l.b16 %v224
      %v237 = vunpack.c.l.b16 %v225
      %v238 = vunpack.c.l.b16 %v226
      %v239 = vpack.c.b16 %v236, %v235
      %v240 = vpack.c.b16 %v238, %v237
      %vm243 = vcmask 261120
      %v245 = vsel %vm243, %v222, 0
      %247 = vmatpush.bf16.msra.mxu0 0
      %248 = vmatpush.bf16.msra.mxu0 0
      %249 = vmatpush.bf16.msra.mxu0 0
      %250 = vmatpush.bf16.msra.mxu0 0
      %251 = vmatpush.bf16.msra.mxu0 0
      %252 = vmatpush.bf16.msra.mxu0 0
      %253 = vmatpush.bf16.msra.mxu0 %v240
      %254 = vmatpush.bf16.msra.mxu0 %v239
      %255 = vmatmul.bf16.gmra.mxu0 %v245
      %v256 = vpop.f32.mrf.mxu0
      %v257 = vadd.f32 %v229, %v256
      %v258 = vpop.f32.mrf.mxu0
      %259 = vdwg.mxu0
      %v260 = vmax.f32 %v257, 0.0
      %v261 = vpack.c.bf16 %v260, %v260
      %v262 = vld [vmem:[%s3] sm:$0xf]
      %v263 = vld [vmem:[%s3 + $0x4] sm:$0xf]
      %v264 = vld [vmem:[%s3 + $0x8] sm:$0xf]
      %v265 = vld [vmem:[%s3 + $0xc] sm:$0xf]
      %v266 = vld [vmem:[%s3 + $0x10] sm:$0xf]
      %v267 = vld [vmem:[%s3 + $0x14] sm:$0xf]
      %v268 = vld [vmem:[%s3 + $0x18] sm:$0xf]
      %v269 = vld [vmem:[%s3 + $0x1c] sm:$0xf]
      %v270 = vld [vmem:[%s4] sm:$0x1]
      %v271 = vperm.slane %v270, 0
      %v280 = vunpack.c.l.b16 %v262
      %v281 = vunpack.c.l.b16 %v263
      %v282 = vunpack.c.l.b16 %v264
      %v283 = vunpack.c.l.b16 %v265
      %v284 = vunpack.c.l.b16 %v266
      %v285 = vunpack.c.l.b16 %v267
      %v286 = vunpack.c.l.b16 %v268
      %v287 = vunpack.c.l.b16 %v269
      %v288 = vpack.c.b16 %v281, %v280
      %v289 = vpack.c.b16 %v283, %v282
      %v290 = vpack.c.b16 %v285, %v284
      %v291 = vpack.c.b16 %v287, %v286
      %vm296 = vcmask 523264
      %v298 = vsel %vm296, %v261, 0
      %300 = vmatpush.bf16.msra.mxu0 0
      %301 = vmatpush.bf16.msra.mxu0 0
      %302 = vmatpush.bf16.msra.mxu0 0
      %303 = vmatpush.bf16.msra.mxu0 0
      %304 = vmatpush.bf16.msra.mxu0 %v291
      %305 = vmatpush.bf16.msra.mxu0 %v290
      %306 = vmatpush.bf16.msra.mxu0 %v289
      %307 = vmatpush.bf16.msra.mxu0 %v288
      %308 = vmatmul.bf16.gmra.mxu0 %v298
      %v309 = vpop.f32.mrf.mxu0
      %v310 = vadd.f32 %v271, %v309
      %v311 = vpop.f32.mrf.mxu0
      %312 = vdwg.mxu0
      %v313 = vadd.f32 %v221, %v310
      %v314 = vld [vmem:[%s4 + $0x1] sm:$0x1]
      %v315 = vld [vmem:[%s4 + $0x2] sm:$0x1]
      %v316 = vsel %vm243, %v313, 0.0
      %317 = vadd.xlane.f32.xlu0 %v316
      %v318 = vpop.xlane.xlu0 %317
      %v319 = vrcp.pop 32.0
      %v320 = vmul.f32 32.0, %v319
      %v321 = vsub.f32 1.0, %v320
      %v322 = vmul.f32 %v319, %v321
      %v323 = vadd.f32 %v319, %v322
      %vm324 = vweird.f32 %v319
      %v325 = vsel %vm324, %v319, %v323
      %v326 = vmul.f32 %v318, %v325
      %v327 = vsub.f32 %v313, %v326
      %v328 = vmul.f32 %v327, %v327
      %v329 = vsel %vm243, %v328, 0.0
      %330 = vadd.xlane.f32.xlu0 %v329
      %v331 = vpop.xlane.xlu0 %330
      %v332 = vmul.f32 %v331, %v325
      %v333 = vadd.f32 %v332, 1e-05
      %v334 = vrsqrt.pop %v333
      %v335 = vmul.f32 %v334, %v333
      %v336 = vmul.f32 %v335, %v334
      %v337 = vmul.f32 0.5, %v336
      %v338 = vsub.f32 1.5, %v337
      %v339 = vmul.f32 %v334, %v338
      %vm340 = vweird.f32 %v333
      %vm341 = vweird.f32 %v334
      %vm342 = vmor %vm340, %vm341
      %v343 = vsel %vm342, %v334, %v339
      %v344 = vmul.f32 %v327, %v343
      %v345 = vperm.slane %v314, 0
      %v346 = vmul.f32 %v344, %v345
      %v347 = vperm.slane %v315, 0
      %v348 = vadd.f32 %v346, %v347
      %349 = vst.msk [vmem:[%s219] sm:$0xff] %vm243, %v348
      %p350 = scmp.lt.s32.totalorder %s16, 1
      %s351 = scalar_select %p350, %s16, 1
      %s352 = smul.addr %s351, 8
      %s353 = scalar_lea.vmem %s5, %s352
      // Predicated region
      $region41: #{_lambda_.23} parent=39 // pred_check
        %p354 = pneg %p144
      $region42: #{_lambda_.23} parent=39 // pred_check_branch
        %356 = sbr.rel (%p354) target = $region44
      $region43: #{_lambda_.23} parent=39 // pred_region
        _
      $region44: #{_lambda_.23} parent=39 // pred_fallthru
        _
    $region40: #{_lambda_.23} parent=5 // pred_fallthru
      _
    %p357 = scmp.le.s32.totalorder 2, %s11
    // Predicated region
    $region45: #{_lambda_.23} parent=5 // pred_check
      %p358 = pneg %p357
    $region46: #{_lambda_.23} parent=5 // pred_check_branch
      %360 = sbr.rel (%p358) target = $region48
    $region47: #{_lambda_.23} parent=5 // pred_region
      %s361 = ssub.s32 %s11, 2
      // Predicated region
      $region49: #{_lambda_.23} parent=47 // pred_check
        %p362 = pneg %p150
      $region50: #{_lambda_.23} parent=47 // pred_check_branch
        %364 = sbr.rel (%p362) target = $region52
      $region51: #{_lambda_.23} parent=47 // pred_region
        %p365 = scmp.lt.s32.totalorder %s17, 1
        %s366 = scalar_select %p365, %s17, 1
        %s367 = smul.addr %s366, 8
        %s368 = scalar_lea.vmem %s5, %s367
      $region52: #{_lambda_.23} parent=47 // pred_fallthru
        _
    $region48: #{_lambda_.23} parent=5 // pred_fallthru
      _
  $region6: #{_lambda_.23} parent=0 // loop_footer
    %s15 = sadd.s32 1, %s11
  $region7: #{_lambda_.23} parent=0 // loop_footer_branch
    %10 = sbr.rel target = $region3
  $region8: #{_lambda_.23} parent=0 // loop_exit
    _

// kernel: _lambda_.24
$region0: #{_lambda_.24}
  #allocation0 [shape = 'u32[]', space=smem, size = 0x4, offset = 0x4, fixed_abs, tag = 'smem constant byte address 0x4 - core index']
  #allocation1 [shape = 'u32[72,128]{1,0:T(1,128)}', space=vmem, size = 0x9000, scoped, tag = 'internal scratch']
  %s0 = inlined_call_operand.vmem [shape: f32[16,32], index: 0, kind: input, shape index: {}]
  %s1 = inlined_call_operand.vmem [shape: bf16[32,64], index: 1, kind: input, shape index: {}]
  %s2 = inlined_call_operand.vmem [shape: f32[4,32], index: 2, kind: input, shape index: {}]
  %s3 = inlined_call_operand.vmem [shape: bf16[64,128], index: 3, kind: input, shape index: {}]
  %s4 = inlined_call_operand.vmem [shape: f32[1,128], index: 4, kind: input, shape index: {}]
  %s5 = inlined_call_operand.vmem [shape: f32[16,128], index: 5, kind: output, shape index: {}]
  %s6 = sld [smem:[#allocation0]]
  $region53: #{_lambda_.24} parent=0
    _
  %s8 = ssub.s32 1, %s6
  %s9 = scalar_select 0, %s8, %s6
  loop: start=0, step=1, limit=4
  $region2: #{_lambda_.24} parent=0 // loop_pre_header
    _
  $region3: #{_lambda_.24} parent=0 // loop_header
    %s11 = sphi 0, %s15
    %p12 = scmp.ge.s32.totalorder %s11, 4
    %s21 = sphi 0, %s23
    %s24 = sphi 0, %s21
    %s25 = sphi 0, %s24
    %s41 = sphi 0, %s25
    %s45 = sphi 0, %s45
    %s47 = sphi 0, %s45
    %s48 = sphi 0, %s47
    %s62 = sphi 0, %s48
    %s66 = sphi 0, %s66
    %s68 = sphi 0, %s66
    %s69 = sphi 0, %s68
    %s83 = sphi 0, %s69
    %s87 = sphi 0, %s87
    %s89 = sphi 0, %s87
    %s90 = sphi 0, %s89
    %s104 = sphi 0, %s90
    %s108 = sphi 0, %s108
    %s110 = sphi 0, %s108
    %s111 = sphi 0, %s110
    %s125 = sphi 0, %s111
    %s131 = sphi 0, %s133
    %s134 = sphi 0, %s131
    %s135 = sphi 0, %s134
    %s151 = sphi 0, %s135
  $region4: #{_lambda_.24} parent=0 // loop_header_branch
    %14 = sbr.rel (%p12) target = $region8
  $region5: #{_lambda_.24} parent=0 // loop_body
    %s16 = ssub.s32 %s11, 1
    %s17 = ssub.s32 %s11, 2
    %s18 = sadd.s32 %s11, 1
    %s19 = ssub.s32 %s11, %s18
    %p20 = scmp.eq.s32.totalorder %s19, 0
    %s22 = sadd.s32 %s21, 1
    %s23 = scalar_select %p20, %s21, %s22
    %p26 = pneg %p20
    %p27 = scmp.eq.s32.totalorder %s11, 1
    %p28 = por %p26, %p27
    %p29 = scmp.ne.s32.totalorder %s21, %s24
    %p30 = scmp.eq.s32.totalorder %s11, 0
    %p31 = por %p29, %p30
    %p32 = scmp.ne.s32.totalorder %s21, %s24
    %p33 = scmp.eq.s32.totalorder %s16, 1
    %p34 = por %p32, %p33
    %p35 = scmp.ne.s32.totalorder %s24, %s25
    %p36 = scmp.eq.s32.totalorder %s16, 0
    %p37 = por %p35, %p36
    %p38 = scmp.ne.s32.totalorder %s24, %s25
    %p39 = scmp.eq.s32.totalorder %s17, 1
    %p40 = por %p38, %p39
    %p42 = scmp.ne.s32.totalorder %s25, %s41
    %p43 = scmp.eq.s32.totalorder %s17, 0
    %p44 = por %p42, %p43
    %s46 = sadd.s32 %s45, 1
    %p49 = scmp.eq.s32.totalorder %s11, 1
    %p50 = scmp.ne.s32.totalorder %s45, %s47
    %p51 = scmp.eq.s32.totalorder %s11, 0
    %p52 = por %p50, %p51
    %p53 = scmp.ne.s32.totalorder %s45, %s47
    %p54 = scmp.eq.s32.totalorder %s16, 1
    %p55 = por %p53, %p54
    %p56 = scmp.ne.s32.totalorder %s47, %s48
    %p57 = scmp.eq.s32.totalorder %s16, 0
    %p58 = por %p56, %p57
    %p59 = scmp.ne.s32.totalorder %s47, %s48
    %p60 = scmp.eq.s32.totalorder %s17, 1
    %p61 = por %p59, %p60
    %p63 = scmp.ne.s32.totalorder %s48, %s62
    %p64 = scmp.eq.s32.totalorder %s17, 0
    %p65 = por %p63, %p64
    %s67 = sadd.s32 %s66, 1
    %p70 = scmp.eq.s32.totalorder %s11, 1
    %p71 = scmp.ne.s32.totalorder %s66, %s68
    %p72 = scmp.eq.s32.totalorder %s11, 0
    %p73 = por %p71, %p72
    %p74 = scmp.ne.s32.totalorder %s66, %s68
    %p75 = scmp.eq.s32.totalorder %s16, 1
    %p76 = por %p74, %p75
    %p77 = scmp.ne.s32.totalorder %s68, %s69
    %p78 = scmp.eq.s32.totalorder %s16, 0
    %p79 = por %p77, %p78
    %p80 = scmp.ne.s32.totalorder %s68, %s69
    %p81 = scmp.eq.s32.totalorder %s17, 1
    %p82 = por %p80, %p81
    %p84 = scmp.ne.s32.totalorder %s69, %s83
    %p85 = scmp.eq.s32.totalorder %s17, 0
    %p86 = por %p84, %p85
    %s88 = sadd.s32 %s87, 1
    %p91 = scmp.eq.s32.totalorder %s11, 1
    %p92 = scmp.ne.s32.totalorder %s87, %s89
    %p93 = scmp.eq.s32.totalorder %s11, 0
    %p94 = por %p92, %p93
    %p95 = scmp.ne.s32.totalorder %s87, %s89
    %p96 = scmp.eq.s32.totalorder %s16, 1
    %p97 = por %p95, %p96
    %p98 = scmp.ne.s32.totalorder %s89, %s90
    %p99 = scmp.eq.s32.totalorder %s16, 0
    %p100 = por %p98, %p99
    %p101 = scmp.ne.s32.totalorder %s89, %s90
    %p102 = scmp.eq.s32.totalorder %s17, 1
    %p103 = por %p101, %p102
    %p105 = scmp.ne.s32.totalorder %s90, %s104
    %p106 = scmp.eq.s32.totalorder %s17, 0
    %p107 = por %p105, %p106
    %s109 = sadd.s32 %s108, 1
    %p112 = scmp.eq.s32.totalorder %s11, 1
    %p113 = scmp.ne.s32.totalorder %s108, %s110
    %p114 = scmp.eq.s32.totalorder %s11, 0
    %p115 = por %p113, %p114
    %p116 = scmp.ne.s32.totalorder %s108, %s110
    %p117 = scmp.eq.s32.totalorder %s16, 1
    %p118 = por %p116, %p117
    %p119 = scmp.ne.s32.totalorder %s110, %s111
    %p120 = scmp.eq.s32.totalorder %s16, 0
    %p121 = por %p119, %p120
    %p122 = scmp.ne.s32.totalorder %s110, %s111
    %p123 = scmp.eq.s32.totalorder %s17, 1
    %p124 = por %p122, %p123
    %p126 = scmp.ne.s32.totalorder %s111, %s125
    %p127 = scmp.eq.s32.totalorder %s17, 0
    %p128 = por %p126, %p127
    %s129 = ssub.s32 %s11, %s18
    %p130 = scmp.eq.s32.totalorder %s129, 0
    %s132 = sadd.s32 %s131, 1
    %s133 = scalar_select %p130, %s131, %s132
    %p136 = pneg %p130
    %p137 = scmp.eq.s32.totalorder %s11, 1
    %p138 = por %p136, %p137
    %p139 = scmp.ne.s32.totalorder %s131, %s134
    %p140 = scmp.eq.s32.totalorder %s11, 0
    %p141 = por %p139, %p140
    %p142 = scmp.ne.s32.totalorder %s131, %s134
    %p143 = scmp.eq.s32.totalorder %s16, 1
    %p144 = por %p142, %p143
    %p145 = scmp.ne.s32.totalorder %s134, %s135
    %p146 = scmp.eq.s32.totalorder %s16, 0
    %p147 = por %p145, %p146
    %p148 = scmp.ne.s32.totalorder %s134, %s135
    %p149 = scmp.eq.s32.totalorder %s17, 1
    %p150 = por %p148, %p149
    %p152 = scmp.ne.s32.totalorder %s135, %s151
    %p153 = scmp.eq.s32.totalorder %s17, 0
    %p154 = por %p152, %p153
    %p155 = scmp.le.s32.totalorder 1, %s11
    %p156 = scmp.lt.s32.totalorder %s11, 3
    %p157 = pnand %p155, %p156
    %p158 = pneg %p157
    // Predicated region
    $region9: #{_lambda_.24} parent=5 // pred_check
      _
    $region10: #{_lambda_.24} parent=5 // pred_check_branch
      %160 = sbr.rel (%p157) target = $region12
    $region11: #{_lambda_.24} parent=5 // pred_region
      %s161 = ssub.s32 %s11, 1
      // Predicated region
      $region13: #{_lambda_.24} parent=11 // pred_check
        %p162 = pneg %p58
      $region14: #{_lambda_.24} parent=11 // pred_check_branch
        %164 = sbr.rel (%p162) target = $region16
      $region15: #{_lambda_.24} parent=11 // pred_region
        _
      $region16: #{_lambda_.24} parent=11 // pred_fallthru
        _
      // Predicated region
      $region17: #{_lambda_.24} parent=11 // pred_check
        %p165 = pneg %p79
      $region18: #{_lambda_.24} parent=11 // pred_check_branch
        %167 = sbr.rel (%p165) target = $region20
      $region19: #{_lambda_.24} parent=11 // pred_region
        _
      $region20: #{_lambda_.24} parent=11 // pred_fallthru
        _
      // Predicated region
      $region21: #{_lambda_.24} parent=11 // pred_check
        %p168 = pneg %p100
      $region22: #{_lambda_.24} parent=11 // pred_check_branch
        %170 = sbr.rel (%p168) target = $region24
      $region23: #{_lambda_.24} parent=11 // pred_region
        _
      $region24: #{_lambda_.24} parent=11 // pred_fallthru
        _
      // Predicated region
      $region25: #{_lambda_.24} parent=11 // pred_check
        %p171 = pneg %p121
      $region26: #{_lambda_.24} parent=11 // pred_check_branch
        %173 = sbr.rel (%p171) target = $region28
      $region27: #{_lambda_.24} parent=11 // pred_region
        _
      $region28: #{_lambda_.24} parent=11 // pred_fallthru
        _
    $region12: #{_lambda_.24} parent=5 // pred_fallthru
      _
    %p174 = scmp.lt.s32.totalorder %s11, 2
    // Predicated region
    $region29: #{_lambda_.24} parent=5 // pred_check
      %p175 = pneg %p174
    $region30: #{_lambda_.24} parent=5 // pred_check_branch
      %177 = sbr.rel (%p175) target = $region32
    $region31: #{_lambda_.24} parent=5 // pred_region
      // Predicated region
      $region33: #{_lambda_.24} parent=31 // pred_check
        %p178 = pneg %p31
      $region34: #{_lambda_.24} parent=31 // pred_check_branch
        %180 = sbr.rel (%p178) target = $region36
      $region35: #{_lambda_.24} parent=31 // pred_region
        %p181 = scmp.lt.s32.totalorder %s11, 1
        %s182 = scalar_select %p181, %s11, 1
        %s183 = smul.addr %s182, 8
        %s184 = scalar_lea.vmem %s0, %s183
      $region36: #{_lambda_.24} parent=31 // pred_fallthru
        _
    $region32: #{_lambda_.24} parent=5 // pred_fallthru
      _
    %p185 = scmp.le.s32.totalorder 1, %s11
    %p186 = scmp.lt.s32.totalorder %s11, 3
    %p187 = pnand %p185, %p186
    %p188 = pneg %p187
    // Predicated region
    $region37: #{_lambda_.24} parent=5 // pred_check
      _
    $region38: #{_lambda_.24} parent=5 // pred_check_branch
      %190 = sbr.rel (%p187) target = $region40
    $region39: #{_lambda_.24} parent=5 // pred_region
      %s191 = ssub.s32 %s11, 1
      %p192 = scmp.lt.s32.totalorder %s16, 1
      %s193 = scalar_select %p192, %s16, 1
      %s194 = smul.addr %s193, 8
      %s195 = scalar_lea.vmem %s0, %s194
      %p196 = pneg %p37
      %p197 = pneg %p34
      %p198 = pneg %p58
      %p199 = pneg %p55
      %p200 = pneg %p79
      %p201 = pneg %p76
      %p202 = pneg %p100
      %p203 = pneg %p97
      %p204 = pneg %p121
      %p205 = pneg %p118
      %p206 = pneg %p147
      %p207 = pneg %p144
      %p208 = scmp.lt.s32.totalorder %s16, 1
      %s209 = scalar_select %p208, %s16, 1
      %s210 = smul.addr %s209, 8
      %s211 = scalar_lea.vmem %s5, %s210
      %p212 = scmp.lt.s32.totalorder %s16, 1
      %s213 = scalar_select %p212, %s16, 1
      %s214 = smul.addr %s213, 8
      %s215 = scalar_lea.vmem %s0, %s214
      %p216 = scmp.lt.s32.totalorder %s16, 1
      %s217 = scalar_select %p216, %s16, 1
      %s218 = smul.addr %s217, 8
      %s219 = scalar_lea.vmem %s5, %s218
      %v221 = vld [vmem:[%s215] sm:$0xff]
      %v222 = vpack.c.bf16 %v221, %v221
      %v223 = vld [vmem:[%s1] sm:$0xf]
      %v224 = vld [vmem:[%s1 + $0x4] sm:$0xf]
      %v225 = vld [vmem:[%s1 + $0x8] sm:$0xf]
      %v226 = vld [vmem:[%s1 + $0xc] sm:$0xf]
      %v231 = vunpack.c.l.b16 %v223
      %v232 = vunpack.c.l.b16 %v224
      %v233 = vunpack.c.l.b16 %v225
      %v234 = vunpack.c.l.b16 %v226
      %v235 = vpack.c.b16 %v232, %v231
      %v236 = vpack.c.b16 %v234, %v233
      %vm239 = vcmask 261120
      %v241 = vsel %vm239, %v222, 0
      %243 = vmatpush.bf16.msra.mxu0 0
      %244 = vmatpush.bf16.msra.mxu0 0
      %245 = vmatpush.bf16.msra.mxu0 0
      %246 = vmatpush.bf16.msra.mxu0 0
      %247 = vmatpush.bf16.msra.mxu0 0
      %248 = vmatpush.bf16.msra.mxu0 0
      %249 = vmatpush.bf16.msra.mxu0 %v236
      %250 = vmatpush.bf16.msra.mxu0 %v235
      %251 = vmatmul.bf16.gmra.mxu0 %v241
      %v252 = vpop.f32.mrf.mxu0
      %v253 = vadd.f32 0.0, %v252
      %v254 = vpop.f32.mrf.mxu0
      %255 = vdwg.mxu0
      %v256 = vld [vmem:[%s2] sm:$0x1]
      %v257 = vld [vmem:[%s2 + $0x1] sm:$0x1]
      %v258 = vsel %vm239, %v253, 0.0
      %259 = vadd.xlane.f32.xlu0 %v258
      %v260 = vpop.xlane.xlu0 %259
      %v261 = vrcp.pop 32.0
      %v262 = vmul.f32 32.0, %v261
      %v263 = vsub.f32 1.0, %v262
      %v264 = vmul.f32 %v261, %v263
      %v265 = vadd.f32 %v261, %v264
      %vm266 = vweird.f32 %v261
      %v267 = vsel %vm266, %v261, %v265
      %v268 = vmul.f32 %v260, %v267
      %v269 = vsub.f32 %v253, %v268
      %v270 = vmul.f32 %v269, %v269
      %v271 = vsel %vm239, %v270, 0.0
      %272 = vadd.xlane.f32.xlu0 %v271
      %v273 = vpop.xlane.xlu0 %272
      %v274 = vmul.f32 %v273, %v267
      %v275 = vadd.f32 %v274, 1e-05
      %v276 = vrsqrt.pop %v275
      %v277 = vmul.f32 %v276, %v275
      %v278 = vmul.f32 %v277, %v276
      %v279 = vmul.f32 0.5, %v278
      %v280 = vsub.f32 1.5, %v279
      %v281 = vmul.f32 %v276, %v280
      %vm282 = vweird.f32 %v275
      %vm283 = vweird.f32 %v276
      %vm284 = vmor %vm282, %vm283
      %v285 = vsel %vm284, %v276, %v281
      %v286 = vmul.f32 %v269, %v285
      %v287 = vperm.slane %v256, 0
      %v288 = vmul.f32 %v286, %v287
      %v289 = vperm.slane %v257, 0
      %v290 = vadd.f32 %v288, %v289
      %v291 = vmax.f32 %v290, 0.0
      %v292 = vld [vmem:[%s2 + $0x2] sm:$0x1]
      %v293 = vld [vmem:[%s2 + $0x3] sm:$0x1]
      %295 = vrot.lane.b32.xlu0 %v253, 96
      %v296 = vpop.permute.xlu0 %295
      %v298 = vsel %vm239, %v296, 0.0
      %299 = vadd.xlane.f32.xlu0 %v298
      %v300 = vpop.xlane.xlu0 %299
      %v301 = vmul.f32 %v300, %v267
      %v302 = vsub.f32 %v253, %v301
      %v303 = vmul.f32 %v302, %v302
      %305 = vrot.lane.b32.xlu0 %v303, 96
      %v306 = vpop.permute.xlu0 %305
      %v308 = vsel %vm239, %v306, 0.0
      %309 = vadd.xlane.f32.xlu0 %v308
      %v310 = vpop.xlane.xlu0 %309
      %v311 = vmul.f32 %v310, %v267
      %v312 = vadd.f32 %v311, 1e-05
      %v313 = vrsqrt.pop %v312
      %v314 = vmul.f32 %v313, %v312
      %v315 = vmul.f32 %v314, %v313
      %v316 = vmul.f32 0.5, %v315
      %v317 = vsub.f32 1.5, %v316
      %v318 = vmul.f32 %v313, %v317
      %vm319 = vweird.f32 %v312
      %vm320 = vweird.f32 %v313
      %vm321 = vmor %vm319, %vm320
      %v322 = vsel %vm321, %v313, %v318
      %v323 = vmul.f32 %v302, %v322
      %v324 = vperm.slane %v292, 0
      %326 = vrot.lane.b32.xlu0 %v324, 32
      %v327 = vpop.permute.xlu0 %326
      %v329 = vmul.f32 %v323, %v327
      %v330 = vperm.slane %v293, 0
      %332 = vrot.lane.b32.xlu0 %v330, 32
      %v333 = vpop.permute.xlu0 %332
      %v335 = vadd.f32 %v329, %v333
      %v336 = vmax.f32 %v335, 0.0
      %v337 = vsel %vm239, %v291, %v336
      %v338 = vpack.c.bf16 %v337, %v337
      %v339 = vld [vmem:[%s3] sm:$0xf]
      %v340 = vld [vmem:[%s3 + $0x4] sm:$0xf]
      %v341 = vld [vmem:[%s3 + $0x8] sm:$0xf]
      %v342 = vld [vmem:[%s3 + $0xc] sm:$0xf]
      %v343 = vld [vmem:[%s3 + $0x10] sm:$0xf]
      %v344 = vld [vmem:[%s3 + $0x14] sm:$0xf]
      %v345 = vld [vmem:[%s3 + $0x18] sm:$0xf]
      %v346 = vld [vmem:[%s3 + $0x1c] sm:$0xf]
      %v347 = vld [vmem:[%s4] sm:$0x1]
      %v349 = vperm.slane %v347, 0
      %v359 = vunpack.c.l.b16 %v339
      %v360 = vunpack.c.l.b16 %v340
      %v361 = vunpack.c.l.b16 %v341
      %v362 = vunpack.c.l.b16 %v342
      %v363 = vunpack.c.l.b16 %v343
      %v364 = vunpack.c.l.b16 %v344
      %v365 = vunpack.c.l.b16 %v345
      %v366 = vunpack.c.l.b16 %v346
      %v367 = vpack.c.b16 %v360, %v359
      %v368 = vpack.c.b16 %v362, %v361
      %v369 = vpack.c.b16 %v364, %v363
      %v370 = vpack.c.b16 %v366, %v365
      %vm375 = vcmask 523264
      %v377 = vsel %vm375, %v338, 0
      %379 = vmatpush.bf16.msra.mxu0 0
      %380 = vmatpush.bf16.msra.mxu0 0
      %381 = vmatpush.bf16.msra.mxu0 0
      %382 = vmatpush.bf16.msra.mxu0 0
      %383 = vmatpush.bf16.msra.mxu0 %v370
      %384 = vmatpush.bf16.msra.mxu0 %v369
      %385 = vmatpush.bf16.msra.mxu0 %v368
      %386 = vmatpush.bf16.msra.mxu0 %v367
      %387 = vmatmul.bf16.gmra.mxu0 %v377
      %v388 = vpop.f32.mrf.mxu0
      %v389 = vadd.f32 %v349, %v388
      %v390 = vpop.f32.mrf.mxu0
      %391 = vdwg.mxu0
      %392 = vst [vmem:[%s219] sm:$0xff] %v389
      %p393 = scmp.lt.s32.totalorder %s16, 1
      %s394 = scalar_select %p393, %s16, 1
      %s395 = smul.addr %s394, 8
      %s396 = scalar_lea.vmem %s5, %s395
      // Predicated region
      $region41: #{_lambda_.24} parent=39 // pred_check
        %p397 = pneg %p144
      $region42: #{_lambda_.24} parent=39 // pred_check_branch
        %399 = sbr.rel (%p397) target = $region44
      $region43: #{_lambda_.24} parent=39 // pred_region
        _
      $region44: #{_lambda_.24} parent=39 // pred_fallthru
        _
    $region40: #{_lambda_.24} parent=5 // pred_fallthru
      _
    %p400 = scmp.le.s32.totalorder 2, %s11
    // Predicated region
    $region45: #{_lambda_.24} parent=5 // pred_check
      %p401 = pneg %p400
    $region46: #{_lambda_.24} parent=5 // pred_check_branch
      %403 = sbr.rel (%p401) target = $region48
    $region47: #{_lambda_.24} parent=5 // pred_region
      %s404 = ssub.s32 %s11, 2
      // Predicated region
      $region49: #{_lambda_.24} parent=47 // pred_check
        %p405 = pneg %p150
      $region50: #{_lambda_.24} parent=47 // pred_check_branch
        %407 = sbr.rel (%p405) target = $region52
      $region51: #{_lambda_.24} parent=47 // pred_region
        %p408 = scmp.lt.s32.totalorder %s17, 1
        %s409 = scalar_select %p408, %s17, 1
        %s410 = smul.addr %s409, 8
        %s411 = scalar_lea.vmem %s5, %s410
      $region52: #{_lambda_.24} parent=47 // pred_fallthru
        _
    $region48: #{_lambda_.24} parent=5 // pred_fallthru
      _
  $region6: #{_lambda_.24} parent=0 // loop_footer
    %s15 = sadd.s32 1, %s11
  $region7: #{_lambda_.24} parent=0 // loop_footer_branch
    %10 = sbr.rel target = $region3
  $region8: #{_lambda_.24} parent=0 // loop_exit
    _

</llo_original>
